<compile_context>
chip_gen: v6e
topology: v6e:2x2x1
jax: 0.10.0
libtpu: 0.0.40
codegen_flags: <defaults>
</compile_context>

<pallas_src>
import functools

import jax
import jax.numpy as jnp
from jax import lax
from jax.experimental import pallas as pl
from jax.experimental.pallas import tpu as pltpu

OPS_NAMES = [
    "ShearX", "ShearY", "TranslateX", "TranslateY", "Rotate", "AutoContrast",
    "Invert", "Equalize", "Solarize", "Posterize", "Contrast", "Color",
    "Brightness", "Sharpness", "Cutout", "Identity",
]
N_OPS = len(OPS_NAMES)
HEAD_PAD = 128  # lane-dense padded head output width (>= 2 * N_OPS)

default_config = {
    "sampling": "prob", "k_ops": 1, "delta": 0, "temp": 1.0,
    "search_d": 32, "target_d": 32,
}


# --------------------------------------------------------------------------
# In-kernel building blocks
# --------------------------------------------------------------------------
def _features_block(x_ref, wbd_ref, bbd_ref, *, imgs, p, g, f_dim):
    """gf_model.f for a block of images: pointwise conv + ReLU + mean pool.

    x_ref:   (imgs*p/g, g*C) f32  -- g pixels packed along lanes (lane-dense)
    wbd_ref: (g*C, g*F)      bf16 -- block-diagonal pointwise-conv weight
    bbd_ref: (1, g*F)        f32  -- bias tiled across the g pixel groups
    returns: (imgs, F)       f32
    """
    xb = x_ref[...].astype(jnp.bfloat16)          # cast in-VMEM (no extra HBM pass)
    y = jnp.dot(xb, wbd_ref[...], preferred_element_type=jnp.float32)
    y = jnp.maximum(y + bbd_ref[...], 0.0)        # (imgs*p/g, g*F)
    rows_per_img = p // g
    pooled = jnp.mean(y.reshape(imgs, rows_per_img, g * f_dim), axis=1)  # (imgs, g*F)
    # reduce the g packed pixel groups with lane-aligned static slices
    acc = pooled[:, :f_dim]
    for h in range(1, g):
        acc = acc + pooled[:, h * f_dim:(h + 1) * f_dim]
    return acc * (1.0 / g)                        # (imgs, F)


def _head_block(feats, wh_ref, bh_ref, *, n_ops):
    """h_model head: fused (F, HEAD_PAD) matmul, stable sigmoid, exact softmax.

    Temperature is already folded into wh/bh (host side).
    """
    logits = jnp.dot(feats, wh_ref[...], preferred_element_type=jnp.float32) + bh_ref[...]
    m_logits = logits[:, :n_ops]
    w_logits = logits[:, n_ops:2 * n_ops]
    # sign-stable sigmoid (no exp overflow for large-magnitude logits)
    z = jnp.exp(-jnp.abs(m_logits))
    mag = jnp.where(m_logits >= 0.0, 1.0 / (1.0 + z), z / (1.0 + z))
    # softmax with exact normalizer (approx reciprocal broke sum-to-1)
    e = jnp.exp(w_logits - jnp.max(w_logits, axis=-1, keepdims=True))
    wts = e / jnp.sum(e, axis=-1, keepdims=True)
    return mag, wts


def _feat_head_kernel(x_ref, wbd_ref, bbd_ref, wh_ref, bh_ref, head_ref,
                      *, imgs, p, g, f_dim, n_ops):
    """Features + head fused; writes a lane-dense (imgs, HEAD_PAD) slab."""
    feats = _features_block(x_ref, wbd_ref, bbd_ref, imgs=imgs, p=p, g=g, f_dim=f_dim)
    mag, wts = _head_block(feats, wh_ref, bh_ref, n_ops=n_ops)
    pad = head_ref.shape[-1] - 2 * n_ops
    pieces = [mag, wts]
    if pad:
        pieces.append(jnp.zeros((imgs, pad), jnp.float32))
    head_ref[...] = jnp.concatenate(pieces, axis=-1)


def _feat_head_mix_kernel(x_ref, wbd_ref, bbd_ref, wh_ref, bh_ref, mixed_ref,
                          *, imgs, p, g, f_dim, n_ops):
    """Features + head + weighted feature mixing fused (explore path)."""
    feats = _features_block(x_ref, wbd_ref, bbd_ref, imgs=imgs, p=p, g=g, f_dim=f_dim)
    _mag, wts = _head_block(feats, wh_ref, bh_ref, n_ops=n_ops)
    # TODO(synk): PIL operation.apply_augment / after_transforms have no Pallas
    # equivalent; under the identity augmentation the augmented features equal
    # `feats`, so mixed[b] = sum_k wts[b,k] * feats[b] collapses in-vreg and the
    # (B, n_ops, F) ba_features broadcast is never materialized.
    mixed_ref[...] = jnp.sum(wts, axis=-1, keepdims=True) * feats


# --------------------------------------------------------------------------
# Host-side helpers
# --------------------------------------------------------------------------
def _block_diag_weight(wc, g):
    """wbd[h*C+c, h*F+f] = wc[c, f]; dense elsewhere zero.  g==1 -> wc."""
    if g == 1:
        return wc
    c, f = wc.shape
    eye = jnp.eye(g, dtype=wc.dtype)
    return jnp.einsum("gh,cf->gchf", eye, wc).reshape(g * c, g * f)


def _make_head_params(params, temp, n_ops):
    """Fold softmax temperature into the fused head weights; pad to 128 lanes."""
    inv_t = jnp.float32(1.0 / float(temp))
    w_cat = jnp.concatenate([params["wm"], params["ww"] * inv_t], axis=1).astype(jnp.float32)
    b_cat = jnp.concatenate([params["bm"], params["bw"] * inv_t], axis=1).astype(jnp.float32)
    f_dim = w_cat.shape[0]
    pad = HEAD_PAD - 2 * n_ops
    wh = jnp.concatenate([w_cat, jnp.zeros((f_dim, pad), jnp.float32)], axis=1)
    bh = jnp.concatenate([b_cat, jnp.zeros((1, pad), jnp.float32)], axis=1)
    return wh, bh


def _choose_imgs_per_block(n, p, c, f_dim, g, vmem_budget=8 * 1024 * 1024):
    """Budget-driven block sizing; prefer >=2 balanced 'parallel' grid steps."""
    # per-image VMEM bytes: double-buffered f32 x block + f32 post-matmul intermediate
    per_img = p * c * 4 * 2 + p * f_dim * 4
    cap = max(1, vmem_budget // per_img)
    cands = [d for d in range(1, n + 1)
             if n % d == 0 and (d % 8 == 0 or d == n)]   # (8,128) block alignment
    feas = [d for d in cands if d <= cap] or [min(cands)]
    multi = [d for d in feas if n // d >= 2]
    return max(multi) if multi else max(feas)


def _vmem_limit_bytes(imgs, p, c, f_dim, g, out_cols):
    rows_g = imgs * p // g
    x_b = rows_g * g * c * 4 * 2                # double-buffered input block
    wbd_b = (g * c) * (g * f_dim) * 2 * 2
    bbd_b = g * f_dim * 4 * 2
    head_b = (f_dim * HEAD_PAD + HEAD_PAD) * 4 * 2
    inter_b = imgs * p * f_dim * 4 * 2          # f32 matmul result + pool temporaries
    out_b = imgs * out_cols * 4 * 2
    total = x_b + wbd_b + bbd_b + head_b + inter_b + out_b
    return int(min(64 * 1024 * 1024, max(16 * 1024 * 1024, 2 * total)))


def _run_fused(kernel_fn, out_cols, images, params, temp, n_ops):
    B, H, W, C = images.shape
    P = H * W
    F_DIM = params["wc"].shape[1]
    G = 128 // C if (128 % C == 0 and P % (128 // C) == 0) else 1

    # Contiguous NHWC -> (B*P/G, G*C): both reshapes are free in HBM; x stays f32.
    x_packed = images.reshape(B * P // G, G * C)
    wbd = _block_diag_weight(params["wc"], G).astype(jnp.bfloat16)
    bbd = jnp.tile(params["bc"].astype(jnp.float32), (1, G))
    wh, bh = _make_head_params(params, temp, n_ops)

    imgs = _choose_imgs_per_block(B, P, C, F_DIM, G)
    grid = (B // imgs,)
    rows_g = imgs * P // G
    gc, gf = G * C, G * F_DIM

    kern = functools.partial(kernel_fn, imgs=imgs, p=P, g=G, f_dim=F_DIM, n_ops=n_ops)
    return pl.pallas_call(
        kern,
        out_shape=jax.ShapeDtypeStruct((B, out_cols), jnp.float32),
        grid=grid,
        in_specs=[
            pl.BlockSpec((rows_g, gc), lambda n: (n, 0)),        # images (f32)
            pl.BlockSpec((gc, gf), lambda n: (0, 0)),            # conv weight, resident
            pl.BlockSpec((1, gf), lambda n: (0, 0)),             # conv bias, resident
            pl.BlockSpec((F_DIM, HEAD_PAD), lambda n: (0, 0)),   # head weight, resident
            pl.BlockSpec((1, HEAD_PAD), lambda n: (0, 0)),       # head bias, resident
        ],
        out_specs=pl.BlockSpec((imgs, out_cols), lambda n: (n, 0)),
        compiler_params=pltpu.CompilerParams(
            dimension_semantics=("parallel",),
            vmem_limit_bytes=_vmem_limit_bytes(imgs, P, C, F_DIM, G, out_cols),
        ),
        cost_estimate=pl.CostEstimate(
            flops=2 * B * (P // G) * gc * gf + 2 * B * F_DIM * HEAD_PAD,
            transcendentals=2 * B * n_ops,
            bytes_accessed=(B * P * C * 4 + gc * gf * 2 + gf * 4
                            + F_DIM * HEAD_PAD * 4 + HEAD_PAD * 4
                            + B * out_cols * 4),
        ),
    )(x_packed, wbd, bbd, wh, bh)


# --------------------------------------------------------------------------
# AdaAug (JAX / Pallas)
# --------------------------------------------------------------------------
class AdaAugPallas:
    def __init__(self, n_class, params, config=default_config):
        self.ops_names = OPS_NAMES
        self.n_ops = len(OPS_NAMES)
        self.n_class = n_class
        self.params = params  # dict: wc, bc (gf_model.f), wm, bm, ww, bw (h_model)
        self.resize = config["search_d"] != config["target_d"]
        self.search_d = config["search_d"]
        self.k_ops = config["k_ops"]
        self.sampling = config["sampling"]
        self.temp = config["temp"]
        self.delta = config["delta"]

    def predict_aug_params(self, images, mode):
        T = self.temp if mode == "exploit" else 1.0
        head = _run_fused(_feat_head_kernel, HEAD_PAD, images, self.params, T, self.n_ops)
        return head[:, :self.n_ops], head[:, self.n_ops:2 * self.n_ops]

    def explore(self, images):
        f_dim = self.params["wc"].shape[1]
        # explore: T = 1.0; features + head + mix fused into a single launch.
        return _run_fused(_feat_head_mix_kernel, f_dim, images, self.params, 1.0, self.n_ops)

    def get_training_aug_images(self, images, magnitudes, weights, key):
        if self.k_ops > 0:
            if self.sampling == "prob":
                # mirrors torch.multinomial(weights, k_ops); clamp to avoid log(0)
                logits = jnp.log(jnp.maximum(weights, 1e-12))
                keys = jax.random.split(key, self.k_ops)
                idx_matrix = jnp.stack(
                    [jax.random.categorical(kk, logits, axis=-1) for kk in keys],
                    axis=1)
            elif self.sampling == "max":
                idx_matrix = lax.top_k(weights, self.k_ops)[1]
            # delta == 0  =>  perturb_param is identity
            # TODO(synk): per-image PIL operation.apply_augment / after_transforms
            # have no Pallas equivalent; returning un-augmented images.
            del idx_matrix
        return images

    def exploit(self, images, key):
        # TODO(synk): F.interpolate resize path not implemented (search_d == target_d).
        resize_imgs = images
        magnitudes, weights = self.predict_aug_params(resize_imgs, "exploit")
        return self.get_training_aug_images(images, magnitudes, weights, key)

    def __call__(self, images, mode, key=None):
        if mode == "explore":
            return self.explore(images)
        elif mode == "exploit":
            if key is None:
                key = jax.random.PRNGKey(0)
            return self.exploit(images, key)
        elif mode == "inference":
            return images


# --------------------------------------------------------------------------
# Pure-JAX f32 references (correctness checks)
# --------------------------------------------------------------------------
def feats_ref(x_flat, wc, bc):
    return jnp.maximum(jnp.einsum("bpc,cf->bpf", x_flat, wc) + bc, 0.0).mean(1)


def head_ref(feats, params, temp):
    mags = jax.nn.sigmoid(feats @ params["wm"] + params["bm"])
    wts = jax.nn.softmax((feats @ params["ww"] + params["bw"]) / temp, axis=-1)
    return mags, wts


def explore_ref(images, params, n_ops):
    """Faithful f32 reference of the explore forward (identity augmentation)."""
    B, H, W, C = images.shape
    x = images.reshape(B, H * W, C)
    feats = feats_ref(x, params["wc"], params["bc"])
    mags, wts = head_ref(feats, params, 1.0)                    # explore: T = 1.0
    mag5 = mags[:, :, None, None, None]
    a_imgs = (images[:, None] - mag5) + mag5                    # stop_gradient trick
    xa = a_imgs.reshape(B * n_ops, H * W, C)
    a_feats = feats_ref(xa, params["wc"], params["bc"])
    ba = a_feats.reshape(B, n_ops, -1)
    return jnp.einsum("bk,bkf->bf", wts, ba)


# --------------------------------------------------------------------------
if __name__ == "__main__":
    B, H, W, C = 4, 16, 16, 8
    F_DIM = 128

    key = jax.random.PRNGKey(0)
    kc, kb, km, kbm, kw, kbw, kimg, ksample, kbig = jax.random.split(key, 9)

    params = {
        "wc": jax.random.normal(kc, (C, F_DIM), jnp.float32) * 0.1,
        "bc": jax.random.normal(kb, (1, F_DIM), jnp.float32) * 0.1,
        "wm": jax.random.normal(km, (F_DIM, N_OPS), jnp.float32) * 0.1,
        "bm": jax.random.normal(kbm, (1, N_OPS), jnp.float32) * 0.1,
        "ww": jax.random.normal(kw, (F_DIM, N_OPS), jnp.float32) * 0.1,
        "bw": jax.random.normal(kbw, (1, N_OPS), jnp.float32) * 0.1,
    }
    images = jax.random.normal(kimg, (B, H, W, C), jnp.float32)

    model = AdaAugPallas(n_class=10, params=params)

    # Tolerances account for intentional bf16 matmul inputs (f32 accumulation)
    # vs. the pure-f32 references.

    # 1) multi-step grid path: 32 images -> 16 images/block, grid=(2,)
    big = jax.random.normal(kbig, (32, H, W, C), jnp.float32)
    mags32, wts32 = model.predict_aug_params(big, "explore")
    jax.block_until_ready(wts32)
    fr = feats_ref(big.reshape(32, H * W, C), params["wc"], params["bc"])
    mr, wr = head_ref(fr, params, 1.0)
    assert mags32.shape == (32, N_OPS) and wts32.shape == (32, N_OPS)
    assert jnp.allclose(mags32, mr, atol=1e-2, rtol=1e-2), "magnitudes mismatch (grid>1)"
    assert jnp.allclose(wts32, wr, atol=1e-2, rtol=1e-2), "weights mismatch (grid>1)"
    assert jnp.allclose(wts32.sum(-1), 1.0, atol=1e-4), "softmax not normalized (grid>1)"

    # 2) head: magnitudes / weights on the small batch
    mags, wts = model.predict_aug_params(images, "explore")
    jax.block_until_ready(wts)
    m_ref, w_ref = head_ref(feats_ref(images.reshape(B, H * W, C),
                                      params["wc"], params["bc"]), params, 1.0)
    assert mags.shape == (B, N_OPS) and wts.shape == (B, N_OPS)
    assert jnp.allclose(mags, m_ref, atol=1e-2, rtol=1e-2), "magnitudes mismatch"
    assert jnp.allclose(wts, w_ref, atol=1e-2, rtol=1e-2), "weights mismatch"
    assert jnp.allclose(wts.sum(-1), 1.0, atol=1e-4), "softmax not normalized"

    # 3) explore: mixed latent features (B, F_DIM)
    mixed = model(images, "explore")
    jax.block_until_ready(mixed)
    assert mixed.shape == (B, F_DIM)
    ref = explore_ref(images, params, N_OPS)
    assert jnp.allclose(mixed, ref, atol=1e-2, rtol=1e-2), "explore mismatch vs reference"

    # 4) exploit: param prediction + sampling (augment itself is a TODO no-op)
    aug = model(images, "exploit", key=ksample)
    jax.block_until_ready(aug)
    assert aug.shape == images.shape

    # 5) inference: identity
    inf = model(images, "inference")
    assert inf.shape == images.shape

    print("KERNEL_OK")
</pallas_src>

<mosaic_0001>
module attributes {stable_mosaic.version = 11 : i64} {
  func.func @_feat_head_kernel(%arg0: i32, %arg1: memref<256x128xf32, #tpu.memory_space<vmem>>, %arg2: memref<128x2048xbf16, #tpu.memory_space<vmem>>, %arg3: memref<1x2048xf32, #tpu.memory_space<vmem>>, %arg4: memref<128x128xf32, #tpu.memory_space<vmem>>, %arg5: memref<1x128xf32, #tpu.memory_space<vmem>>, %arg6: memref<16x128xf32, #tpu.memory_space<vmem>>) attributes {dimension_semantics = [#tpu.dimension_semantics<parallel>], iteration_bounds = array<i64: 2>, scalar_prefetch = 0 : i64, scratch_operands = 0 : i64, tpu.core_type = #tpu.core_type<tc>, window_params = [{transform_indices = @transform_0, window_bounds = array<i64: 256, 128>}, {pipeline_mode = #tpu.pipeline_mode<synchronous>, transform_indices = @transform_1, window_bounds = array<i64: 128, 2048>}, {pipeline_mode = #tpu.pipeline_mode<synchronous>, transform_indices = @transform_2, window_bounds = array<i64: 1, 2048>}, {pipeline_mode = #tpu.pipeline_mode<synchronous>, transform_indices = @transform_3, window_bounds = array<i64: 128, 128>}, {pipeline_mode = #tpu.pipeline_mode<synchronous>, transform_indices = @transform_4, window_bounds = array<i64: 1, 128>}, {transform_indices = @transform_5, window_bounds = array<i64: 16, 128>}]} {
    %c0 = arith.constant 0 : index
    %c0_0 = arith.constant 0 : index
    %0 = vector.load %arg1[%c0, %c0_0] : memref<256x128xf32, #tpu.memory_space<vmem>>, vector<256x128xf32>
    %1 = arith.truncf %0 : vector<256x128xf32> to vector<256x128xbf16>
    %c0_1 = arith.constant 0 : index
    %c0_2 = arith.constant 0 : index
    %2 = vector.load %arg2[%c0_1, %c0_2] : memref<128x2048xbf16, #tpu.memory_space<vmem>>, vector<128x2048xbf16>
    %cst = arith.constant dense<0.000000e+00> : vector<256x2048xf32>
    %3 = tpu.matmul %1, %2, %cst {dimension_numbers = #tpu.dot_dimension_numbers<[1], [0], [0], [1], [0, 0, 1, 1], [], []>} : vector<256x128xbf16>, vector<128x2048xbf16>, vector<256x2048xf32> -> vector<256x2048xf32>
    %c0_3 = arith.constant 0 : index
    %c0_4 = arith.constant 0 : index
    %4 = vector.load %arg3[%c0_3, %c0_4] : memref<1x2048xf32, #tpu.memory_space<vmem>>, vector<1x2048xf32>
    %5 = vector.broadcast %4 : vector<1x2048xf32> to vector<256x2048xf32>
    %6 = arith.addf %3, %5 : vector<256x2048xf32>
    %cst_5 = arith.constant 0.000000e+00 : f32
    %7 = vector.broadcast %cst_5 : f32 to vector<256x2048xf32>
    %8 = arith.maximumf %6, %7 : vector<256x2048xf32>
    %9 = vector.shape_cast %8 : vector<256x2048xf32> to vector<16x16x2048xf32>
    %cst_6 = arith.constant dense<0.000000e+00> : vector<16x2048xf32>
    %10 = vector.multi_reduction <add>, %9, %cst_6 [1] : vector<16x16x2048xf32> to vector<16x2048xf32>
    %cst_7 = arith.constant 1.600000e+01 : f32
    %11 = vector.broadcast %cst_7 : f32 to vector<16x2048xf32>
    %12 = arith.divf %10, %11 : vector<16x2048xf32>
    %13 = vector.extract_strided_slice %12 {offsets = [0, 0], sizes = [16, 128], strides = [1, 1]} : vector<16x2048xf32> to vector<16x128xf32>
    %14 = vector.extract_strided_slice %12 {offsets = [0, 128], sizes = [16, 128], strides = [1, 1]} : vector<16x2048xf32> to vector<16x128xf32>
    %15 = arith.addf %13, %14 : vector<16x128xf32>
    %16 = vector.extract_strided_slice %12 {offsets = [0, 256], sizes = [16, 128], strides = [1, 1]} : vector<16x2048xf32> to vector<16x128xf32>
    %17 = arith.addf %15, %16 : vector<16x128xf32>
    %18 = vector.extract_strided_slice %12 {offsets = [0, 384], sizes = [16, 128], strides = [1, 1]} : vector<16x2048xf32> to vector<16x128xf32>
    %19 = arith.addf %17, %18 : vector<16x128xf32>
    %20 = vector.extract_strided_slice %12 {offsets = [0, 512], sizes = [16, 128], strides = [1, 1]} : vector<16x2048xf32> to vector<16x128xf32>
    %21 = arith.addf %19, %20 : vector<16x128xf32>
    %22 = vector.extract_strided_slice %12 {offsets = [0, 640], sizes = [16, 128], strides = [1, 1]} : vector<16x2048xf32> to vector<16x128xf32>
    %23 = arith.addf %21, %22 : vector<16x128xf32>
    %24 = vector.extract_strided_slice %12 {offsets = [0, 768], sizes = [16, 128], strides = [1, 1]} : vector<16x2048xf32> to vector<16x128xf32>
    %25 = arith.addf %23, %24 : vector<16x128xf32>
    %26 = vector.extract_strided_slice %12 {offsets = [0, 896], sizes = [16, 128], strides = [1, 1]} : vector<16x2048xf32> to vector<16x128xf32>
    %27 = arith.addf %25, %26 : vector<16x128xf32>
    %28 = vector.extract_strided_slice %12 {offsets = [0, 1024], sizes = [16, 128], strides = [1, 1]} : vector<16x2048xf32> to vector<16x128xf32>
    %29 = arith.addf %27, %28 : vector<16x128xf32>
    %30 = vector.extract_strided_slice %12 {offsets = [0, 1152], sizes = [16, 128], strides = [1, 1]} : vector<16x2048xf32> to vector<16x128xf32>
    %31 = arith.addf %29, %30 : vector<16x128xf32>
    %32 = vector.extract_strided_slice %12 {offsets = [0, 1280], sizes = [16, 128], strides = [1, 1]} : vector<16x2048xf32> to vector<16x128xf32>
    %33 = arith.addf %31, %32 : vector<16x128xf32>
    %34 = vector.extract_strided_slice %12 {offsets = [0, 1408], sizes = [16, 128], strides = [1, 1]} : vector<16x2048xf32> to vector<16x128xf32>
    %35 = arith.addf %33, %34 : vector<16x128xf32>
    %36 = vector.extract_strided_slice %12 {offsets = [0, 1536], sizes = [16, 128], strides = [1, 1]} : vector<16x2048xf32> to vector<16x128xf32>
    %37 = arith.addf %35, %36 : vector<16x128xf32>
    %38 = vector.extract_strided_slice %12 {offsets = [0, 1664], sizes = [16, 128], strides = [1, 1]} : vector<16x2048xf32> to vector<16x128xf32>
    %39 = arith.addf %37, %38 : vector<16x128xf32>
    %40 = vector.extract_strided_slice %12 {offsets = [0, 1792], sizes = [16, 128], strides = [1, 1]} : vector<16x2048xf32> to vector<16x128xf32>
    %41 = arith.addf %39, %40 : vector<16x128xf32>
    %42 = vector.extract_strided_slice %12 {offsets = [0, 1920], sizes = [16, 128], strides = [1, 1]} : vector<16x2048xf32> to vector<16x128xf32>
    %43 = arith.addf %41, %42 : vector<16x128xf32>
    %cst_8 = arith.constant 6.250000e-02 : f32
    %44 = vector.broadcast %cst_8 : f32 to vector<16x128xf32>
    %45 = arith.mulf %43, %44 : vector<16x128xf32>
    %c0_9 = arith.constant 0 : index
    %c0_10 = arith.constant 0 : index
    %46 = vector.load %arg4[%c0_9, %c0_10] : memref<128x128xf32, #tpu.memory_space<vmem>>, vector<128x128xf32>
    %cst_11 = arith.constant dense<0.000000e+00> : vector<16x128xf32>
    %47 = tpu.matmul %45, %46, %cst_11 {dimension_numbers = #tpu.dot_dimension_numbers<[1], [0], [0], [1], [0, 0, 1, 1], [], []>} : vector<16x128xf32>, vector<128x128xf32>, vector<16x128xf32> -> vector<16x128xf32>
    %c0_12 = arith.constant 0 : index
    %c0_13 = arith.constant 0 : index
    %48 = vector.load %arg5[%c0_12, %c0_13] : memref<1x128xf32, #tpu.memory_space<vmem>>, vector<1x128xf32>
    %49 = vector.broadcast %48 : vector<1x128xf32> to vector<16x128xf32>
    %50 = arith.addf %47, %49 : vector<16x128xf32>
    %51 = vector.extract_strided_slice %50 {offsets = [0, 0], sizes = [16, 16], strides = [1, 1]} : vector<16x128xf32> to vector<16x16xf32>
    %52 = vector.extract_strided_slice %50 {offsets = [0, 16], sizes = [16, 16], strides = [1, 1]} : vector<16x128xf32> to vector<16x16xf32>
    %53 = math.absf %51 : vector<16x16xf32>
    %cst_14 = arith.constant 0.000000e+00 : f32
    %54 = vector.broadcast %cst_14 : f32 to vector<16x16xf32>
    %55 = arith.subf %54, %53 : vector<16x16xf32>
    %56 = math.exp %55 : vector<16x16xf32>
    %cst_15 = arith.constant 0.000000e+00 : f32
    %57 = vector.broadcast %cst_15 : f32 to vector<16x16xf32>
    %58 = arith.cmpf oge, %51, %57 : vector<16x16xf32>
    %cst_16 = arith.constant 1.000000e+00 : f32
    %59 = vector.broadcast %cst_16 : f32 to vector<16x16xf32>
    %60 = arith.addf %59, %56 : vector<16x16xf32>
    %cst_17 = arith.constant 1.000000e+00 : f32
    %61 = vector.broadcast %cst_17 : f32 to vector<16x16xf32>
    %62 = arith.divf %61, %60 : vector<16x16xf32>
    %cst_18 = arith.constant 1.000000e+00 : f32
    %63 = vector.broadcast %cst_18 : f32 to vector<16x16xf32>
    %64 = arith.addf %63, %56 : vector<16x16xf32>
    %65 = arith.divf %56, %64 : vector<16x16xf32>
    %66 = arith.select %58, %62, %65 : vector<16x16xi1>, vector<16x16xf32>
    %cst_19 = arith.constant dense<0xFF800000> : vector<16xf32>
    %67 = vector.multi_reduction <maximumf>, %52, %cst_19 [1] : vector<16x16xf32> to vector<16xf32>
    %68 = vector.shape_cast %67 : vector<16xf32> to vector<16x1xf32>
    %69 = vector.broadcast %68 : vector<16x1xf32> to vector<16x16xf32>
    %70 = arith.subf %52, %69 : vector<16x16xf32>
    %71 = math.exp %70 : vector<16x16xf32>
    %cst_20 = arith.constant dense<0.000000e+00> : vector<16xf32>
    %72 = vector.multi_reduction <add>, %71, %cst_20 [1] : vector<16x16xf32> to vector<16xf32>
    %73 = vector.shape_cast %72 : vector<16xf32> to vector<16x1xf32>
    %74 = vector.broadcast %73 : vector<16x1xf32> to vector<16x16xf32>
    %75 = arith.divf %71, %74 : vector<16x16xf32>
    %cst_21 = arith.constant 0.000000e+00 : f32
    %76 = vector.broadcast %cst_21 : f32 to vector<16x96xf32>
    %77 = tpu.concatenate %66, %75, %76 in 1 : vector<16x16xf32>, vector<16x16xf32>, vector<16x96xf32> -> vector<16x128xf32>
    %c0_22 = arith.constant 0 : index
    %c0_23 = arith.constant 0 : index
    %78 = vector.load %arg6[%c0_22, %c0_23] : memref<16x128xf32, #tpu.memory_space<vmem>>, vector<16x128xf32>
    tpu.vector_store %arg6[%c0_22, %c0_23], %77 {strides = array<i32>} : memref<16x128xf32, #tpu.memory_space<vmem>>, vector<16x128xf32>,
    return
  }
  func.func @transform_0(%arg0: i32) -> (i32, i32) {
    %c0_i32 = arith.constant 0 : i32
    %c0_i32_0 = arith.constant 0 : i32
    return %arg0, %c0_i32 : i32, i32
  }
  func.func @transform_1(%arg0: i32) -> (i32, i32) {
    %c0_i32 = arith.constant 0 : i32
    %c0_i32_0 = arith.constant 0 : i32
    %c0_i32_1 = arith.constant 0 : i32
    return %c0_i32, %c0_i32_0 : i32, i32
  }
  func.func @transform_2(%arg0: i32) -> (i32, i32) {
    %c0_i32 = arith.constant 0 : i32
    %c0_i32_0 = arith.constant 0 : i32
    %c0_i32_1 = arith.constant 0 : i32
    return %c0_i32, %c0_i32_0 : i32, i32
  }
  func.func @transform_3(%arg0: i32) -> (i32, i32) {
    %c0_i32 = arith.constant 0 : i32
    %c0_i32_0 = arith.constant 0 : i32
    %c0_i32_1 = arith.constant 0 : i32
    return %c0_i32, %c0_i32_0 : i32, i32
  }
  func.func @transform_4(%arg0: i32) -> (i32, i32) {
    %c0_i32 = arith.constant 0 : i32
    %c0_i32_0 = arith.constant 0 : i32
    %c0_i32_1 = arith.constant 0 : i32
    return %c0_i32, %c0_i32_0 : i32, i32
  }
  func.func @transform_5(%arg0: i32) -> (i32, i32) {
    %c0_i32 = arith.constant 0 : i32
    %c0_i32_0 = arith.constant 0 : i32
    return %arg0, %c0_i32 : i32, i32
  }
}

</mosaic_0001>

<llo_original>
// kernel: tpu_custom_call.1
$region0: #{tpu_custom_call.1}
  #allocation0 [shape = 'u32[]', space=smem, size = 0x4, offset = 0x4, fixed_abs, tag = 'smem constant byte address 0x4 - core index']
  #allocation1 [shape = 'u32[144,128]{1,0:T(1,128)}', space=vmem, size = 0x12000, scoped, tag = 'internal scratch']
  %s0 = inlined_call_operand.hbm [shape: f32[512,128], index: 0, kind: input, shape index: {}]
  %s1 = inlined_call_operand.hbm [shape: bf16[128,2048], index: 1, kind: input, shape index: {}]
  %s2 = inlined_call_operand.hbm [shape: f32[1,2048], index: 2, kind: input, shape index: {}]
  %s3 = inlined_call_operand.hbm [shape: f32[128,128], index: 3, kind: input, shape index: {}]
  %s4 = inlined_call_operand.vmem [shape: f32[1,128], index: 4, kind: input, shape index: {}]
  %s5 = inlined_call_operand.hbm [shape: f32[32,128], index: 5, kind: output, shape index: {}]
  %s6 = sld [smem:[#allocation0]]
  $region69: #{tpu_custom_call.1} parent=0
    _
  %s8 = ssub.s32 1, %s6
  %s9 = scalar_select 0, %s8, %s6
  $region1: #{tpu_custom_call.1} parent=0
    #allocation2 [shape = 'u8[262144]{0}', space=vmem, size = 0x40000, scoped, tag = 'input window, operand 0']
    #allocation3 [shape = 's32[2]{0}', space=sflag, size = 0x8, scoped, tag = 'scoped memory for tpu_custom_call.1']
    #allocation4 [shape = 's32[2]{0}', space=sflag, size = 0x8, scoped, tag = 'scoped memory for tpu_custom_call.1']
    #allocation5 [shape = 'u8[524288]{0}', space=vmem, size = 0x80000, scoped, tag = 'input window, operand 1, single buffered']
    #allocation6 [shape = 's32[1]{0}', space=sflag, size = 0x4, scoped, tag = 'scoped memory for tpu_custom_call.1']
    #allocation7 [shape = 'u8[8192]{0}', space=vmem, size = 0x2000, scoped, tag = 'input window, operand 2, single buffered']
    #allocation8 [shape = 'u8[65536]{0}', space=vmem, size = 0x10000, scoped, tag = 'input window, operand 3, single buffered']
    #allocation9 [shape = 's32[1]{0}', space=sflag, size = 0x4, scoped, tag = 'scoped memory for tpu_custom_call.1']
    #allocation10 [shape = 'u8[16384]{0}', space=vmem, size = 0x4000, scoped, tag = 'output window, operand 0']
    %10 = vsyncpa [#allocation3], 0
    %s11 = scalar_lea.sflag [#allocation3], 1
    %12 = vsyncpa %s11, 0
    %13 = vsyncpa [#allocation6], 0
    %14 = vsyncpa [#allocation9], 0
    %15 = vsyncpa [#allocation4], 0
    %s16 = scalar_lea.sflag [#allocation4], 1
    %17 = vsyncpa %s16, 0
    loop: start=0, step=1, limit=4
    $region2: #{tpu_custom_call.1} parent=1 // loop_pre_header
      _
    $region3: #{tpu_custom_call.1} parent=1 // loop_header
      %s19 = sphi 0, %s23
      %p20 = scmp.ge.s32.totalorder %s19, 4
      %s29 = sphi 0, %s31
      %s32 = sphi 0, %s29
      %s33 = sphi 0, %s32
      %s49 = sphi 0, %s33
      %s53 = sphi 0, %s53
      %s55 = sphi 0, %s53
      %s56 = sphi 0, %s55
      %s70 = sphi 0, %s56
      %s74 = sphi 0, %s74
      %s76 = sphi 0, %s74
      %s77 = sphi 0, %s76
      %s91 = sphi 0, %s77
      %s95 = sphi 0, %s95
      %s97 = sphi 0, %s95
      %s98 = sphi 0, %s97
      %s112 = sphi 0, %s98
      %s116 = sphi 0, %s116
      %s118 = sphi 0, %s116
      %s119 = sphi 0, %s118
      %s133 = sphi 0, %s119
      %s139 = sphi 0, %s141
      %s142 = sphi 0, %s139
      %s143 = sphi 0, %s142
      %s159 = sphi 0, %s143
    $region4: #{tpu_custom_call.1} parent=1 // loop_header_branch
      %22 = sbr.rel (%p20) target = $region8
    $region5: #{tpu_custom_call.1} parent=1 // loop_body
      %s24 = ssub.s32 %s19, 1
      %s25 = ssub.s32 %s19, 2
      %s26 = sadd.s32 %s19, 1
      %s27 = ssub.s32 %s19, %s26
      %p28 = scmp.eq.s32.totalorder %s27, 0
      %s30 = sadd.s32 %s29, 1
      %s31 = scalar_select %p28, %s29, %s30
      %p34 = pneg %p28
      %p35 = scmp.eq.s32.totalorder %s19, 1
      %p36 = por %p34, %p35
      %p37 = scmp.ne.s32.totalorder %s29, %s32
      %p38 = scmp.eq.s32.totalorder %s19, 0
      %p39 = por %p37, %p38
      %p40 = scmp.ne.s32.totalorder %s29, %s32
      %p41 = scmp.eq.s32.totalorder %s24, 1
      %p42 = por %p40, %p41
      %p43 = scmp.ne.s32.totalorder %s32, %s33
      %p44 = scmp.eq.s32.totalorder %s24, 0
      %p45 = por %p43, %p44
      %p46 = scmp.ne.s32.totalorder %s32, %s33
      %p47 = scmp.eq.s32.totalorder %s25, 1
      %p48 = por %p46, %p47
      %p50 = scmp.ne.s32.totalorder %s33, %s49
      %p51 = scmp.eq.s32.totalorder %s25, 0
      %p52 = por %p50, %p51
      %s54 = sadd.s32 %s53, 1
      %p57 = scmp.eq.s32.totalorder %s19, 1
      %p58 = scmp.ne.s32.totalorder %s53, %s55
      %p59 = scmp.eq.s32.totalorder %s19, 0
      %p60 = por %p58, %p59
      %p61 = scmp.ne.s32.totalorder %s53, %s55
      %p62 = scmp.eq.s32.totalorder %s24, 1
      %p63 = por %p61, %p62
      %p64 = scmp.ne.s32.totalorder %s55, %s56
      %p65 = scmp.eq.s32.totalorder %s24, 0
      %p66 = por %p64, %p65
      %p67 = scmp.ne.s32.totalorder %s55, %s56
      %p68 = scmp.eq.s32.totalorder %s25, 1
      %p69 = por %p67, %p68
      %p71 = scmp.ne.s32.totalorder %s56, %s70
      %p72 = scmp.eq.s32.totalorder %s25, 0
      %p73 = por %p71, %p72
      %s75 = sadd.s32 %s74, 1
      %p78 = scmp.eq.s32.totalorder %s19, 1
      %p79 = scmp.ne.s32.totalorder %s74, %s76
      %p80 = scmp.eq.s32.totalorder %s19, 0
      %p81 = por %p79, %p80
      %p82 = scmp.ne.s32.totalorder %s74, %s76
      %p83 = scmp.eq.s32.totalorder %s24, 1
      %p84 = por %p82, %p83
      %p85 = scmp.ne.s32.totalorder %s76, %s77
      %p86 = scmp.eq.s32.totalorder %s24, 0
      %p87 = por %p85, %p86
      %p88 = scmp.ne.s32.totalorder %s76, %s77
      %p89 = scmp.eq.s32.totalorder %s25, 1
      %p90 = por %p88, %p89
      %p92 = scmp.ne.s32.totalorder %s77, %s91
      %p93 = scmp.eq.s32.totalorder %s25, 0
      %p94 = por %p92, %p93
      %s96 = sadd.s32 %s95, 1
      %p99 = scmp.eq.s32.totalorder %s19, 1
      %p100 = scmp.ne.s32.totalorder %s95, %s97
      %p101 = scmp.eq.s32.totalorder %s19, 0
      %p102 = por %p100, %p101
      %p103 = scmp.ne.s32.totalorder %s95, %s97
      %p104 = scmp.eq.s32.totalorder %s24, 1
      %p105 = por %p103, %p104
      %p106 = scmp.ne.s32.totalorder %s97, %s98
      %p107 = scmp.eq.s32.totalorder %s24, 0
      %p108 = por %p106, %p107
      %p109 = scmp.ne.s32.totalorder %s97, %s98
      %p110 = scmp.eq.s32.totalorder %s25, 1
      %p111 = por %p109, %p110
      %p113 = scmp.ne.s32.totalorder %s98, %s112
      %p114 = scmp.eq.s32.totalorder %s25, 0
      %p115 = por %p113, %p114
      %s117 = sadd.s32 %s116, 1
      %p120 = scmp.eq.s32.totalorder %s19, 1
      %p121 = scmp.ne.s32.totalorder %s116, %s118
      %p122 = scmp.eq.s32.totalorder %s19, 0
      %p123 = por %p121, %p122
      %p124 = scmp.ne.s32.totalorder %s116, %s118
      %p125 = scmp.eq.s32.totalorder %s24, 1
      %p126 = por %p124, %p125
      %p127 = scmp.ne.s32.totalorder %s118, %s119
      %p128 = scmp.eq.s32.totalorder %s24, 0
      %p129 = por %p127, %p128
      %p130 = scmp.ne.s32.totalorder %s118, %s119
      %p131 = scmp.eq.s32.totalorder %s25, 1
      %p132 = por %p130, %p131
      %p134 = scmp.ne.s32.totalorder %s119, %s133
      %p135 = scmp.eq.s32.totalorder %s25, 0
      %p136 = por %p134, %p135
      %s137 = ssub.s32 %s19, %s26
      %p138 = scmp.eq.s32.totalorder %s137, 0
      %s140 = sadd.s32 %s139, 1
      %s141 = scalar_select %p138, %s139, %s140
      %p144 = pneg %p138
      %p145 = scmp.eq.s32.totalorder %s19, 1
      %p146 = por %p144, %p145
      %p147 = scmp.ne.s32.totalorder %s139, %s142
      %p148 = scmp.eq.s32.totalorder %s19, 0
      %p149 = por %p147, %p148
      %p150 = scmp.ne.s32.totalorder %s139, %s142
      %p151 = scmp.eq.s32.totalorder %s24, 1
      %p152 = por %p150, %p151
      %p153 = scmp.ne.s32.totalorder %s142, %s143
      %p154 = scmp.eq.s32.totalorder %s24, 0
      %p155 = por %p153, %p154
      %p156 = scmp.ne.s32.totalorder %s142, %s143
      %p157 = scmp.eq.s32.totalorder %s25, 1
      %p158 = por %p156, %p157
      %p160 = scmp.ne.s32.totalorder %s143, %s159
      %p161 = scmp.eq.s32.totalorder %s25, 0
      %p162 = por %p160, %p161
      %p163 = scmp.le.s32.totalorder 1, %s19
      %p164 = scmp.lt.s32.totalorder %s19, 3
      %p165 = pnand %p163, %p164
      %p166 = pneg %p165
      // Predicated region
      $region9: #{tpu_custom_call.1} parent=5 // pred_check
        _
      $region10: #{tpu_custom_call.1} parent=5 // pred_check_branch
        %168 = sbr.rel (%p165) target = $region12
      $region11: #{tpu_custom_call.1} parent=5 // pred_region
        %s169 = ssub.s32 %s19, 1
        // Predicated region
        $region13: #{tpu_custom_call.1} parent=11 // pred_check
          %p170 = pneg %p66
        $region14: #{tpu_custom_call.1} parent=11 // pred_check_branch
          %172 = sbr.rel (%p170) target = $region16
        $region15: #{tpu_custom_call.1} parent=11 // pred_region
          %s174 = ssub.s32 16384, 16384
          %175 = vsyncadd [#allocation6], %s174
          %s176 = sshll.u32 [#allocation5], 4
          %s177 = int_to_ptr.vmem [resolvable:$true] %s176
          %182 = dma.hbm_to_vmem [thread:$0]  %s1, 16384, %s177, [#allocation6], 1024, 1024, 64
        $region16: #{tpu_custom_call.1} parent=11 // pred_fallthru
          _
        // Predicated region
        $region17: #{tpu_custom_call.1} parent=11 // pred_check
          %p183 = pneg %p87
        $region18: #{tpu_custom_call.1} parent=11 // pred_check_branch
          %185 = sbr.rel (%p183) target = $region20
        $region19: #{tpu_custom_call.1} parent=11 // pred_region
          %s187 = ssub.s32 256, 256
          %188 = vsyncadd [#allocation6], %s187
          %s190 = sshll.u32 [#allocation7], 4
          %s191 = int_to_ptr.vmem [resolvable:$true] %s190
          %193 = dma.hbm_to_vmem [thread:$0]  %s2, 256, %s191, [#allocation6]
        $region20: #{tpu_custom_call.1} parent=11 // pred_fallthru
          _
        // Predicated region
        $region21: #{tpu_custom_call.1} parent=11 // pred_check
          %p194 = pneg %p108
        $region22: #{tpu_custom_call.1} parent=11 // pred_check_branch
          %196 = sbr.rel (%p194) target = $region24
        $region23: #{tpu_custom_call.1} parent=11 // pred_region
          %s198 = ssub.s32 2048, 2048
          %199 = vsyncadd [#allocation9], %s198
          %s200 = sshll.u32 [#allocation8], 4
          %s201 = int_to_ptr.vmem [resolvable:$true] %s200
          %206 = dma.hbm_to_vmem [thread:$0]  %s3, 2048, %s201, [#allocation9], 128, 128, 8
        $region24: #{tpu_custom_call.1} parent=11 // pred_fallthru
          _
        // Predicated region
        $region25: #{tpu_custom_call.1} parent=11 // pred_check
          %p207 = pneg %p129
        $region26: #{tpu_custom_call.1} parent=11 // pred_check_branch
          %209 = sbr.rel (%p207) target = $region28
        $region27: #{tpu_custom_call.1} parent=11 // pred_region
          _
        $region28: #{tpu_custom_call.1} parent=11 // pred_fallthru
          _
      $region12: #{tpu_custom_call.1} parent=5 // pred_fallthru
        _
      %p210 = scmp.lt.s32.totalorder %s19, 2
      // Predicated region
      $region29: #{tpu_custom_call.1} parent=5 // pred_check
        %p211 = pneg %p210
      $region30: #{tpu_custom_call.1} parent=5 // pred_check_branch
        %213 = sbr.rel (%p211) target = $region32
      $region31: #{tpu_custom_call.1} parent=5 // pred_region
        // Predicated region
        $region33: #{tpu_custom_call.1} parent=31 // pred_check
          %p214 = pneg %p39
        $region34: #{tpu_custom_call.1} parent=31 // pred_check_branch
          %216 = sbr.rel (%p214) target = $region36
        $region35: #{tpu_custom_call.1} parent=31 // pred_region
          %s217 = sand.u32 %s29, 1
          %s218 = scalar_lea.sflag [#allocation3], %s217
          %s219 = sand.u32 %s29, 1
          %s220 = smul.addr %s219, 256
          %s221 = scalar_lea.vmem [#allocation2], %s220
          %s222 = smul.u32 32, %s19
          %s224 = ssub.s32 4096, 4096
          %225 = vsyncadd %s218, %s224
          %s226 = smul.addr %s222, 128
          %s227 = scalar_lea.hbm %s0, %s226
          %s228 = sshll.u32 %s221, 4
          %s229 = int_to_ptr.vmem [resolvable:$true] %s228
          %234 = dma.hbm_to_vmem [thread:$0]  %s227, 4096, %s229, %s218, 128, 128, 8
        $region36: #{tpu_custom_call.1} parent=31 // pred_fallthru
          _
      $region32: #{tpu_custom_call.1} parent=5 // pred_fallthru
        _
      %p235 = scmp.le.s32.totalorder 1, %s19
      %p236 = scmp.lt.s32.totalorder %s19, 3
      %p237 = pnand %p235, %p236
      %p238 = pneg %p237
      // Predicated region
      $region37: #{tpu_custom_call.1} parent=5 // pred_check
        _
      $region38: #{tpu_custom_call.1} parent=5 // pred_check_branch
        %240 = sbr.rel (%p237) target = $region40
      $region39: #{tpu_custom_call.1} parent=5 // pred_region
        %s241 = ssub.s32 %s19, 1
        %s242 = sand.u32 %s32, 1
        %s243 = scalar_lea.sflag [#allocation3], %s242
        %s244 = sand.u32 %s32, 1
        %s245 = smul.addr %s244, 256
        %s246 = scalar_lea.vmem [#allocation2], %s245
        // Predicated region
        $region41: #{tpu_custom_call.1} parent=39 // pred_check
          %p247 = pneg %p45
        $region42: #{tpu_custom_call.1} parent=39 // pred_check_branch
          %249 = sbr.rel (%p247) target = $region44
        $region43: #{tpu_custom_call.1} parent=39 // pred_region
          %250 = dma.done %s243, 4096
        $region44: #{tpu_custom_call.1} parent=39 // pred_fallthru
          _
        // Predicated region
        $region45: #{tpu_custom_call.1} parent=39 // pred_check
          %p251 = pneg %p66
        $region46: #{tpu_custom_call.1} parent=39 // pred_check_branch
          %253 = sbr.rel (%p251) target = $region48
        $region47: #{tpu_custom_call.1} parent=39 // pred_region
          %254 = dma.done [#allocation6], 16384
        $region48: #{tpu_custom_call.1} parent=39 // pred_fallthru
          _
        // Predicated region
        $region49: #{tpu_custom_call.1} parent=39 // pred_check
          %p255 = pneg %p87
        $region50: #{tpu_custom_call.1} parent=39 // pred_check_branch
          %257 = sbr.rel (%p255) target = $region52
        $region51: #{tpu_custom_call.1} parent=39 // pred_region
          %258 = dma.done [#allocation6], 256
        $region52: #{tpu_custom_call.1} parent=39 // pred_fallthru
          _
        // Predicated region
        $region53: #{tpu_custom_call.1} parent=39 // pred_check
          %p259 = pneg %p108
        $region54: #{tpu_custom_call.1} parent=39 // pred_check_branch
          %261 = sbr.rel (%p259) target = $region56
        $region55: #{tpu_custom_call.1} parent=39 // pred_region
          %262 = dma.done [#allocation9], 2048
        $region56: #{tpu_custom_call.1} parent=39 // pred_fallthru
          _
        %s263 = sand.u32 %s32, 1
        %s264 = scalar_lea.sflag [#allocation3], %s263
        %s265 = sand.u32 %s32, 1
        %s266 = smul.addr %s265, 256
        %s267 = scalar_lea.vmem [#allocation2], %s266
        %p268 = pneg %p45
        %p269 = pneg %p42
        %p270 = pneg %p66
        %p271 = pneg %p63
        %p272 = pneg %p87
        %p273 = pneg %p84
        %p274 = pneg %p108
        %p275 = pneg %p105
        %p276 = pneg %p129
        %p277 = pneg %p126
        %p278 = pneg %p155
        %p279 = pneg %p152
        %s280 = sand.u32 %s142, 1
        %s281 = scalar_lea.sflag [#allocation4], %s280
        %s282 = sand.u32 %s142, 1
        %s283 = smul.addr %s282, 16
        %s284 = scalar_lea.vmem [#allocation10], %s283
        %s285 = smul.u32 32, %s24
        %s286 = smul.u32 2, %s24
        %v288 = vld [vmem:[%s246] sm:$0xff]
        %v289 = vld [vmem:[%s246 + $0x8] sm:$0xff]
        %v290 = vld [vmem:[%s246 + $0x10] sm:$0xff]
        %v291 = vld [vmem:[%s246 + $0x18] sm:$0xff]
        %v292 = vld [vmem:[%s246 + $0x20] sm:$0xff]
        %v293 = vld [vmem:[%s246 + $0x28] sm:$0xff]
        %v294 = vld [vmem:[%s246 + $0x30] sm:$0xff]
        %v295 = vld [vmem:[%s246 + $0x38] sm:$0xff]
        %v296 = vld [vmem:[%s246 + $0x40] sm:$0xff]
        %v297 = vld [vmem:[%s246 + $0x48] sm:$0xff]
        %v298 = vld [vmem:[%s246 + $0x50] sm:$0xff]
        %v299 = vld [vmem:[%s246 + $0x58] sm:$0xff]
        %v300 = vld [vmem:[%s246 + $0x60] sm:$0xff]
        %v301 = vld [vmem:[%s246 + $0x68] sm:$0xff]
        %v302 = vld [vmem:[%s246 + $0x70] sm:$0xff]
        %v303 = vld [vmem:[%s246 + $0x78] sm:$0xff]
        %v304 = vld [vmem:[%s246 + $0x80] sm:$0xff]
        %v305 = vld [vmem:[%s246 + $0x88] sm:$0xff]
        %v306 = vld [vmem:[%s246 + $0x90] sm:$0xff]
        %v307 = vld [vmem:[%s246 + $0x98] sm:$0xff]
        %v308 = vld [vmem:[%s246 + $0xa0] sm:$0xff]
        %v309 = vld [vmem:[%s246 + $0xa8] sm:$0xff]
        %v310 = vld [vmem:[%s246 + $0xb0] sm:$0xff]
        %v311 = vld [vmem:[%s246 + $0xb8] sm:$0xff]
        %v312 = vld [vmem:[%s246 + $0xc0] sm:$0xff]
        %v313 = vld [vmem:[%s246 + $0xc8] sm:$0xff]
        %v314 = vld [vmem:[%s246 + $0xd0] sm:$0xff]
        %v315 = vld [vmem:[%s246 + $0xd8] sm:$0xff]
        %v316 = vld [vmem:[%s246 + $0xe0] sm:$0xff]
        %v317 = vld [vmem:[%s246 + $0xe8] sm:$0xff]
        %v318 = vld [vmem:[%s246 + $0xf0] sm:$0xff]
        %v319 = vld [vmem:[%s246 + $0xf8] sm:$0xff]
        %v320 = vpack.c.bf16 %v289, %v288
        %v321 = vpack.c.bf16 %v291, %v290
        %v322 = vpack.c.bf16 %v293, %v292
        %v323 = vpack.c.bf16 %v295, %v294
        %v324 = vpack.c.bf16 %v297, %v296
        %v325 = vpack.c.bf16 %v299, %v298
        %v326 = vpack.c.bf16 %v301, %v300
        %v327 = vpack.c.bf16 %v303, %v302
        %v328 = vpack.c.bf16 %v305, %v304
        %v329 = vpack.c.bf16 %v307, %v306
        %v330 = vpack.c.bf16 %v309, %v308
        %v331 = vpack.c.bf16 %v311, %v310
        %v332 = vpack.c.bf16 %v313, %v312
        %v333 = vpack.c.bf16 %v315, %v314
        %v334 = vpack.c.bf16 %v317, %v316
        %v335 = vpack.c.bf16 %v319, %v318
        %v336 = vld [vmem:[#allocation5] sm:$0xff]
        %v337 = vld [vmem:[#allocation5 + $0x8] sm:$0xff]
        %v338 = vld [vmem:[#allocation5 + $0x10] sm:$0xff]
        %v339 = vld [vmem:[#allocation5 + $0x18] sm:$0xff]
        %v340 = vld [vmem:[#allocation5 + $0x20] sm:$0xff]
        %v341 = vld [vmem:[#allocation5 + $0x28] sm:$0xff]
        %v342 = vld [vmem:[#allocation5 + $0x30] sm:$0xff]
        %v343 = vld [vmem:[#allocation5 + $0x38] sm:$0xff]
        %v344 = vld [vmem:[#allocation5 + $0x40] sm:$0xff]
        %v345 = vld [vmem:[#allocation5 + $0x48] sm:$0xff]
        %v346 = vld [vmem:[#allocation5 + $0x50] sm:$0xff]
        %v347 = vld [vmem:[#allocation5 + $0x58] sm:$0xff]
        %v348 = vld [vmem:[#allocation5 + $0x60] sm:$0xff]
        %v349 = vld [vmem:[#allocation5 + $0x68] sm:$0xff]
        %v350 = vld [vmem:[#allocation5 + $0x70] sm:$0xff]
        %v351 = vld [vmem:[#allocation5 + $0x78] sm:$0xff]
        %v352 = vld [vmem:[#allocation5 + $0x80] sm:$0xff]
        %v353 = vld [vmem:[#allocation5 + $0x88] sm:$0xff]
        %v354 = vld [vmem:[#allocation5 + $0x90] sm:$0xff]
        %v355 = vld [vmem:[#allocation5 + $0x98] sm:$0xff]
        %v356 = vld [vmem:[#allocation5 + $0xa0] sm:$0xff]
        %v357 = vld [vmem:[#allocation5 + $0xa8] sm:$0xff]
        %v358 = vld [vmem:[#allocation5 + $0xb0] sm:$0xff]
        %v359 = vld [vmem:[#allocation5 + $0xb8] sm:$0xff]
        %v360 = vld [vmem:[#allocation5 + $0xc0] sm:$0xff]
        %v361 = vld [vmem:[#allocation5 + $0xc8] sm:$0xff]
        %v362 = vld [vmem:[#allocation5 + $0xd0] sm:$0xff]
        %v363 = vld [vmem:[#allocation5 + $0xd8] sm:$0xff]
        %v364 = vld [vmem:[#allocation5 + $0xe0] sm:$0xff]
        %v365 = vld [vmem:[#allocation5 + $0xe8] sm:$0xff]
        %v366 = vld [vmem:[#allocation5 + $0xf0] sm:$0xff]
        %v367 = vld [vmem:[#allocation5 + $0xf8] sm:$0xff]
        %v368 = vld [vmem:[#allocation5 + $0x100] sm:$0xff]
        %v369 = vld [vmem:[#allocation5 + $0x108] sm:$0xff]
        %v370 = vld [vmem:[#allocation5 + $0x110] sm:$0xff]
        %v371 = vld [vmem:[#allocation5 + $0x118] sm:$0xff]
        %v372 = vld [vmem:[#allocation5 + $0x120] sm:$0xff]
        %v373 = vld [vmem:[#allocation5 + $0x128] sm:$0xff]
        %v374 = vld [vmem:[#allocation5 + $0x130] sm:$0xff]
        %v375 = vld [vmem:[#allocation5 + $0x138] sm:$0xff]
        %v376 = vld [vmem:[#allocation5 + $0x140] sm:$0xff]
        %v377 = vld [vmem:[#allocation5 + $0x148] sm:$0xff]
        %v378 = vld [vmem:[#allocation5 + $0x150] sm:$0xff]
        %v379 = vld [vmem:[#allocation5 + $0x158] sm:$0xff]
        %v380 = vld [vmem:[#allocation5 + $0x160] sm:$0xff]
        %v381 = vld [vmem:[#allocation5 + $0x168] sm:$0xff]
        %v382 = vld [vmem:[#allocation5 + $0x170] sm:$0xff]
        %v383 = vld [vmem:[#allocation5 + $0x178] sm:$0xff]
        %v384 = vld [vmem:[#allocation5 + $0x180] sm:$0xff]
        %v385 = vld [vmem:[#allocation5 + $0x188] sm:$0xff]
        %v386 = vld [vmem:[#allocation5 + $0x190] sm:$0xff]
        %v387 = vld [vmem:[#allocation5 + $0x198] sm:$0xff]
        %v388 = vld [vmem:[#allocation5 + $0x1a0] sm:$0xff]
        %v389 = vld [vmem:[#allocation5 + $0x1a8] sm:$0xff]
        %v390 = vld [vmem:[#allocation5 + $0x1b0] sm:$0xff]
        %v391 = vld [vmem:[#allocation5 + $0x1b8] sm:$0xff]
        %v392 = vld [vmem:[#allocation5 + $0x1c0] sm:$0xff]
        %v393 = vld [vmem:[#allocation5 + $0x1c8] sm:$0xff]
        %v394 = vld [vmem:[#allocation5 + $0x1d0] sm:$0xff]
        %v395 = vld [vmem:[#allocation5 + $0x1d8] sm:$0xff]
        %v396 = vld [vmem:[#allocation5 + $0x1e0] sm:$0xff]
        %v397 = vld [vmem:[#allocation5 + $0x1e8] sm:$0xff]
        %v398 = vld [vmem:[#allocation5 + $0x1f0] sm:$0xff]
        %v399 = vld [vmem:[#allocation5 + $0x1f8] sm:$0xff]
        %v400 = vld [vmem:[#allocation5 + $0x200] sm:$0xff]
        %v401 = vld [vmem:[#allocation5 + $0x208] sm:$0xff]
        %v402 = vld [vmem:[#allocation5 + $0x210] sm:$0xff]
        %v403 = vld [vmem:[#allocation5 + $0x218] sm:$0xff]
        %v404 = vld [vmem:[#allocation5 + $0x220] sm:$0xff]
        %v405 = vld [vmem:[#allocation5 + $0x228] sm:$0xff]
        %v406 = vld [vmem:[#allocation5 + $0x230] sm:$0xff]
        %v407 = vld [vmem:[#allocation5 + $0x238] sm:$0xff]
        %v408 = vld [vmem:[#allocation5 + $0x240] sm:$0xff]
        %v409 = vld [vmem:[#allocation5 + $0x248] sm:$0xff]
        %v410 = vld [vmem:[#allocation5 + $0x250] sm:$0xff]
        %v411 = vld [vmem:[#allocation5 + $0x258] sm:$0xff]
        %v412 = vld [vmem:[#allocation5 + $0x260] sm:$0xff]
        %v413 = vld [vmem:[#allocation5 + $0x268] sm:$0xff]
        %v414 = vld [vmem:[#allocation5 + $0x270] sm:$0xff]
        %v415 = vld [vmem:[#allocation5 + $0x278] sm:$0xff]
        %v416 = vld [vmem:[#allocation5 + $0x280] sm:$0xff]
        %v417 = vld [vmem:[#allocation5 + $0x288] sm:$0xff]
        %v418 = vld [vmem:[#allocation5 + $0x290] sm:$0xff]
        %v419 = vld [vmem:[#allocation5 + $0x298] sm:$0xff]
        %v420 = vld [vmem:[#allocation5 + $0x2a0] sm:$0xff]
        %v421 = vld [vmem:[#allocation5 + $0x2a8] sm:$0xff]
        %v422 = vld [vmem:[#allocation5 + $0x2b0] sm:$0xff]
        %v423 = vld [vmem:[#allocation5 + $0x2b8] sm:$0xff]
        %v424 = vld [vmem:[#allocation5 + $0x2c0] sm:$0xff]
        %v425 = vld [vmem:[#allocation5 + $0x2c8] sm:$0xff]
        %v426 = vld [vmem:[#allocation5 + $0x2d0] sm:$0xff]
        %v427 = vld [vmem:[#allocation5 + $0x2d8] sm:$0xff]
        %v428 = vld [vmem:[#allocation5 + $0x2e0] sm:$0xff]
        %v429 = vld [vmem:[#allocation5 + $0x2e8] sm:$0xff]
        %v430 = vld [vmem:[#allocation5 + $0x2f0] sm:$0xff]
        %v431 = vld [vmem:[#allocation5 + $0x2f8] sm:$0xff]
        %v432 = vld [vmem:[#allocation5 + $0x300] sm:$0xff]
        %v433 = vld [vmem:[#allocation5 + $0x308] sm:$0xff]
        %v434 = vld [vmem:[#allocation5 + $0x310] sm:$0xff]
        %v435 = vld [vmem:[#allocation5 + $0x318] sm:$0xff]
        %v436 = vld [vmem:[#allocation5 + $0x320] sm:$0xff]
        %v437 = vld [vmem:[#allocation5 + $0x328] sm:$0xff]
        %v438 = vld [vmem:[#allocation5 + $0x330] sm:$0xff]
        %v439 = vld [vmem:[#allocation5 + $0x338] sm:$0xff]
        %v440 = vld [vmem:[#allocation5 + $0x340] sm:$0xff]
        %v441 = vld [vmem:[#allocation5 + $0x348] sm:$0xff]
        %v442 = vld [vmem:[#allocation5 + $0x350] sm:$0xff]
        %v443 = vld [vmem:[#allocation5 + $0x358] sm:$0xff]
        %v444 = vld [vmem:[#allocation5 + $0x360] sm:$0xff]
        %v445 = vld [vmem:[#allocation5 + $0x368] sm:$0xff]
        %v446 = vld [vmem:[#allocation5 + $0x370] sm:$0xff]
        %v447 = vld [vmem:[#allocation5 + $0x378] sm:$0xff]
        %v448 = vld [vmem:[#allocation5 + $0x380] sm:$0xff]
        %v449 = vld [vmem:[#allocation5 + $0x388] sm:$0xff]
        %v450 = vld [vmem:[#allocation5 + $0x390] sm:$0xff]
        %v451 = vld [vmem:[#allocation5 + $0x398] sm:$0xff]
        %v452 = vld [vmem:[#allocation5 + $0x3a0] sm:$0xff]
        %v453 = vld [vmem:[#allocation5 + $0x3a8] sm:$0xff]
        %v454 = vld [vmem:[#allocation5 + $0x3b0] sm:$0xff]
        %v455 = vld [vmem:[#allocation5 + $0x3b8] sm:$0xff]
        %v456 = vld [vmem:[#allocation5 + $0x3c0] sm:$0xff]
        %v457 = vld [vmem:[#allocation5 + $0x3c8] sm:$0xff]
        %v458 = vld [vmem:[#allocation5 + $0x3d0] sm:$0xff]
        %v459 = vld [vmem:[#allocation5 + $0x3d8] sm:$0xff]
        %v460 = vld [vmem:[#allocation5 + $0x3e0] sm:$0xff]
        %v461 = vld [vmem:[#allocation5 + $0x3e8] sm:$0xff]
        %v462 = vld [vmem:[#allocation5 + $0x3f0] sm:$0xff]
        %v463 = vld [vmem:[#allocation5 + $0x3f8] sm:$0xff]
        %v464 = vld [vmem:[#allocation7] sm:$0xff]
        %v465 = vld [vmem:[#allocation7 + $0x8] sm:$0xff]
        %v468 = vlaneseq
        %v469 = vshrl.u32 %v468, 7
        %v470 = vsub.s32 0, %v469
        %v471 = vrot.slane %v464, %v470
        %v472 = vlaneseq
        %v473 = vshrl.u32 %v472, 7
        %v474 = vsub.s32 1, %v473
        %v475 = vrot.slane %v464, %v474
        %v476 = vlaneseq
        %v477 = vshrl.u32 %v476, 7
        %v478 = vsub.s32 2, %v477
        %v479 = vrot.slane %v464, %v478
        %v480 = vlaneseq
        %v481 = vshrl.u32 %v480, 7
        %v482 = vsub.s32 3, %v481
        %v483 = vrot.slane %v464, %v482
        %v484 = vlaneseq
        %v485 = vshrl.u32 %v484, 7
        %v486 = vsub.s32 4, %v485
        %v487 = vrot.slane %v464, %v486
        %v488 = vlaneseq
        %v489 = vshrl.u32 %v488, 7
        %v490 = vsub.s32 5, %v489
        %v491 = vrot.slane %v464, %v490
        %v492 = vlaneseq
        %v493 = vshrl.u32 %v492, 7
        %v494 = vsub.s32 6, %v493
        %v495 = vrot.slane %v464, %v494
        %v496 = vlaneseq
        %v497 = vshrl.u32 %v496, 7
        %v498 = vsub.s32 7, %v497
        %v499 = vrot.slane %v464, %v498
        %v500 = vlaneseq
        %v501 = vshrl.u32 %v500, 7
        %v502 = vsub.s32 0, %v501
        %v503 = vrot.slane %v465, %v502
        %v504 = vlaneseq
        %v505 = vshrl.u32 %v504, 7
        %v506 = vsub.s32 1, %v505
        %v507 = vrot.slane %v465, %v506
        %v508 = vlaneseq
        %v509 = vshrl.u32 %v508, 7
        %v510 = vsub.s32 2, %v509
        %v511 = vrot.slane %v465, %v510
        %v512 = vlaneseq
        %v513 = vshrl.u32 %v512, 7
        %v514 = vsub.s32 3, %v513
        %v515 = vrot.slane %v465, %v514
        %v516 = vlaneseq
        %v517 = vshrl.u32 %v516, 7
        %v518 = vsub.s32 4, %v517
        %v519 = vrot.slane %v465, %v518
        %v520 = vlaneseq
        %v521 = vshrl.u32 %v520, 7
        %v522 = vsub.s32 5, %v521
        %v523 = vrot.slane %v465, %v522
        %v524 = vlaneseq
        %v525 = vshrl.u32 %v524, 7
        %v526 = vsub.s32 6, %v525
        %v527 = vrot.slane %v465, %v526
        %v528 = vlaneseq
        %v529 = vshrl.u32 %v528, 7
        %v530 = vsub.s32 7, %v529
        %v531 = vrot.slane %v465, %v530
        %v676 = vunpack.c.l.b16 %v336
        %v677 = vunpack.c.h.b16 %v336
        %v678 = vunpack.c.l.b16 %v337
        %v679 = vunpack.c.h.b16 %v337
        %v680 = vunpack.c.l.b16 %v338
        %v681 = vunpack.c.h.b16 %v338
        %v682 = vunpack.c.l.b16 %v339
        %v683 = vunpack.c.h.b16 %v339
        %v684 = vunpack.c.l.b16 %v340
        %v685 = vunpack.c.h.b16 %v340
        %v686 = vunpack.c.l.b16 %v341
        %v687 = vunpack.c.h.b16 %v341
        %v688 = vunpack.c.l.b16 %v342
        %v689 = vunpack.c.h.b16 %v342
        %v690 = vunpack.c.l.b16 %v343
        %v691 = vunpack.c.h.b16 %v343
        %v692 = vunpack.c.l.b16 %v344
        %v693 = vunpack.c.h.b16 %v344
        %v694 = vunpack.c.l.b16 %v345
        %v695 = vunpack.c.h.b16 %v345
        %v696 = vunpack.c.l.b16 %v346
        %v697 = vunpack.c.h.b16 %v346
        %v698 = vunpack.c.l.b16 %v347
        %v699 = vunpack.c.h.b16 %v347
        %v700 = vunpack.c.l.b16 %v348
        %v701 = vunpack.c.h.b16 %v348
        %v702 = vunpack.c.l.b16 %v349
        %v703 = vunpack.c.h.b16 %v349
        %v704 = vunpack.c.l.b16 %v350
        %v705 = vunpack.c.h.b16 %v350
        %v706 = vunpack.c.l.b16 %v351
        %v707 = vunpack.c.h.b16 %v351
        %v708 = vunpack.c.l.b16 %v352
        %v709 = vunpack.c.h.b16 %v352
        %v710 = vunpack.c.l.b16 %v353
        %v711 = vunpack.c.h.b16 %v353
        %v712 = vunpack.c.l.b16 %v354
        %v713 = vunpack.c.h.b16 %v354
        %v714 = vunpack.c.l.b16 %v355
        %v715 = vunpack.c.h.b16 %v355
        %v716 = vunpack.c.l.b16 %v356
        %v717 = vunpack.c.h.b16 %v356
        %v718 = vunpack.c.l.b16 %v357
        %v719 = vunpack.c.h.b16 %v357
        %v720 = vunpack.c.l.b16 %v358
        %v721 = vunpack.c.h.b16 %v358
        %v722 = vunpack.c.l.b16 %v359
        %v723 = vunpack.c.h.b16 %v359
        %v724 = vunpack.c.l.b16 %v360
        %v725 = vunpack.c.h.b16 %v360
        %v726 = vunpack.c.l.b16 %v361
        %v727 = vunpack.c.h.b16 %v361
        %v728 = vunpack.c.l.b16 %v362
        %v729 = vunpack.c.h.b16 %v362
        %v730 = vunpack.c.l.b16 %v363
        %v731 = vunpack.c.h.b16 %v363
        %v732 = vunpack.c.l.b16 %v364
        %v733 = vunpack.c.h.b16 %v364
        %v734 = vunpack.c.l.b16 %v365
        %v735 = vunpack.c.h.b16 %v365
        %v736 = vunpack.c.l.b16 %v366
        %v737 = vunpack.c.h.b16 %v366
        %v738 = vunpack.c.l.b16 %v367
        %v739 = vunpack.c.h.b16 %v367
        %v740 = vunpack.c.l.b16 %v368
        %v741 = vunpack.c.h.b16 %v368
        %v742 = vunpack.c.l.b16 %v369
        %v743 = vunpack.c.h.b16 %v369
        %v744 = vunpack.c.l.b16 %v370
        %v745 = vunpack.c.h.b16 %v370
        %v746 = vunpack.c.l.b16 %v371
        %v747 = vunpack.c.h.b16 %v371
        %v748 = vunpack.c.l.b16 %v372
        %v749 = vunpack.c.h.b16 %v372
        %v750 = vunpack.c.l.b16 %v373
        %v751 = vunpack.c.h.b16 %v373
        %v752 = vunpack.c.l.b16 %v374
        %v753 = vunpack.c.h.b16 %v374
        %v754 = vunpack.c.l.b16 %v375
        %v755 = vunpack.c.h.b16 %v375
        %v756 = vunpack.c.l.b16 %v376
        %v757 = vunpack.c.h.b16 %v376
        %v758 = vunpack.c.l.b16 %v377
        %v759 = vunpack.c.h.b16 %v377
        %v760 = vunpack.c.l.b16 %v378
        %v761 = vunpack.c.h.b16 %v378
        %v762 = vunpack.c.l.b16 %v379
        %v763 = vunpack.c.h.b16 %v379
        %v764 = vunpack.c.l.b16 %v380
        %v765 = vunpack.c.h.b16 %v380
        %v766 = vunpack.c.l.b16 %v381
        %v767 = vunpack.c.h.b16 %v381
        %v768 = vunpack.c.l.b16 %v382
        %v769 = vunpack.c.h.b16 %v382
        %v770 = vunpack.c.l.b16 %v383
        %v771 = vunpack.c.h.b16 %v383
        %v772 = vunpack.c.l.b16 %v384
        %v773 = vunpack.c.h.b16 %v384
        %v774 = vunpack.c.l.b16 %v385
        %v775 = vunpack.c.h.b16 %v385
        %v776 = vunpack.c.l.b16 %v386
        %v777 = vunpack.c.h.b16 %v386
        %v778 = vunpack.c.l.b16 %v387
        %v779 = vunpack.c.h.b16 %v387
        %v780 = vunpack.c.l.b16 %v388
        %v781 = vunpack.c.h.b16 %v388
        %v782 = vunpack.c.l.b16 %v389
        %v783 = vunpack.c.h.b16 %v389
        %v784 = vunpack.c.l.b16 %v390
        %v785 = vunpack.c.h.b16 %v390
        %v786 = vunpack.c.l.b16 %v391
        %v787 = vunpack.c.h.b16 %v391
        %v788 = vunpack.c.l.b16 %v392
        %v789 = vunpack.c.h.b16 %v392
        %v790 = vunpack.c.l.b16 %v393
        %v791 = vunpack.c.h.b16 %v393
        %v792 = vunpack.c.l.b16 %v394
        %v793 = vunpack.c.h.b16 %v394
        %v794 = vunpack.c.l.b16 %v395
        %v795 = vunpack.c.h.b16 %v395
        %v796 = vunpack.c.l.b16 %v396
        %v797 = vunpack.c.h.b16 %v396
        %v798 = vunpack.c.l.b16 %v397
        %v799 = vunpack.c.h.b16 %v397
        %v800 = vunpack.c.l.b16 %v398
        %v801 = vunpack.c.h.b16 %v398
        %v802 = vunpack.c.l.b16 %v399
        %v803 = vunpack.c.h.b16 %v399
        %v804 = vunpack.c.l.b16 %v400
        %v805 = vunpack.c.h.b16 %v400
        %v806 = vunpack.c.l.b16 %v401
        %v807 = vunpack.c.h.b16 %v401
        %v808 = vunpack.c.l.b16 %v402
        %v809 = vunpack.c.h.b16 %v402
        %v810 = vunpack.c.l.b16 %v403
        %v811 = vunpack.c.h.b16 %v403
        %v812 = vunpack.c.l.b16 %v404
        %v813 = vunpack.c.h.b16 %v404
        %v814 = vunpack.c.l.b16 %v405
        %v815 = vunpack.c.h.b16 %v405
        %v816 = vunpack.c.l.b16 %v406
        %v817 = vunpack.c.h.b16 %v406
        %v818 = vunpack.c.l.b16 %v407
        %v819 = vunpack.c.h.b16 %v407
        %v820 = vunpack.c.l.b16 %v408
        %v821 = vunpack.c.h.b16 %v408
        %v822 = vunpack.c.l.b16 %v409
        %v823 = vunpack.c.h.b16 %v409
        %v824 = vunpack.c.l.b16 %v410
        %v825 = vunpack.c.h.b16 %v410
        %v826 = vunpack.c.l.b16 %v411
        %v827 = vunpack.c.h.b16 %v411
        %v828 = vunpack.c.l.b16 %v412
        %v829 = vunpack.c.h.b16 %v412
        %v830 = vunpack.c.l.b16 %v413
        %v831 = vunpack.c.h.b16 %v413
        %v832 = vunpack.c.l.b16 %v414
        %v833 = vunpack.c.h.b16 %v414
        %v834 = vunpack.c.l.b16 %v415
        %v835 = vunpack.c.h.b16 %v415
        %v836 = vunpack.c.l.b16 %v416
        %v837 = vunpack.c.h.b16 %v416
        %v838 = vunpack.c.l.b16 %v417
        %v839 = vunpack.c.h.b16 %v417
        %v840 = vunpack.c.l.b16 %v418
        %v841 = vunpack.c.h.b16 %v418
        %v842 = vunpack.c.l.b16 %v419
        %v843 = vunpack.c.h.b16 %v419
        %v844 = vunpack.c.l.b16 %v420
        %v845 = vunpack.c.h.b16 %v420
        %v846 = vunpack.c.l.b16 %v421
        %v847 = vunpack.c.h.b16 %v421
        %v848 = vunpack.c.l.b16 %v422
        %v849 = vunpack.c.h.b16 %v422
        %v850 = vunpack.c.l.b16 %v423
        %v851 = vunpack.c.h.b16 %v423
        %v852 = vunpack.c.l.b16 %v424
        %v853 = vunpack.c.h.b16 %v424
        %v854 = vunpack.c.l.b16 %v425
        %v855 = vunpack.c.h.b16 %v425
        %v856 = vunpack.c.l.b16 %v426
        %v857 = vunpack.c.h.b16 %v426
        %v858 = vunpack.c.l.b16 %v427
        %v859 = vunpack.c.h.b16 %v427
        %v860 = vunpack.c.l.b16 %v428
        %v861 = vunpack.c.h.b16 %v428
        %v862 = vunpack.c.l.b16 %v429
        %v863 = vunpack.c.h.b16 %v429
        %v864 = vunpack.c.l.b16 %v430
        %v865 = vunpack.c.h.b16 %v430
        %v866 = vunpack.c.l.b16 %v431
        %v867 = vunpack.c.h.b16 %v431
        %v868 = vunpack.c.l.b16 %v432
        %v869 = vunpack.c.h.b16 %v432
        %v870 = vunpack.c.l.b16 %v433
        %v871 = vunpack.c.h.b16 %v433
        %v872 = vunpack.c.l.b16 %v434
        %v873 = vunpack.c.h.b16 %v434
        %v874 = vunpack.c.l.b16 %v435
        %v875 = vunpack.c.h.b16 %v435
        %v876 = vunpack.c.l.b16 %v436
        %v877 = vunpack.c.h.b16 %v436
        %v878 = vunpack.c.l.b16 %v437
        %v879 = vunpack.c.h.b16 %v437
        %v880 = vunpack.c.l.b16 %v438
        %v881 = vunpack.c.h.b16 %v438
        %v882 = vunpack.c.l.b16 %v439
        %v883 = vunpack.c.h.b16 %v439
        %v884 = vunpack.c.l.b16 %v440
        %v885 = vunpack.c.h.b16 %v440
        %v886 = vunpack.c.l.b16 %v441
        %v887 = vunpack.c.h.b16 %v441
        %v888 = vunpack.c.l.b16 %v442
        %v889 = vunpack.c.h.b16 %v442
        %v890 = vunpack.c.l.b16 %v443
        %v891 = vunpack.c.h.b16 %v443
        %v892 = vunpack.c.l.b16 %v444
        %v893 = vunpack.c.h.b16 %v444
        %v894 = vunpack.c.l.b16 %v445
        %v895 = vunpack.c.h.b16 %v445
        %v896 = vunpack.c.l.b16 %v446
        %v897 = vunpack.c.h.b16 %v446
        %v898 = vunpack.c.l.b16 %v447
        %v899 = vunpack.c.h.b16 %v447
        %v900 = vunpack.c.l.b16 %v448
        %v901 = vunpack.c.h.b16 %v448
        %v902 = vunpack.c.l.b16 %v449
        %v903 = vunpack.c.h.b16 %v449
        %v904 = vunpack.c.l.b16 %v450
        %v905 = vunpack.c.h.b16 %v450
        %v906 = vunpack.c.l.b16 %v451
        %v907 = vunpack.c.h.b16 %v451
        %v908 = vunpack.c.l.b16 %v452
        %v909 = vunpack.c.h.b16 %v452
        %v910 = vunpack.c.l.b16 %v453
        %v911 = vunpack.c.h.b16 %v453
        %v912 = vunpack.c.l.b16 %v454
        %v913 = vunpack.c.h.b16 %v454
        %v914 = vunpack.c.l.b16 %v455
        %v915 = vunpack.c.h.b16 %v455
        %v916 = vunpack.c.l.b16 %v456
        %v917 = vunpack.c.h.b16 %v456
        %v918 = vunpack.c.l.b16 %v457
        %v919 = vunpack.c.h.b16 %v457
        %v920 = vunpack.c.l.b16 %v458
        %v921 = vunpack.c.h.b16 %v458
        %v922 = vunpack.c.l.b16 %v459
        %v923 = vunpack.c.h.b16 %v459
        %v924 = vunpack.c.l.b16 %v460
        %v925 = vunpack.c.h.b16 %v460
        %v926 = vunpack.c.l.b16 %v461
        %v927 = vunpack.c.h.b16 %v461
        %v928 = vunpack.c.l.b16 %v462
        %v929 = vunpack.c.h.b16 %v462
        %v930 = vunpack.c.l.b16 %v463
        %v931 = vunpack.c.h.b16 %v463
        %v932 = vpack.c.b16 %v692, %v676
        %v933 = vpack.c.b16 %v693, %v677
        %v934 = vpack.c.b16 %v694, %v678
        %v935 = vpack.c.b16 %v695, %v679
        %v936 = vpack.c.b16 %v696, %v680
        %v937 = vpack.c.b16 %v697, %v681
        %v938 = vpack.c.b16 %v698, %v682
        %v939 = vpack.c.b16 %v699, %v683
        %v940 = vpack.c.b16 %v700, %v684
        %v941 = vpack.c.b16 %v701, %v685
        %v942 = vpack.c.b16 %v702, %v686
        %v943 = vpack.c.b16 %v703, %v687
        %v944 = vpack.c.b16 %v704, %v688
        %v945 = vpack.c.b16 %v705, %v689
        %v946 = vpack.c.b16 %v706, %v690
        %v947 = vpack.c.b16 %v707, %v691
        %v948 = vpack.c.b16 %v724, %v708
        %v949 = vpack.c.b16 %v725, %v709
        %v950 = vpack.c.b16 %v726, %v710
        %v951 = vpack.c.b16 %v727, %v711
        %v952 = vpack.c.b16 %v728, %v712
        %v953 = vpack.c.b16 %v729, %v713
        %v954 = vpack.c.b16 %v730, %v714
        %v955 = vpack.c.b16 %v731, %v715
        %v956 = vpack.c.b16 %v732, %v716
        %v957 = vpack.c.b16 %v733, %v717
        %v958 = vpack.c.b16 %v734, %v718
        %v959 = vpack.c.b16 %v735, %v719
        %v960 = vpack.c.b16 %v736, %v720
        %v961 = vpack.c.b16 %v737, %v721
        %v962 = vpack.c.b16 %v738, %v722
        %v963 = vpack.c.b16 %v739, %v723
        %v964 = vpack.c.b16 %v756, %v740
        %v965 = vpack.c.b16 %v757, %v741
        %v966 = vpack.c.b16 %v758, %v742
        %v967 = vpack.c.b16 %v759, %v743
        %v968 = vpack.c.b16 %v760, %v744
        %v969 = vpack.c.b16 %v761, %v745
        %v970 = vpack.c.b16 %v762, %v746
        %v971 = vpack.c.b16 %v763, %v747
        %v972 = vpack.c.b16 %v764, %v748
        %v973 = vpack.c.b16 %v765, %v749
        %v974 = vpack.c.b16 %v766, %v750
        %v975 = vpack.c.b16 %v767, %v751
        %v976 = vpack.c.b16 %v768, %v752
        %v977 = vpack.c.b16 %v769, %v753
        %v978 = vpack.c.b16 %v770, %v754
        %v979 = vpack.c.b16 %v771, %v755
        %v980 = vpack.c.b16 %v788, %v772
        %v981 = vpack.c.b16 %v789, %v773
        %v982 = vpack.c.b16 %v790, %v774
        %v983 = vpack.c.b16 %v791, %v775
        %v984 = vpack.c.b16 %v792, %v776
        %v985 = vpack.c.b16 %v793, %v777
        %v986 = vpack.c.b16 %v794, %v778
        %v987 = vpack.c.b16 %v795, %v779
        %v988 = vpack.c.b16 %v796, %v780
        %v989 = vpack.c.b16 %v797, %v781
        %v990 = vpack.c.b16 %v798, %v782
        %v991 = vpack.c.b16 %v799, %v783
        %v992 = vpack.c.b16 %v800, %v784
        %v993 = vpack.c.b16 %v801, %v785
        %v994 = vpack.c.b16 %v802, %v786
        %v995 = vpack.c.b16 %v803, %v787
        %v996 = vpack.c.b16 %v820, %v804
        %v997 = vpack.c.b16 %v821, %v805
        %v998 = vpack.c.b16 %v822, %v806
        %v999 = vpack.c.b16 %v823, %v807
        %v1000 = vpack.c.b16 %v824, %v808
        %v1001 = vpack.c.b16 %v825, %v809
        %v1002 = vpack.c.b16 %v826, %v810
        %v1003 = vpack.c.b16 %v827, %v811
        %v1004 = vpack.c.b16 %v828, %v812
        %v1005 = vpack.c.b16 %v829, %v813
        %v1006 = vpack.c.b16 %v830, %v814
        %v1007 = vpack.c.b16 %v831, %v815
        %v1008 = vpack.c.b16 %v832, %v816
        %v1009 = vpack.c.b16 %v833, %v817
        %v1010 = vpack.c.b16 %v834, %v818
        %v1011 = vpack.c.b16 %v835, %v819
        %v1012 = vpack.c.b16 %v852, %v836
        %v1013 = vpack.c.b16 %v853, %v837
        %v1014 = vpack.c.b16 %v854, %v838
        %v1015 = vpack.c.b16 %v855, %v839
        %v1016 = vpack.c.b16 %v856, %v840
        %v1017 = vpack.c.b16 %v857, %v841
        %v1018 = vpack.c.b16 %v858, %v842
        %v1019 = vpack.c.b16 %v859, %v843
        %v1020 = vpack.c.b16 %v860, %v844
        %v1021 = vpack.c.b16 %v861, %v845
        %v1022 = vpack.c.b16 %v862, %v846
        %v1023 = vpack.c.b16 %v863, %v847
        %v1024 = vpack.c.b16 %v864, %v848
        %v1025 = vpack.c.b16 %v865, %v849
        %v1026 = vpack.c.b16 %v866, %v850
        %v1027 = vpack.c.b16 %v867, %v851
        %v1028 = vpack.c.b16 %v884, %v868
        %v1029 = vpack.c.b16 %v885, %v869
        %v1030 = vpack.c.b16 %v886, %v870
        %v1031 = vpack.c.b16 %v887, %v871
        %v1032 = vpack.c.b16 %v888, %v872
        %v1033 = vpack.c.b16 %v889, %v873
        %v1034 = vpack.c.b16 %v890, %v874
        %v1035 = vpack.c.b16 %v891, %v875
        %v1036 = vpack.c.b16 %v892, %v876
        %v1037 = vpack.c.b16 %v893, %v877
        %v1038 = vpack.c.b16 %v894, %v878
        %v1039 = vpack.c.b16 %v895, %v879
        %v1040 = vpack.c.b16 %v896, %v880
        %v1041 = vpack.c.b16 %v897, %v881
        %v1042 = vpack.c.b16 %v898, %v882
        %v1043 = vpack.c.b16 %v899, %v883
        %v1044 = vpack.c.b16 %v916, %v900
        %v1045 = vpack.c.b16 %v917, %v901
        %v1046 = vpack.c.b16 %v918, %v902
        %v1047 = vpack.c.b16 %v919, %v903
        %v1048 = vpack.c.b16 %v920, %v904
        %v1049 = vpack.c.b16 %v921, %v905
        %v1050 = vpack.c.b16 %v922, %v906
        %v1051 = vpack.c.b16 %v923, %v907
        %v1052 = vpack.c.b16 %v924, %v908
        %v1053 = vpack.c.b16 %v925, %v909
        %v1054 = vpack.c.b16 %v926, %v910
        %v1055 = vpack.c.b16 %v927, %v911
        %v1056 = vpack.c.b16 %v928, %v912
        %v1057 = vpack.c.b16 %v929, %v913
        %v1058 = vpack.c.b16 %v930, %v914
        %v1059 = vpack.c.b16 %v931, %v915
        %1188 = vmatprep.subr.bf16.mxu0 %v1045
        %1189 = vmatpush1.bf16.msra.mxu0 %v1044
        %1190 = vmatprep.subr.bf16.mxu0 %v1029
        %1191 = vmatpush1.bf16.msra.mxu0 %v1028
        %1192 = vmatprep.subr.bf16.mxu0 %v1013
        %1193 = vmatpush1.bf16.msra.mxu0 %v1012
        %1194 = vmatprep.subr.bf16.mxu0 %v997
        %1195 = vmatpush1.bf16.msra.mxu0 %v996
        %1196 = vmatprep.subr.bf16.mxu0 %v981
        %1197 = vmatpush1.bf16.msra.mxu0 %v980
        %1198 = vmatprep.subr.bf16.mxu0 %v965
        %1199 = vmatpush1.bf16.msra.mxu0 %v964
        %1200 = vmatprep.subr.bf16.mxu0 %v949
        %1201 = vmatpush1.bf16.msra.mxu0 %v948
        %1202 = vmatprep.subr.bf16.mxu0 %v933
        %1203 = vmatpush1.bf16.msra.mxu0 %v932
        %1204 = vmatprep.subr.bf16.mxu0 0
        %1205 = vmatpush2.bf16.msra.mxu0 0
        %1206 = vmatprep.subr.bf16.mxu0 0
        %1207 = vmatpush2.bf16.msra.mxu0 0
        %1208 = vmatprep.subr.bf16.mxu0 0
        %1209 = vmatpush2.bf16.msra.mxu0 0
        %1210 = vmatprep.subr.bf16.mxu0 0
        %1211 = vmatpush2.bf16.msra.mxu0 0
        %1212 = vmatprep.subr.bf16.mxu0 0
        %1213 = vmatpush2.bf16.msra.mxu0 0
        %1214 = vmatprep.subr.bf16.mxu0 0
        %1215 = vmatpush2.bf16.msra.mxu0 0
        %1216 = vmatprep.subr.bf16.mxu0 0
        %1217 = vmatpush2.bf16.msra.mxu0 0
        %1218 = vmatprep.subr.bf16.mxu0 0
        %1219 = vmatpush2.bf16.msra.mxu0 0
        %1220 = vmatprep.mubr.bf16.mxu0 0
        %1221 = vmatmul.mubr.bf16.gmra.mxu0 %v320
        %v1222 = vpop.f32.mrf.mxu0
        %v1223 = vadd.f32 %v471, %v1222
        %v1224 = vpop.f32.mrf.mxu0
        %v1225 = vadd.f32 %v475, %v1224
        %v1226 = vpop.f32.mrf.mxu0
        %v1227 = vadd.f32 %v471, %v1226
        %v1228 = vpop.f32.mrf.mxu0
        %v1229 = vadd.f32 %v475, %v1228
        %1230 = vmatprep.mubr.bf16.mxu0 0
        %1231 = vmatmul.mubr.bf16.gmra.mxu0 %v321
        %v1232 = vpop.f32.mrf.mxu0
        %v1233 = vadd.f32 %v471, %v1232
        %v1234 = vpop.f32.mrf.mxu0
        %v1235 = vadd.f32 %v475, %v1234
        %v1236 = vpop.f32.mrf.mxu0
        %v1237 = vadd.f32 %v471, %v1236
        %v1238 = vpop.f32.mrf.mxu0
        %v1239 = vadd.f32 %v475, %v1238
        %1240 = vmatprep.mubr.bf16.mxu0 0
        %1241 = vmatmul.mubr.bf16.gmra.mxu0 %v322
        %v1242 = vpop.f32.mrf.mxu0
        %v1243 = vadd.f32 %v471, %v1242
        %v1244 = vpop.f32.mrf.mxu0
        %v1245 = vadd.f32 %v475, %v1244
        %v1246 = vpop.f32.mrf.mxu0
        %v1247 = vadd.f32 %v471, %v1246
        %v1248 = vpop.f32.mrf.mxu0
        %v1249 = vadd.f32 %v475, %v1248
        %1250 = vmatprep.mubr.bf16.mxu0 0
        %1251 = vmatmul.mubr.bf16.gmra.mxu0 %v323
        %v1252 = vpop.f32.mrf.mxu0
        %v1253 = vadd.f32 %v471, %v1252
        %v1254 = vpop.f32.mrf.mxu0
        %v1255 = vadd.f32 %v475, %v1254
        %v1256 = vpop.f32.mrf.mxu0
        %v1257 = vadd.f32 %v471, %v1256
        %v1258 = vpop.f32.mrf.mxu0
        %v1259 = vadd.f32 %v475, %v1258
        %1260 = vmatprep.mubr.bf16.mxu0 0
        %1261 = vmatmul.mubr.bf16.gmra.mxu0 %v324
        %v1262 = vpop.f32.mrf.mxu0
        %v1263 = vadd.f32 %v471, %v1262
        %v1264 = vpop.f32.mrf.mxu0
        %v1265 = vadd.f32 %v475, %v1264
        %v1266 = vpop.f32.mrf.mxu0
        %v1267 = vadd.f32 %v471, %v1266
        %v1268 = vpop.f32.mrf.mxu0
        %v1269 = vadd.f32 %v475, %v1268
        %1270 = vmatprep.mubr.bf16.mxu0 0
        %1271 = vmatmul.mubr.bf16.gmra.mxu0 %v325
        %v1272 = vpop.f32.mrf.mxu0
        %v1273 = vadd.f32 %v471, %v1272
        %v1274 = vpop.f32.mrf.mxu0
        %v1275 = vadd.f32 %v475, %v1274
        %v1276 = vpop.f32.mrf.mxu0
        %v1277 = vadd.f32 %v471, %v1276
        %v1278 = vpop.f32.mrf.mxu0
        %v1279 = vadd.f32 %v475, %v1278
        %1280 = vmatprep.mubr.bf16.mxu0 0
        %1281 = vmatmul.mubr.bf16.gmra.mxu0 %v326
        %v1282 = vpop.f32.mrf.mxu0
        %v1283 = vadd.f32 %v471, %v1282
        %v1284 = vpop.f32.mrf.mxu0
        %v1285 = vadd.f32 %v475, %v1284
        %v1286 = vpop.f32.mrf.mxu0
        %v1287 = vadd.f32 %v471, %v1286
        %v1288 = vpop.f32.mrf.mxu0
        %v1289 = vadd.f32 %v475, %v1288
        %1290 = vmatprep.mubr.bf16.mxu0 0
        %1291 = vmatmul.mubr.bf16.gmra.mxu0 %v327
        %v1292 = vpop.f32.mrf.mxu0
        %v1293 = vadd.f32 %v471, %v1292
        %v1294 = vpop.f32.mrf.mxu0
        %v1295 = vadd.f32 %v475, %v1294
        %v1296 = vpop.f32.mrf.mxu0
        %v1297 = vadd.f32 %v471, %v1296
        %v1298 = vpop.f32.mrf.mxu0
        %v1299 = vadd.f32 %v475, %v1298
        %1300 = vmatprep.mubr.bf16.mxu0 0
        %1301 = vmatmul.mubr.bf16.gmra.mxu0 %v328
        %v1302 = vpop.f32.mrf.mxu0
        %v1303 = vadd.f32 %v471, %v1302
        %v1304 = vpop.f32.mrf.mxu0
        %v1305 = vadd.f32 %v475, %v1304
        %v1306 = vpop.f32.mrf.mxu0
        %v1307 = vadd.f32 %v471, %v1306
        %v1308 = vpop.f32.mrf.mxu0
        %v1309 = vadd.f32 %v475, %v1308
        %1310 = vmatprep.mubr.bf16.mxu0 0
        %1311 = vmatmul.mubr.bf16.gmra.mxu0 %v329
        %v1312 = vpop.f32.mrf.mxu0
        %v1313 = vadd.f32 %v471, %v1312
        %v1314 = vpop.f32.mrf.mxu0
        %v1315 = vadd.f32 %v475, %v1314
        %v1316 = vpop.f32.mrf.mxu0
        %v1317 = vadd.f32 %v471, %v1316
        %v1318 = vpop.f32.mrf.mxu0
        %v1319 = vadd.f32 %v475, %v1318
        %1320 = vmatprep.mubr.bf16.mxu0 0
        %1321 = vmatmul.mubr.bf16.gmra.mxu0 %v330
        %v1322 = vpop.f32.mrf.mxu0
        %v1323 = vadd.f32 %v471, %v1322
        %v1324 = vpop.f32.mrf.mxu0
        %v1325 = vadd.f32 %v475, %v1324
        %v1326 = vpop.f32.mrf.mxu0
        %v1327 = vadd.f32 %v471, %v1326
        %v1328 = vpop.f32.mrf.mxu0
        %v1329 = vadd.f32 %v475, %v1328
        %1330 = vmatprep.mubr.bf16.mxu0 0
        %1331 = vmatmul.mubr.bf16.gmra.mxu0 %v331
        %v1332 = vpop.f32.mrf.mxu0
        %v1333 = vadd.f32 %v471, %v1332
        %v1334 = vpop.f32.mrf.mxu0
        %v1335 = vadd.f32 %v475, %v1334
        %v1336 = vpop.f32.mrf.mxu0
        %v1337 = vadd.f32 %v471, %v1336
        %v1338 = vpop.f32.mrf.mxu0
        %v1339 = vadd.f32 %v475, %v1338
        %1340 = vmatprep.mubr.bf16.mxu0 0
        %1341 = vmatmul.mubr.bf16.gmra.mxu0 %v332
        %v1342 = vpop.f32.mrf.mxu0
        %v1343 = vadd.f32 %v471, %v1342
        %v1344 = vpop.f32.mrf.mxu0
        %v1345 = vadd.f32 %v475, %v1344
        %v1346 = vpop.f32.mrf.mxu0
        %v1347 = vadd.f32 %v471, %v1346
        %v1348 = vpop.f32.mrf.mxu0
        %v1349 = vadd.f32 %v475, %v1348
        %1350 = vmatprep.mubr.bf16.mxu0 0
        %1351 = vmatmul.mubr.bf16.gmra.mxu0 %v333
        %v1352 = vpop.f32.mrf.mxu0
        %v1353 = vadd.f32 %v471, %v1352
        %v1354 = vpop.f32.mrf.mxu0
        %v1355 = vadd.f32 %v475, %v1354
        %v1356 = vpop.f32.mrf.mxu0
        %v1357 = vadd.f32 %v471, %v1356
        %v1358 = vpop.f32.mrf.mxu0
        %v1359 = vadd.f32 %v475, %v1358
        %1360 = vmatprep.mubr.bf16.mxu0 0
        %1361 = vmatmul.mubr.bf16.gmra.mxu0 %v334
        %v1362 = vpop.f32.mrf.mxu0
        %v1363 = vadd.f32 %v471, %v1362
        %v1364 = vpop.f32.mrf.mxu0
        %v1365 = vadd.f32 %v475, %v1364
        %v1366 = vpop.f32.mrf.mxu0
        %v1367 = vadd.f32 %v471, %v1366
        %v1368 = vpop.f32.mrf.mxu0
        %v1369 = vadd.f32 %v475, %v1368
        %1370 = vmatprep.mubr.bf16.mxu0 0
        %1371 = vmatmul.mubr.bf16.gmra.mxu0 %v335
        %v1372 = vpop.f32.mrf.mxu0
        %v1373 = vadd.f32 %v471, %v1372
        %v1374 = vpop.f32.mrf.mxu0
        %v1375 = vadd.f32 %v475, %v1374
        %v1376 = vpop.f32.mrf.mxu0
        %v1377 = vadd.f32 %v471, %v1376
        %v1378 = vpop.f32.mrf.mxu0
        %v1379 = vadd.f32 %v475, %v1378
        %1380 = vdwg.mxu0
        %1381 = vmatprep.subr.bf16.mxu0 %v1047
        %1382 = vmatpush1.bf16.msra.mxu0 %v1046
        %1383 = vmatprep.subr.bf16.mxu0 %v1031
        %1384 = vmatpush1.bf16.msra.mxu0 %v1030
        %1385 = vmatprep.subr.bf16.mxu0 %v1015
        %1386 = vmatpush1.bf16.msra.mxu0 %v1014
        %1387 = vmatprep.subr.bf16.mxu0 %v999
        %1388 = vmatpush1.bf16.msra.mxu0 %v998
        %1389 = vmatprep.subr.bf16.mxu0 %v983
        %1390 = vmatpush1.bf16.msra.mxu0 %v982
        %1391 = vmatprep.subr.bf16.mxu0 %v967
        %1392 = vmatpush1.bf16.msra.mxu0 %v966
        %1393 = vmatprep.subr.bf16.mxu0 %v951
        %1394 = vmatpush1.bf16.msra.mxu0 %v950
        %1395 = vmatprep.subr.bf16.mxu0 %v935
        %1396 = vmatpush1.bf16.msra.mxu0 %v934
        %1397 = vmatprep.subr.bf16.mxu0 0
        %1398 = vmatpush2.bf16.msra.mxu0 0
        %1399 = vmatprep.subr.bf16.mxu0 0
        %1400 = vmatpush2.bf16.msra.mxu0 0
        %1401 = vmatprep.subr.bf16.mxu0 0
        %1402 = vmatpush2.bf16.msra.mxu0 0
        %1403 = vmatprep.subr.bf16.mxu0 0
        %1404 = vmatpush2.bf16.msra.mxu0 0
        %1405 = vmatprep.subr.bf16.mxu0 0
        %1406 = vmatpush2.bf16.msra.mxu0 0
        %1407 = vmatprep.subr.bf16.mxu0 0
        %1408 = vmatpush2.bf16.msra.mxu0 0
        %1409 = vmatprep.subr.bf16.mxu0 0
        %1410 = vmatpush2.bf16.msra.mxu0 0
        %1411 = vmatprep.subr.bf16.mxu0 0
        %1412 = vmatpush2.bf16.msra.mxu0 0
        %1413 = vmatprep.mubr.bf16.mxu0 0
        %1414 = vmatmul.mubr.bf16.gmra.mxu0 %v320
        %v1415 = vpop.f32.mrf.mxu0
        %v1416 = vadd.f32 %v479, %v1415
        %v1417 = vpop.f32.mrf.mxu0
        %v1418 = vadd.f32 %v483, %v1417
        %v1419 = vpop.f32.mrf.mxu0
        %v1420 = vadd.f32 %v479, %v1419
        %v1421 = vpop.f32.mrf.mxu0
        %v1422 = vadd.f32 %v483, %v1421
        %1423 = vmatprep.mubr.bf16.mxu0 0
        %1424 = vmatmul.mubr.bf16.gmra.mxu0 %v321
        %v1425 = vpop.f32.mrf.mxu0
        %v1426 = vadd.f32 %v479, %v1425
        %v1427 = vpop.f32.mrf.mxu0
        %v1428 = vadd.f32 %v483, %v1427
        %v1429 = vpop.f32.mrf.mxu0
        %v1430 = vadd.f32 %v479, %v1429
        %v1431 = vpop.f32.mrf.mxu0
        %v1432 = vadd.f32 %v483, %v1431
        %1433 = vmatprep.mubr.bf16.mxu0 0
        %1434 = vmatmul.mubr.bf16.gmra.mxu0 %v322
        %v1435 = vpop.f32.mrf.mxu0
        %v1436 = vadd.f32 %v479, %v1435
        %v1437 = vpop.f32.mrf.mxu0
        %v1438 = vadd.f32 %v483, %v1437
        %v1439 = vpop.f32.mrf.mxu0
        %v1440 = vadd.f32 %v479, %v1439
        %v1441 = vpop.f32.mrf.mxu0
        %v1442 = vadd.f32 %v483, %v1441
        %1443 = vmatprep.mubr.bf16.mxu0 0
        %1444 = vmatmul.mubr.bf16.gmra.mxu0 %v323
        %v1445 = vpop.f32.mrf.mxu0
        %v1446 = vadd.f32 %v479, %v1445
        %v1447 = vpop.f32.mrf.mxu0
        %v1448 = vadd.f32 %v483, %v1447
        %v1449 = vpop.f32.mrf.mxu0
        %v1450 = vadd.f32 %v479, %v1449
        %v1451 = vpop.f32.mrf.mxu0
        %v1452 = vadd.f32 %v483, %v1451
        %1453 = vmatprep.mubr.bf16.mxu0 0
        %1454 = vmatmul.mubr.bf16.gmra.mxu0 %v324
        %v1455 = vpop.f32.mrf.mxu0
        %v1456 = vadd.f32 %v479, %v1455
        %v1457 = vpop.f32.mrf.mxu0
        %v1458 = vadd.f32 %v483, %v1457
        %v1459 = vpop.f32.mrf.mxu0
        %v1460 = vadd.f32 %v479, %v1459
        %v1461 = vpop.f32.mrf.mxu0
        %v1462 = vadd.f32 %v483, %v1461
        %1463 = vmatprep.mubr.bf16.mxu0 0
        %1464 = vmatmul.mubr.bf16.gmra.mxu0 %v325
        %v1465 = vpop.f32.mrf.mxu0
        %v1466 = vadd.f32 %v479, %v1465
        %v1467 = vpop.f32.mrf.mxu0
        %v1468 = vadd.f32 %v483, %v1467
        %v1469 = vpop.f32.mrf.mxu0
        %v1470 = vadd.f32 %v479, %v1469
        %v1471 = vpop.f32.mrf.mxu0
        %v1472 = vadd.f32 %v483, %v1471
        %1473 = vmatprep.mubr.bf16.mxu0 0
        %1474 = vmatmul.mubr.bf16.gmra.mxu0 %v326
        %v1475 = vpop.f32.mrf.mxu0
        %v1476 = vadd.f32 %v479, %v1475
        %v1477 = vpop.f32.mrf.mxu0
        %v1478 = vadd.f32 %v483, %v1477
        %v1479 = vpop.f32.mrf.mxu0
        %v1480 = vadd.f32 %v479, %v1479
        %v1481 = vpop.f32.mrf.mxu0
        %v1482 = vadd.f32 %v483, %v1481
        %1483 = vmatprep.mubr.bf16.mxu0 0
        %1484 = vmatmul.mubr.bf16.gmra.mxu0 %v327
        %v1485 = vpop.f32.mrf.mxu0
        %v1486 = vadd.f32 %v479, %v1485
        %v1487 = vpop.f32.mrf.mxu0
        %v1488 = vadd.f32 %v483, %v1487
        %v1489 = vpop.f32.mrf.mxu0
        %v1490 = vadd.f32 %v479, %v1489
        %v1491 = vpop.f32.mrf.mxu0
        %v1492 = vadd.f32 %v483, %v1491
        %1493 = vmatprep.mubr.bf16.mxu0 0
        %1494 = vmatmul.mubr.bf16.gmra.mxu0 %v328
        %v1495 = vpop.f32.mrf.mxu0
        %v1496 = vadd.f32 %v479, %v1495
        %v1497 = vpop.f32.mrf.mxu0
        %v1498 = vadd.f32 %v483, %v1497
        %v1499 = vpop.f32.mrf.mxu0
        %v1500 = vadd.f32 %v479, %v1499
        %v1501 = vpop.f32.mrf.mxu0
        %v1502 = vadd.f32 %v483, %v1501
        %1503 = vmatprep.mubr.bf16.mxu0 0
        %1504 = vmatmul.mubr.bf16.gmra.mxu0 %v329
        %v1505 = vpop.f32.mrf.mxu0
        %v1506 = vadd.f32 %v479, %v1505
        %v1507 = vpop.f32.mrf.mxu0
        %v1508 = vadd.f32 %v483, %v1507
        %v1509 = vpop.f32.mrf.mxu0
        %v1510 = vadd.f32 %v479, %v1509
        %v1511 = vpop.f32.mrf.mxu0
        %v1512 = vadd.f32 %v483, %v1511
        %1513 = vmatprep.mubr.bf16.mxu0 0
        %1514 = vmatmul.mubr.bf16.gmra.mxu0 %v330
        %v1515 = vpop.f32.mrf.mxu0
        %v1516 = vadd.f32 %v479, %v1515
        %v1517 = vpop.f32.mrf.mxu0
        %v1518 = vadd.f32 %v483, %v1517
        %v1519 = vpop.f32.mrf.mxu0
        %v1520 = vadd.f32 %v479, %v1519
        %v1521 = vpop.f32.mrf.mxu0
        %v1522 = vadd.f32 %v483, %v1521
        %1523 = vmatprep.mubr.bf16.mxu0 0
        %1524 = vmatmul.mubr.bf16.gmra.mxu0 %v331
        %v1525 = vpop.f32.mrf.mxu0
        %v1526 = vadd.f32 %v479, %v1525
        %v1527 = vpop.f32.mrf.mxu0
        %v1528 = vadd.f32 %v483, %v1527
        %v1529 = vpop.f32.mrf.mxu0
        %v1530 = vadd.f32 %v479, %v1529
        %v1531 = vpop.f32.mrf.mxu0
        %v1532 = vadd.f32 %v483, %v1531
        %1533 = vmatprep.mubr.bf16.mxu0 0
        %1534 = vmatmul.mubr.bf16.gmra.mxu0 %v332
        %v1535 = vpop.f32.mrf.mxu0
        %v1536 = vadd.f32 %v479, %v1535
        %v1537 = vpop.f32.mrf.mxu0
        %v1538 = vadd.f32 %v483, %v1537
        %v1539 = vpop.f32.mrf.mxu0
        %v1540 = vadd.f32 %v479, %v1539
        %v1541 = vpop.f32.mrf.mxu0
        %v1542 = vadd.f32 %v483, %v1541
        %1543 = vmatprep.mubr.bf16.mxu0 0
        %1544 = vmatmul.mubr.bf16.gmra.mxu0 %v333
        %v1545 = vpop.f32.mrf.mxu0
        %v1546 = vadd.f32 %v479, %v1545
        %v1547 = vpop.f32.mrf.mxu0
        %v1548 = vadd.f32 %v483, %v1547
        %v1549 = vpop.f32.mrf.mxu0
        %v1550 = vadd.f32 %v479, %v1549
        %v1551 = vpop.f32.mrf.mxu0
        %v1552 = vadd.f32 %v483, %v1551
        %1553 = vmatprep.mubr.bf16.mxu0 0
        %1554 = vmatmul.mubr.bf16.gmra.mxu0 %v334
        %v1555 = vpop.f32.mrf.mxu0
        %v1556 = vadd.f32 %v479, %v1555
        %v1557 = vpop.f32.mrf.mxu0
        %v1558 = vadd.f32 %v483, %v1557
        %v1559 = vpop.f32.mrf.mxu0
        %v1560 = vadd.f32 %v479, %v1559
        %v1561 = vpop.f32.mrf.mxu0
        %v1562 = vadd.f32 %v483, %v1561
        %1563 = vmatprep.mubr.bf16.mxu0 0
        %1564 = vmatmul.mubr.bf16.gmra.mxu0 %v335
        %v1565 = vpop.f32.mrf.mxu0
        %v1566 = vadd.f32 %v479, %v1565
        %v1567 = vpop.f32.mrf.mxu0
        %v1568 = vadd.f32 %v483, %v1567
        %v1569 = vpop.f32.mrf.mxu0
        %v1570 = vadd.f32 %v479, %v1569
        %v1571 = vpop.f32.mrf.mxu0
        %v1572 = vadd.f32 %v483, %v1571
        %1573 = vdwg.mxu0
        %1574 = vmatprep.subr.bf16.mxu0 %v1049
        %1575 = vmatpush1.bf16.msra.mxu0 %v1048
        %1576 = vmatprep.subr.bf16.mxu0 %v1033
        %1577 = vmatpush1.bf16.msra.mxu0 %v1032
        %1578 = vmatprep.subr.bf16.mxu0 %v1017
        %1579 = vmatpush1.bf16.msra.mxu0 %v1016
        %1580 = vmatprep.subr.bf16.mxu0 %v1001
        %1581 = vmatpush1.bf16.msra.mxu0 %v1000
        %1582 = vmatprep.subr.bf16.mxu0 %v985
        %1583 = vmatpush1.bf16.msra.mxu0 %v984
        %1584 = vmatprep.subr.bf16.mxu0 %v969
        %1585 = vmatpush1.bf16.msra.mxu0 %v968
        %1586 = vmatprep.subr.bf16.mxu0 %v953
        %1587 = vmatpush1.bf16.msra.mxu0 %v952
        %1588 = vmatprep.subr.bf16.mxu0 %v937
        %1589 = vmatpush1.bf16.msra.mxu0 %v936
        %1590 = vmatprep.subr.bf16.mxu0 0
        %1591 = vmatpush2.bf16.msra.mxu0 0
        %1592 = vmatprep.subr.bf16.mxu0 0
        %1593 = vmatpush2.bf16.msra.mxu0 0
        %1594 = vmatprep.subr.bf16.mxu0 0
        %1595 = vmatpush2.bf16.msra.mxu0 0
        %1596 = vmatprep.subr.bf16.mxu0 0
        %1597 = vmatpush2.bf16.msra.mxu0 0
        %1598 = vmatprep.subr.bf16.mxu0 0
        %1599 = vmatpush2.bf16.msra.mxu0 0
        %1600 = vmatprep.subr.bf16.mxu0 0
        %1601 = vmatpush2.bf16.msra.mxu0 0
        %1602 = vmatprep.subr.bf16.mxu0 0
        %1603 = vmatpush2.bf16.msra.mxu0 0
        %1604 = vmatprep.subr.bf16.mxu0 0
        %1605 = vmatpush2.bf16.msra.mxu0 0
        %1606 = vmatprep.mubr.bf16.mxu0 0
        %1607 = vmatmul.mubr.bf16.gmra.mxu0 %v320
        %v1608 = vpop.f32.mrf.mxu0
        %v1609 = vadd.f32 %v487, %v1608
        %v1610 = vpop.f32.mrf.mxu0
        %v1611 = vadd.f32 %v491, %v1610
        %v1612 = vpop.f32.mrf.mxu0
        %v1613 = vadd.f32 %v487, %v1612
        %v1614 = vpop.f32.mrf.mxu0
        %v1615 = vadd.f32 %v491, %v1614
        %1616 = vmatprep.mubr.bf16.mxu0 0
        %1617 = vmatmul.mubr.bf16.gmra.mxu0 %v321
        %v1618 = vpop.f32.mrf.mxu0
        %v1619 = vadd.f32 %v487, %v1618
        %v1620 = vpop.f32.mrf.mxu0
        %v1621 = vadd.f32 %v491, %v1620
        %v1622 = vpop.f32.mrf.mxu0
        %v1623 = vadd.f32 %v487, %v1622
        %v1624 = vpop.f32.mrf.mxu0
        %v1625 = vadd.f32 %v491, %v1624
        %1626 = vmatprep.mubr.bf16.mxu0 0
        %1627 = vmatmul.mubr.bf16.gmra.mxu0 %v322
        %v1628 = vpop.f32.mrf.mxu0
        %v1629 = vadd.f32 %v487, %v1628
        %v1630 = vpop.f32.mrf.mxu0
        %v1631 = vadd.f32 %v491, %v1630
        %v1632 = vpop.f32.mrf.mxu0
        %v1633 = vadd.f32 %v487, %v1632
        %v1634 = vpop.f32.mrf.mxu0
        %v1635 = vadd.f32 %v491, %v1634
        %1636 = vmatprep.mubr.bf16.mxu0 0
        %1637 = vmatmul.mubr.bf16.gmra.mxu0 %v323
        %v1638 = vpop.f32.mrf.mxu0
        %v1639 = vadd.f32 %v487, %v1638
        %v1640 = vpop.f32.mrf.mxu0
        %v1641 = vadd.f32 %v491, %v1640
        %v1642 = vpop.f32.mrf.mxu0
        %v1643 = vadd.f32 %v487, %v1642
        %v1644 = vpop.f32.mrf.mxu0
        %v1645 = vadd.f32 %v491, %v1644
        %1646 = vmatprep.mubr.bf16.mxu0 0
        %1647 = vmatmul.mubr.bf16.gmra.mxu0 %v324
        %v1648 = vpop.f32.mrf.mxu0
        %v1649 = vadd.f32 %v487, %v1648
        %v1650 = vpop.f32.mrf.mxu0
        %v1651 = vadd.f32 %v491, %v1650
        %v1652 = vpop.f32.mrf.mxu0
        %v1653 = vadd.f32 %v487, %v1652
        %v1654 = vpop.f32.mrf.mxu0
        %v1655 = vadd.f32 %v491, %v1654
        %1656 = vmatprep.mubr.bf16.mxu0 0
        %1657 = vmatmul.mubr.bf16.gmra.mxu0 %v325
        %v1658 = vpop.f32.mrf.mxu0
        %v1659 = vadd.f32 %v487, %v1658
        %v1660 = vpop.f32.mrf.mxu0
        %v1661 = vadd.f32 %v491, %v1660
        %v1662 = vpop.f32.mrf.mxu0
        %v1663 = vadd.f32 %v487, %v1662
        %v1664 = vpop.f32.mrf.mxu0
        %v1665 = vadd.f32 %v491, %v1664
        %1666 = vmatprep.mubr.bf16.mxu0 0
        %1667 = vmatmul.mubr.bf16.gmra.mxu0 %v326
        %v1668 = vpop.f32.mrf.mxu0
        %v1669 = vadd.f32 %v487, %v1668
        %v1670 = vpop.f32.mrf.mxu0
        %v1671 = vadd.f32 %v491, %v1670
        %v1672 = vpop.f32.mrf.mxu0
        %v1673 = vadd.f32 %v487, %v1672
        %v1674 = vpop.f32.mrf.mxu0
        %v1675 = vadd.f32 %v491, %v1674
        %1676 = vmatprep.mubr.bf16.mxu0 0
        %1677 = vmatmul.mubr.bf16.gmra.mxu0 %v327
        %v1678 = vpop.f32.mrf.mxu0
        %v1679 = vadd.f32 %v487, %v1678
        %v1680 = vpop.f32.mrf.mxu0
        %v1681 = vadd.f32 %v491, %v1680
        %v1682 = vpop.f32.mrf.mxu0
        %v1683 = vadd.f32 %v487, %v1682
        %v1684 = vpop.f32.mrf.mxu0
        %v1685 = vadd.f32 %v491, %v1684
        %1686 = vmatprep.mubr.bf16.mxu0 0
        %1687 = vmatmul.mubr.bf16.gmra.mxu0 %v328
        %v1688 = vpop.f32.mrf.mxu0
        %v1689 = vadd.f32 %v487, %v1688
        %v1690 = vpop.f32.mrf.mxu0
        %v1691 = vadd.f32 %v491, %v1690
        %v1692 = vpop.f32.mrf.mxu0
        %v1693 = vadd.f32 %v487, %v1692
        %v1694 = vpop.f32.mrf.mxu0
        %v1695 = vadd.f32 %v491, %v1694
        %1696 = vmatprep.mubr.bf16.mxu0 0
        %1697 = vmatmul.mubr.bf16.gmra.mxu0 %v329
        %v1698 = vpop.f32.mrf.mxu0
        %v1699 = vadd.f32 %v487, %v1698
        %v1700 = vpop.f32.mrf.mxu0
        %v1701 = vadd.f32 %v491, %v1700
        %v1702 = vpop.f32.mrf.mxu0
        %v1703 = vadd.f32 %v487, %v1702
        %v1704 = vpop.f32.mrf.mxu0
        %v1705 = vadd.f32 %v491, %v1704
        %1706 = vmatprep.mubr.bf16.mxu0 0
        %1707 = vmatmul.mubr.bf16.gmra.mxu0 %v330
        %v1708 = vpop.f32.mrf.mxu0
        %v1709 = vadd.f32 %v487, %v1708
        %v1710 = vpop.f32.mrf.mxu0
        %v1711 = vadd.f32 %v491, %v1710
        %v1712 = vpop.f32.mrf.mxu0
        %v1713 = vadd.f32 %v487, %v1712
        %v1714 = vpop.f32.mrf.mxu0
        %v1715 = vadd.f32 %v491, %v1714
        %1716 = vmatprep.mubr.bf16.mxu0 0
        %1717 = vmatmul.mubr.bf16.gmra.mxu0 %v331
        %v1718 = vpop.f32.mrf.mxu0
        %v1719 = vadd.f32 %v487, %v1718
        %v1720 = vpop.f32.mrf.mxu0
        %v1721 = vadd.f32 %v491, %v1720
        %v1722 = vpop.f32.mrf.mxu0
        %v1723 = vadd.f32 %v487, %v1722
        %v1724 = vpop.f32.mrf.mxu0
        %v1725 = vadd.f32 %v491, %v1724
        %1726 = vmatprep.mubr.bf16.mxu0 0
        %1727 = vmatmul.mubr.bf16.gmra.mxu0 %v332
        %v1728 = vpop.f32.mrf.mxu0
        %v1729 = vadd.f32 %v487, %v1728
        %v1730 = vpop.f32.mrf.mxu0
        %v1731 = vadd.f32 %v491, %v1730
        %v1732 = vpop.f32.mrf.mxu0
        %v1733 = vadd.f32 %v487, %v1732
        %v1734 = vpop.f32.mrf.mxu0
        %v1735 = vadd.f32 %v491, %v1734
        %1736 = vmatprep.mubr.bf16.mxu0 0
        %1737 = vmatmul.mubr.bf16.gmra.mxu0 %v333
        %v1738 = vpop.f32.mrf.mxu0
        %v1739 = vadd.f32 %v487, %v1738
        %v1740 = vpop.f32.mrf.mxu0
        %v1741 = vadd.f32 %v491, %v1740
        %v1742 = vpop.f32.mrf.mxu0
        %v1743 = vadd.f32 %v487, %v1742
        %v1744 = vpop.f32.mrf.mxu0
        %v1745 = vadd.f32 %v491, %v1744
        %1746 = vmatprep.mubr.bf16.mxu0 0
        %1747 = vmatmul.mubr.bf16.gmra.mxu0 %v334
        %v1748 = vpop.f32.mrf.mxu0
        %v1749 = vadd.f32 %v487, %v1748
        %v1750 = vpop.f32.mrf.mxu0
        %v1751 = vadd.f32 %v491, %v1750
        %v1752 = vpop.f32.mrf.mxu0
        %v1753 = vadd.f32 %v487, %v1752
        %v1754 = vpop.f32.mrf.mxu0
        %v1755 = vadd.f32 %v491, %v1754
        %1756 = vmatprep.mubr.bf16.mxu0 0
        %1757 = vmatmul.mubr.bf16.gmra.mxu0 %v335
        %v1758 = vpop.f32.mrf.mxu0
        %v1759 = vadd.f32 %v487, %v1758
        %v1760 = vpop.f32.mrf.mxu0
        %v1761 = vadd.f32 %v491, %v1760
        %v1762 = vpop.f32.mrf.mxu0
        %v1763 = vadd.f32 %v487, %v1762
        %v1764 = vpop.f32.mrf.mxu0
        %v1765 = vadd.f32 %v491, %v1764
        %1766 = vdwg.mxu0
        %1767 = vmatprep.subr.bf16.mxu0 %v1051
        %1768 = vmatpush1.bf16.msra.mxu0 %v1050
        %1769 = vmatprep.subr.bf16.mxu0 %v1035
        %1770 = vmatpush1.bf16.msra.mxu0 %v1034
        %1771 = vmatprep.subr.bf16.mxu0 %v1019
        %1772 = vmatpush1.bf16.msra.mxu0 %v1018
        %1773 = vmatprep.subr.bf16.mxu0 %v1003
        %1774 = vmatpush1.bf16.msra.mxu0 %v1002
        %1775 = vmatprep.subr.bf16.mxu0 %v987
        %1776 = vmatpush1.bf16.msra.mxu0 %v986
        %1777 = vmatprep.subr.bf16.mxu0 %v971
        %1778 = vmatpush1.bf16.msra.mxu0 %v970
        %1779 = vmatprep.subr.bf16.mxu0 %v955
        %1780 = vmatpush1.bf16.msra.mxu0 %v954
        %1781 = vmatprep.subr.bf16.mxu0 %v939
        %1782 = vmatpush1.bf16.msra.mxu0 %v938
        %1783 = vmatprep.subr.bf16.mxu0 0
        %1784 = vmatpush2.bf16.msra.mxu0 0
        %1785 = vmatprep.subr.bf16.mxu0 0
        %1786 = vmatpush2.bf16.msra.mxu0 0
        %1787 = vmatprep.subr.bf16.mxu0 0
        %1788 = vmatpush2.bf16.msra.mxu0 0
        %1789 = vmatprep.subr.bf16.mxu0 0
        %1790 = vmatpush2.bf16.msra.mxu0 0
        %1791 = vmatprep.subr.bf16.mxu0 0
        %1792 = vmatpush2.bf16.msra.mxu0 0
        %1793 = vmatprep.subr.bf16.mxu0 0
        %1794 = vmatpush2.bf16.msra.mxu0 0
        %1795 = vmatprep.subr.bf16.mxu0 0
        %1796 = vmatpush2.bf16.msra.mxu0 0
        %1797 = vmatprep.subr.bf16.mxu0 0
        %1798 = vmatpush2.bf16.msra.mxu0 0
        %1799 = vmatprep.mubr.bf16.mxu0 0
        %1800 = vmatmul.mubr.bf16.gmra.mxu0 %v320
        %v1801 = vpop.f32.mrf.mxu0
        %v1802 = vadd.f32 %v495, %v1801
        %v1803 = vpop.f32.mrf.mxu0
        %v1804 = vadd.f32 %v499, %v1803
        %v1805 = vpop.f32.mrf.mxu0
        %v1806 = vadd.f32 %v495, %v1805
        %v1807 = vpop.f32.mrf.mxu0
        %v1808 = vadd.f32 %v499, %v1807
        %1809 = vmatprep.mubr.bf16.mxu0 0
        %1810 = vmatmul.mubr.bf16.gmra.mxu0 %v321
        %v1811 = vpop.f32.mrf.mxu0
        %v1812 = vadd.f32 %v495, %v1811
        %v1813 = vpop.f32.mrf.mxu0
        %v1814 = vadd.f32 %v499, %v1813
        %v1815 = vpop.f32.mrf.mxu0
        %v1816 = vadd.f32 %v495, %v1815
        %v1817 = vpop.f32.mrf.mxu0
        %v1818 = vadd.f32 %v499, %v1817
        %1819 = vmatprep.mubr.bf16.mxu0 0
        %1820 = vmatmul.mubr.bf16.gmra.mxu0 %v322
        %v1821 = vpop.f32.mrf.mxu0
        %v1822 = vadd.f32 %v495, %v1821
        %v1823 = vpop.f32.mrf.mxu0
        %v1824 = vadd.f32 %v499, %v1823
        %v1825 = vpop.f32.mrf.mxu0
        %v1826 = vadd.f32 %v495, %v1825
        %v1827 = vpop.f32.mrf.mxu0
        %v1828 = vadd.f32 %v499, %v1827
        %1829 = vmatprep.mubr.bf16.mxu0 0
        %1830 = vmatmul.mubr.bf16.gmra.mxu0 %v323
        %v1831 = vpop.f32.mrf.mxu0
        %v1832 = vadd.f32 %v495, %v1831
        %v1833 = vpop.f32.mrf.mxu0
        %v1834 = vadd.f32 %v499, %v1833
        %v1835 = vpop.f32.mrf.mxu0
        %v1836 = vadd.f32 %v495, %v1835
        %v1837 = vpop.f32.mrf.mxu0
        %v1838 = vadd.f32 %v499, %v1837
        %1839 = vmatprep.mubr.bf16.mxu0 0
        %1840 = vmatmul.mubr.bf16.gmra.mxu0 %v324
        %v1841 = vpop.f32.mrf.mxu0
        %v1842 = vadd.f32 %v495, %v1841
        %v1843 = vpop.f32.mrf.mxu0
        %v1844 = vadd.f32 %v499, %v1843
        %v1845 = vpop.f32.mrf.mxu0
        %v1846 = vadd.f32 %v495, %v1845
        %v1847 = vpop.f32.mrf.mxu0
        %v1848 = vadd.f32 %v499, %v1847
        %1849 = vmatprep.mubr.bf16.mxu0 0
        %1850 = vmatmul.mubr.bf16.gmra.mxu0 %v325
        %v1851 = vpop.f32.mrf.mxu0
        %v1852 = vadd.f32 %v495, %v1851
        %v1853 = vpop.f32.mrf.mxu0
        %v1854 = vadd.f32 %v499, %v1853
        %v1855 = vpop.f32.mrf.mxu0
        %v1856 = vadd.f32 %v495, %v1855
        %v1857 = vpop.f32.mrf.mxu0
        %v1858 = vadd.f32 %v499, %v1857
        %1859 = vmatprep.mubr.bf16.mxu0 0
        %1860 = vmatmul.mubr.bf16.gmra.mxu0 %v326
        %v1861 = vpop.f32.mrf.mxu0
        %v1862 = vadd.f32 %v495, %v1861
        %v1863 = vpop.f32.mrf.mxu0
        %v1864 = vadd.f32 %v499, %v1863
        %v1865 = vpop.f32.mrf.mxu0
        %v1866 = vadd.f32 %v495, %v1865
        %v1867 = vpop.f32.mrf.mxu0
        %v1868 = vadd.f32 %v499, %v1867
        %1869 = vmatprep.mubr.bf16.mxu0 0
        %1870 = vmatmul.mubr.bf16.gmra.mxu0 %v327
        %v1871 = vpop.f32.mrf.mxu0
        %v1872 = vadd.f32 %v495, %v1871
        %v1873 = vpop.f32.mrf.mxu0
        %v1874 = vadd.f32 %v499, %v1873
        %v1875 = vpop.f32.mrf.mxu0
        %v1876 = vadd.f32 %v495, %v1875
        %v1877 = vpop.f32.mrf.mxu0
        %v1878 = vadd.f32 %v499, %v1877
        %1879 = vmatprep.mubr.bf16.mxu0 0
        %1880 = vmatmul.mubr.bf16.gmra.mxu0 %v328
        %v1881 = vpop.f32.mrf.mxu0
        %v1882 = vadd.f32 %v495, %v1881
        %v1883 = vpop.f32.mrf.mxu0
        %v1884 = vadd.f32 %v499, %v1883
        %v1885 = vpop.f32.mrf.mxu0
        %v1886 = vadd.f32 %v495, %v1885
        %v1887 = vpop.f32.mrf.mxu0
        %v1888 = vadd.f32 %v499, %v1887
        %1889 = vmatprep.mubr.bf16.mxu0 0
        %1890 = vmatmul.mubr.bf16.gmra.mxu0 %v329
        %v1891 = vpop.f32.mrf.mxu0
        %v1892 = vadd.f32 %v495, %v1891
        %v1893 = vpop.f32.mrf.mxu0
        %v1894 = vadd.f32 %v499, %v1893
        %v1895 = vpop.f32.mrf.mxu0
        %v1896 = vadd.f32 %v495, %v1895
        %v1897 = vpop.f32.mrf.mxu0
        %v1898 = vadd.f32 %v499, %v1897
        %1899 = vmatprep.mubr.bf16.mxu0 0
        %1900 = vmatmul.mubr.bf16.gmra.mxu0 %v330
        %v1901 = vpop.f32.mrf.mxu0
        %v1902 = vadd.f32 %v495, %v1901
        %v1903 = vpop.f32.mrf.mxu0
        %v1904 = vadd.f32 %v499, %v1903
        %v1905 = vpop.f32.mrf.mxu0
        %v1906 = vadd.f32 %v495, %v1905
        %v1907 = vpop.f32.mrf.mxu0
        %v1908 = vadd.f32 %v499, %v1907
        %1909 = vmatprep.mubr.bf16.mxu0 0
        %1910 = vmatmul.mubr.bf16.gmra.mxu0 %v331
        %v1911 = vpop.f32.mrf.mxu0
        %v1912 = vadd.f32 %v495, %v1911
        %v1913 = vpop.f32.mrf.mxu0
        %v1914 = vadd.f32 %v499, %v1913
        %v1915 = vpop.f32.mrf.mxu0
        %v1916 = vadd.f32 %v495, %v1915
        %v1917 = vpop.f32.mrf.mxu0
        %v1918 = vadd.f32 %v499, %v1917
        %1919 = vmatprep.mubr.bf16.mxu0 0
        %1920 = vmatmul.mubr.bf16.gmra.mxu0 %v332
        %v1921 = vpop.f32.mrf.mxu0
        %v1922 = vadd.f32 %v495, %v1921
        %v1923 = vpop.f32.mrf.mxu0
        %v1924 = vadd.f32 %v499, %v1923
        %v1925 = vpop.f32.mrf.mxu0
        %v1926 = vadd.f32 %v495, %v1925
        %v1927 = vpop.f32.mrf.mxu0
        %v1928 = vadd.f32 %v499, %v1927
        %1929 = vmatprep.mubr.bf16.mxu0 0
        %1930 = vmatmul.mubr.bf16.gmra.mxu0 %v333
        %v1931 = vpop.f32.mrf.mxu0
        %v1932 = vadd.f32 %v495, %v1931
        %v1933 = vpop.f32.mrf.mxu0
        %v1934 = vadd.f32 %v499, %v1933
        %v1935 = vpop.f32.mrf.mxu0
        %v1936 = vadd.f32 %v495, %v1935
        %v1937 = vpop.f32.mrf.mxu0
        %v1938 = vadd.f32 %v499, %v1937
        %1939 = vmatprep.mubr.bf16.mxu0 0
        %1940 = vmatmul.mubr.bf16.gmra.mxu0 %v334
        %v1941 = vpop.f32.mrf.mxu0
        %v1942 = vadd.f32 %v495, %v1941
        %v1943 = vpop.f32.mrf.mxu0
        %v1944 = vadd.f32 %v499, %v1943
        %v1945 = vpop.f32.mrf.mxu0
        %v1946 = vadd.f32 %v495, %v1945
        %v1947 = vpop.f32.mrf.mxu0
        %v1948 = vadd.f32 %v499, %v1947
        %1949 = vmatprep.mubr.bf16.mxu0 0
        %1950 = vmatmul.mubr.bf16.gmra.mxu0 %v335
        %v1951 = vpop.f32.mrf.mxu0
        %v1952 = vadd.f32 %v495, %v1951
        %v1953 = vpop.f32.mrf.mxu0
        %v1954 = vadd.f32 %v499, %v1953
        %v1955 = vpop.f32.mrf.mxu0
        %v1956 = vadd.f32 %v495, %v1955
        %v1957 = vpop.f32.mrf.mxu0
        %v1958 = vadd.f32 %v499, %v1957
        %1959 = vdwg.mxu0
        %1960 = vmatprep.subr.bf16.mxu0 %v1053
        %1961 = vmatpush1.bf16.msra.mxu0 %v1052
        %1962 = vmatprep.subr.bf16.mxu0 %v1037
        %1963 = vmatpush1.bf16.msra.mxu0 %v1036
        %1964 = vmatprep.subr.bf16.mxu0 %v1021
        %1965 = vmatpush1.bf16.msra.mxu0 %v1020
        %1966 = vmatprep.subr.bf16.mxu0 %v1005
        %1967 = vmatpush1.bf16.msra.mxu0 %v1004
        %1968 = vmatprep.subr.bf16.mxu0 %v989
        %1969 = vmatpush1.bf16.msra.mxu0 %v988
        %1970 = vmatprep.subr.bf16.mxu0 %v973
        %1971 = vmatpush1.bf16.msra.mxu0 %v972
        %1972 = vmatprep.subr.bf16.mxu0 %v957
        %1973 = vmatpush1.bf16.msra.mxu0 %v956
        %1974 = vmatprep.subr.bf16.mxu0 %v941
        %1975 = vmatpush1.bf16.msra.mxu0 %v940
        %1976 = vmatprep.subr.bf16.mxu0 0
        %1977 = vmatpush2.bf16.msra.mxu0 0
        %1978 = vmatprep.subr.bf16.mxu0 0
        %1979 = vmatpush2.bf16.msra.mxu0 0
        %1980 = vmatprep.subr.bf16.mxu0 0
        %1981 = vmatpush2.bf16.msra.mxu0 0
        %1982 = vmatprep.subr.bf16.mxu0 0
        %1983 = vmatpush2.bf16.msra.mxu0 0
        %1984 = vmatprep.subr.bf16.mxu0 0
        %1985 = vmatpush2.bf16.msra.mxu0 0
        %1986 = vmatprep.subr.bf16.mxu0 0
        %1987 = vmatpush2.bf16.msra.mxu0 0
        %1988 = vmatprep.subr.bf16.mxu0 0
        %1989 = vmatpush2.bf16.msra.mxu0 0
        %1990 = vmatprep.subr.bf16.mxu0 0
        %1991 = vmatpush2.bf16.msra.mxu0 0
        %1992 = vmatprep.mubr.bf16.mxu0 0
        %1993 = vmatmul.mubr.bf16.gmra.mxu0 %v320
        %v1994 = vpop.f32.mrf.mxu0
        %v1995 = vadd.f32 %v503, %v1994
        %v1996 = vpop.f32.mrf.mxu0
        %v1997 = vadd.f32 %v507, %v1996
        %v1998 = vpop.f32.mrf.mxu0
        %v1999 = vadd.f32 %v503, %v1998
        %v2000 = vpop.f32.mrf.mxu0
        %v2001 = vadd.f32 %v507, %v2000
        %2002 = vmatprep.mubr.bf16.mxu0 0
        %2003 = vmatmul.mubr.bf16.gmra.mxu0 %v321
        %v2004 = vpop.f32.mrf.mxu0
        %v2005 = vadd.f32 %v503, %v2004
        %v2006 = vpop.f32.mrf.mxu0
        %v2007 = vadd.f32 %v507, %v2006
        %v2008 = vpop.f32.mrf.mxu0
        %v2009 = vadd.f32 %v503, %v2008
        %v2010 = vpop.f32.mrf.mxu0
        %v2011 = vadd.f32 %v507, %v2010
        %2012 = vmatprep.mubr.bf16.mxu0 0
        %2013 = vmatmul.mubr.bf16.gmra.mxu0 %v322
        %v2014 = vpop.f32.mrf.mxu0
        %v2015 = vadd.f32 %v503, %v2014
        %v2016 = vpop.f32.mrf.mxu0
        %v2017 = vadd.f32 %v507, %v2016
        %v2018 = vpop.f32.mrf.mxu0
        %v2019 = vadd.f32 %v503, %v2018
        %v2020 = vpop.f32.mrf.mxu0
        %v2021 = vadd.f32 %v507, %v2020
        %2022 = vmatprep.mubr.bf16.mxu0 0
        %2023 = vmatmul.mubr.bf16.gmra.mxu0 %v323
        %v2024 = vpop.f32.mrf.mxu0
        %v2025 = vadd.f32 %v503, %v2024
        %v2026 = vpop.f32.mrf.mxu0
        %v2027 = vadd.f32 %v507, %v2026
        %v2028 = vpop.f32.mrf.mxu0
        %v2029 = vadd.f32 %v503, %v2028
        %v2030 = vpop.f32.mrf.mxu0
        %v2031 = vadd.f32 %v507, %v2030
        %2032 = vmatprep.mubr.bf16.mxu0 0
        %2033 = vmatmul.mubr.bf16.gmra.mxu0 %v324
        %v2034 = vpop.f32.mrf.mxu0
        %v2035 = vadd.f32 %v503, %v2034
        %v2036 = vpop.f32.mrf.mxu0
        %v2037 = vadd.f32 %v507, %v2036
        %v2038 = vpop.f32.mrf.mxu0
        %v2039 = vadd.f32 %v503, %v2038
        %v2040 = vpop.f32.mrf.mxu0
        %v2041 = vadd.f32 %v507, %v2040
        %2042 = vmatprep.mubr.bf16.mxu0 0
        %2043 = vmatmul.mubr.bf16.gmra.mxu0 %v325
        %v2044 = vpop.f32.mrf.mxu0
        %v2045 = vadd.f32 %v503, %v2044
        %v2046 = vpop.f32.mrf.mxu0
        %v2047 = vadd.f32 %v507, %v2046
        %v2048 = vpop.f32.mrf.mxu0
        %v2049 = vadd.f32 %v503, %v2048
        %v2050 = vpop.f32.mrf.mxu0
        %v2051 = vadd.f32 %v507, %v2050
        %2052 = vmatprep.mubr.bf16.mxu0 0
        %2053 = vmatmul.mubr.bf16.gmra.mxu0 %v326
        %v2054 = vpop.f32.mrf.mxu0
        %v2055 = vadd.f32 %v503, %v2054
        %v2056 = vpop.f32.mrf.mxu0
        %v2057 = vadd.f32 %v507, %v2056
        %v2058 = vpop.f32.mrf.mxu0
        %v2059 = vadd.f32 %v503, %v2058
        %v2060 = vpop.f32.mrf.mxu0
        %v2061 = vadd.f32 %v507, %v2060
        %2062 = vmatprep.mubr.bf16.mxu0 0
        %2063 = vmatmul.mubr.bf16.gmra.mxu0 %v327
        %v2064 = vpop.f32.mrf.mxu0
        %v2065 = vadd.f32 %v503, %v2064
        %v2066 = vpop.f32.mrf.mxu0
        %v2067 = vadd.f32 %v507, %v2066
        %v2068 = vpop.f32.mrf.mxu0
        %v2069 = vadd.f32 %v503, %v2068
        %v2070 = vpop.f32.mrf.mxu0
        %v2071 = vadd.f32 %v507, %v2070
        %2072 = vmatprep.mubr.bf16.mxu0 0
        %2073 = vmatmul.mubr.bf16.gmra.mxu0 %v328
        %v2074 = vpop.f32.mrf.mxu0
        %v2075 = vadd.f32 %v503, %v2074
        %v2076 = vpop.f32.mrf.mxu0
        %v2077 = vadd.f32 %v507, %v2076
        %v2078 = vpop.f32.mrf.mxu0
        %v2079 = vadd.f32 %v503, %v2078
        %v2080 = vpop.f32.mrf.mxu0
        %v2081 = vadd.f32 %v507, %v2080
        %2082 = vmatprep.mubr.bf16.mxu0 0
        %2083 = vmatmul.mubr.bf16.gmra.mxu0 %v329
        %v2084 = vpop.f32.mrf.mxu0
        %v2085 = vadd.f32 %v503, %v2084
        %v2086 = vpop.f32.mrf.mxu0
        %v2087 = vadd.f32 %v507, %v2086
        %v2088 = vpop.f32.mrf.mxu0
        %v2089 = vadd.f32 %v503, %v2088
        %v2090 = vpop.f32.mrf.mxu0
        %v2091 = vadd.f32 %v507, %v2090
        %2092 = vmatprep.mubr.bf16.mxu0 0
        %2093 = vmatmul.mubr.bf16.gmra.mxu0 %v330
        %v2094 = vpop.f32.mrf.mxu0
        %v2095 = vadd.f32 %v503, %v2094
        %v2096 = vpop.f32.mrf.mxu0
        %v2097 = vadd.f32 %v507, %v2096
        %v2098 = vpop.f32.mrf.mxu0
        %v2099 = vadd.f32 %v503, %v2098
        %v2100 = vpop.f32.mrf.mxu0
        %v2101 = vadd.f32 %v507, %v2100
        %2102 = vmatprep.mubr.bf16.mxu0 0
        %2103 = vmatmul.mubr.bf16.gmra.mxu0 %v331
        %v2104 = vpop.f32.mrf.mxu0
        %v2105 = vadd.f32 %v503, %v2104
        %v2106 = vpop.f32.mrf.mxu0
        %v2107 = vadd.f32 %v507, %v2106
        %v2108 = vpop.f32.mrf.mxu0
        %v2109 = vadd.f32 %v503, %v2108
        %v2110 = vpop.f32.mrf.mxu0
        %v2111 = vadd.f32 %v507, %v2110
        %2112 = vmatprep.mubr.bf16.mxu0 0
        %2113 = vmatmul.mubr.bf16.gmra.mxu0 %v332
        %v2114 = vpop.f32.mrf.mxu0
        %v2115 = vadd.f32 %v503, %v2114
        %v2116 = vpop.f32.mrf.mxu0
        %v2117 = vadd.f32 %v507, %v2116
        %v2118 = vpop.f32.mrf.mxu0
        %v2119 = vadd.f32 %v503, %v2118
        %v2120 = vpop.f32.mrf.mxu0
        %v2121 = vadd.f32 %v507, %v2120
        %2122 = vmatprep.mubr.bf16.mxu0 0
        %2123 = vmatmul.mubr.bf16.gmra.mxu0 %v333
        %v2124 = vpop.f32.mrf.mxu0
        %v2125 = vadd.f32 %v503, %v2124
        %v2126 = vpop.f32.mrf.mxu0
        %v2127 = vadd.f32 %v507, %v2126
        %v2128 = vpop.f32.mrf.mxu0
        %v2129 = vadd.f32 %v503, %v2128
        %v2130 = vpop.f32.mrf.mxu0
        %v2131 = vadd.f32 %v507, %v2130
        %2132 = vmatprep.mubr.bf16.mxu0 0
        %2133 = vmatmul.mubr.bf16.gmra.mxu0 %v334
        %v2134 = vpop.f32.mrf.mxu0
        %v2135 = vadd.f32 %v503, %v2134
        %v2136 = vpop.f32.mrf.mxu0
        %v2137 = vadd.f32 %v507, %v2136
        %v2138 = vpop.f32.mrf.mxu0
        %v2139 = vadd.f32 %v503, %v2138
        %v2140 = vpop.f32.mrf.mxu0
        %v2141 = vadd.f32 %v507, %v2140
        %2142 = vmatprep.mubr.bf16.mxu0 0
        %2143 = vmatmul.mubr.bf16.gmra.mxu0 %v335
        %v2144 = vpop.f32.mrf.mxu0
        %v2145 = vadd.f32 %v503, %v2144
        %v2146 = vpop.f32.mrf.mxu0
        %v2147 = vadd.f32 %v507, %v2146
        %v2148 = vpop.f32.mrf.mxu0
        %v2149 = vadd.f32 %v503, %v2148
        %v2150 = vpop.f32.mrf.mxu0
        %v2151 = vadd.f32 %v507, %v2150
        %2152 = vdwg.mxu0
        %2153 = vmatprep.subr.bf16.mxu0 %v1055
        %2154 = vmatpush1.bf16.msra.mxu0 %v1054
        %2155 = vmatprep.subr.bf16.mxu0 %v1039
        %2156 = vmatpush1.bf16.msra.mxu0 %v1038
        %2157 = vmatprep.subr.bf16.mxu0 %v1023
        %2158 = vmatpush1.bf16.msra.mxu0 %v1022
        %2159 = vmatprep.subr.bf16.mxu0 %v1007
        %2160 = vmatpush1.bf16.msra.mxu0 %v1006
        %2161 = vmatprep.subr.bf16.mxu0 %v991
        %2162 = vmatpush1.bf16.msra.mxu0 %v990
        %2163 = vmatprep.subr.bf16.mxu0 %v975
        %2164 = vmatpush1.bf16.msra.mxu0 %v974
        %2165 = vmatprep.subr.bf16.mxu0 %v959
        %2166 = vmatpush1.bf16.msra.mxu0 %v958
        %2167 = vmatprep.subr.bf16.mxu0 %v943
        %2168 = vmatpush1.bf16.msra.mxu0 %v942
        %2169 = vmatprep.subr.bf16.mxu0 0
        %2170 = vmatpush2.bf16.msra.mxu0 0
        %2171 = vmatprep.subr.bf16.mxu0 0
        %2172 = vmatpush2.bf16.msra.mxu0 0
        %2173 = vmatprep.subr.bf16.mxu0 0
        %2174 = vmatpush2.bf16.msra.mxu0 0
        %2175 = vmatprep.subr.bf16.mxu0 0
        %2176 = vmatpush2.bf16.msra.mxu0 0
        %2177 = vmatprep.subr.bf16.mxu0 0
        %2178 = vmatpush2.bf16.msra.mxu0 0
        %2179 = vmatprep.subr.bf16.mxu0 0
        %2180 = vmatpush2.bf16.msra.mxu0 0
        %2181 = vmatprep.subr.bf16.mxu0 0
        %2182 = vmatpush2.bf16.msra.mxu0 0
        %2183 = vmatprep.subr.bf16.mxu0 0
        %2184 = vmatpush2.bf16.msra.mxu0 0
        %2185 = vmatprep.mubr.bf16.mxu0 0
        %2186 = vmatmul.mubr.bf16.gmra.mxu0 %v320
        %v2187 = vpop.f32.mrf.mxu0
        %v2188 = vadd.f32 %v511, %v2187
        %v2189 = vpop.f32.mrf.mxu0
        %v2190 = vadd.f32 %v515, %v2189
        %v2191 = vpop.f32.mrf.mxu0
        %v2192 = vadd.f32 %v511, %v2191
        %v2193 = vpop.f32.mrf.mxu0
        %v2194 = vadd.f32 %v515, %v2193
        %2195 = vmatprep.mubr.bf16.mxu0 0
        %2196 = vmatmul.mubr.bf16.gmra.mxu0 %v321
        %v2197 = vpop.f32.mrf.mxu0
        %v2198 = vadd.f32 %v511, %v2197
        %v2199 = vpop.f32.mrf.mxu0
        %v2200 = vadd.f32 %v515, %v2199
        %v2201 = vpop.f32.mrf.mxu0
        %v2202 = vadd.f32 %v511, %v2201
        %v2203 = vpop.f32.mrf.mxu0
        %v2204 = vadd.f32 %v515, %v2203
        %2205 = vmatprep.mubr.bf16.mxu0 0
        %2206 = vmatmul.mubr.bf16.gmra.mxu0 %v322
        %v2207 = vpop.f32.mrf.mxu0
        %v2208 = vadd.f32 %v511, %v2207
        %v2209 = vpop.f32.mrf.mxu0
        %v2210 = vadd.f32 %v515, %v2209
        %v2211 = vpop.f32.mrf.mxu0
        %v2212 = vadd.f32 %v511, %v2211
        %v2213 = vpop.f32.mrf.mxu0
        %v2214 = vadd.f32 %v515, %v2213
        %2215 = vmatprep.mubr.bf16.mxu0 0
        %2216 = vmatmul.mubr.bf16.gmra.mxu0 %v323
        %v2217 = vpop.f32.mrf.mxu0
        %v2218 = vadd.f32 %v511, %v2217
        %v2219 = vpop.f32.mrf.mxu0
        %v2220 = vadd.f32 %v515, %v2219
        %v2221 = vpop.f32.mrf.mxu0
        %v2222 = vadd.f32 %v511, %v2221
        %v2223 = vpop.f32.mrf.mxu0
        %v2224 = vadd.f32 %v515, %v2223
        %2225 = vmatprep.mubr.bf16.mxu0 0
        %2226 = vmatmul.mubr.bf16.gmra.mxu0 %v324
        %v2227 = vpop.f32.mrf.mxu0
        %v2228 = vadd.f32 %v511, %v2227
        %v2229 = vpop.f32.mrf.mxu0
        %v2230 = vadd.f32 %v515, %v2229
        %v2231 = vpop.f32.mrf.mxu0
        %v2232 = vadd.f32 %v511, %v2231
        %v2233 = vpop.f32.mrf.mxu0
        %v2234 = vadd.f32 %v515, %v2233
        %2235 = vmatprep.mubr.bf16.mxu0 0
        %2236 = vmatmul.mubr.bf16.gmra.mxu0 %v325
        %v2237 = vpop.f32.mrf.mxu0
        %v2238 = vadd.f32 %v511, %v2237
        %v2239 = vpop.f32.mrf.mxu0
        %v2240 = vadd.f32 %v515, %v2239
        %v2241 = vpop.f32.mrf.mxu0
        %v2242 = vadd.f32 %v511, %v2241
        %v2243 = vpop.f32.mrf.mxu0
        %v2244 = vadd.f32 %v515, %v2243
        %2245 = vmatprep.mubr.bf16.mxu0 0
        %2246 = vmatmul.mubr.bf16.gmra.mxu0 %v326
        %v2247 = vpop.f32.mrf.mxu0
        %v2248 = vadd.f32 %v511, %v2247
        %v2249 = vpop.f32.mrf.mxu0
        %v2250 = vadd.f32 %v515, %v2249
        %v2251 = vpop.f32.mrf.mxu0
        %v2252 = vadd.f32 %v511, %v2251
        %v2253 = vpop.f32.mrf.mxu0
        %v2254 = vadd.f32 %v515, %v2253
        %2255 = vmatprep.mubr.bf16.mxu0 0
        %2256 = vmatmul.mubr.bf16.gmra.mxu0 %v327
        %v2257 = vpop.f32.mrf.mxu0
        %v2258 = vadd.f32 %v511, %v2257
        %v2259 = vpop.f32.mrf.mxu0
        %v2260 = vadd.f32 %v515, %v2259
        %v2261 = vpop.f32.mrf.mxu0
        %v2262 = vadd.f32 %v511, %v2261
        %v2263 = vpop.f32.mrf.mxu0
        %v2264 = vadd.f32 %v515, %v2263
        %2265 = vmatprep.mubr.bf16.mxu0 0
        %2266 = vmatmul.mubr.bf16.gmra.mxu0 %v328
        %v2267 = vpop.f32.mrf.mxu0
        %v2268 = vadd.f32 %v511, %v2267
        %v2269 = vpop.f32.mrf.mxu0
        %v2270 = vadd.f32 %v515, %v2269
        %v2271 = vpop.f32.mrf.mxu0
        %v2272 = vadd.f32 %v511, %v2271
        %v2273 = vpop.f32.mrf.mxu0
        %v2274 = vadd.f32 %v515, %v2273
        %2275 = vmatprep.mubr.bf16.mxu0 0
        %2276 = vmatmul.mubr.bf16.gmra.mxu0 %v329
        %v2277 = vpop.f32.mrf.mxu0
        %v2278 = vadd.f32 %v511, %v2277
        %v2279 = vpop.f32.mrf.mxu0
        %v2280 = vadd.f32 %v515, %v2279
        %v2281 = vpop.f32.mrf.mxu0
        %v2282 = vadd.f32 %v511, %v2281
        %v2283 = vpop.f32.mrf.mxu0
        %v2284 = vadd.f32 %v515, %v2283
        %2285 = vmatprep.mubr.bf16.mxu0 0
        %2286 = vmatmul.mubr.bf16.gmra.mxu0 %v330
        %v2287 = vpop.f32.mrf.mxu0
        %v2288 = vadd.f32 %v511, %v2287
        %v2289 = vpop.f32.mrf.mxu0
        %v2290 = vadd.f32 %v515, %v2289
        %v2291 = vpop.f32.mrf.mxu0
        %v2292 = vadd.f32 %v511, %v2291
        %v2293 = vpop.f32.mrf.mxu0
        %v2294 = vadd.f32 %v515, %v2293
        %2295 = vmatprep.mubr.bf16.mxu0 0
        %2296 = vmatmul.mubr.bf16.gmra.mxu0 %v331
        %v2297 = vpop.f32.mrf.mxu0
        %v2298 = vadd.f32 %v511, %v2297
        %v2299 = vpop.f32.mrf.mxu0
        %v2300 = vadd.f32 %v515, %v2299
        %v2301 = vpop.f32.mrf.mxu0
        %v2302 = vadd.f32 %v511, %v2301
        %v2303 = vpop.f32.mrf.mxu0
        %v2304 = vadd.f32 %v515, %v2303
        %2305 = vmatprep.mubr.bf16.mxu0 0
        %2306 = vmatmul.mubr.bf16.gmra.mxu0 %v332
        %v2307 = vpop.f32.mrf.mxu0
        %v2308 = vadd.f32 %v511, %v2307
        %v2309 = vpop.f32.mrf.mxu0
        %v2310 = vadd.f32 %v515, %v2309
        %v2311 = vpop.f32.mrf.mxu0
        %v2312 = vadd.f32 %v511, %v2311
        %v2313 = vpop.f32.mrf.mxu0
        %v2314 = vadd.f32 %v515, %v2313
        %2315 = vmatprep.mubr.bf16.mxu0 0
        %2316 = vmatmul.mubr.bf16.gmra.mxu0 %v333
        %v2317 = vpop.f32.mrf.mxu0
        %v2318 = vadd.f32 %v511, %v2317
        %v2319 = vpop.f32.mrf.mxu0
        %v2320 = vadd.f32 %v515, %v2319
        %v2321 = vpop.f32.mrf.mxu0
        %v2322 = vadd.f32 %v511, %v2321
        %v2323 = vpop.f32.mrf.mxu0
        %v2324 = vadd.f32 %v515, %v2323
        %2325 = vmatprep.mubr.bf16.mxu0 0
        %2326 = vmatmul.mubr.bf16.gmra.mxu0 %v334
        %v2327 = vpop.f32.mrf.mxu0
        %v2328 = vadd.f32 %v511, %v2327
        %v2329 = vpop.f32.mrf.mxu0
        %v2330 = vadd.f32 %v515, %v2329
        %v2331 = vpop.f32.mrf.mxu0
        %v2332 = vadd.f32 %v511, %v2331
        %v2333 = vpop.f32.mrf.mxu0
        %v2334 = vadd.f32 %v515, %v2333
        %2335 = vmatprep.mubr.bf16.mxu0 0
        %2336 = vmatmul.mubr.bf16.gmra.mxu0 %v335
        %v2337 = vpop.f32.mrf.mxu0
        %v2338 = vadd.f32 %v511, %v2337
        %v2339 = vpop.f32.mrf.mxu0
        %v2340 = vadd.f32 %v515, %v2339
        %v2341 = vpop.f32.mrf.mxu0
        %v2342 = vadd.f32 %v511, %v2341
        %v2343 = vpop.f32.mrf.mxu0
        %v2344 = vadd.f32 %v515, %v2343
        %2345 = vdwg.mxu0
        %2346 = vmatprep.subr.bf16.mxu0 %v1057
        %2347 = vmatpush1.bf16.msra.mxu0 %v1056
        %2348 = vmatprep.subr.bf16.mxu0 %v1041
        %2349 = vmatpush1.bf16.msra.mxu0 %v1040
        %2350 = vmatprep.subr.bf16.mxu0 %v1025
        %2351 = vmatpush1.bf16.msra.mxu0 %v1024
        %2352 = vmatprep.subr.bf16.mxu0 %v1009
        %2353 = vmatpush1.bf16.msra.mxu0 %v1008
        %2354 = vmatprep.subr.bf16.mxu0 %v993
        %2355 = vmatpush1.bf16.msra.mxu0 %v992
        %2356 = vmatprep.subr.bf16.mxu0 %v977
        %2357 = vmatpush1.bf16.msra.mxu0 %v976
        %2358 = vmatprep.subr.bf16.mxu0 %v961
        %2359 = vmatpush1.bf16.msra.mxu0 %v960
        %2360 = vmatprep.subr.bf16.mxu0 %v945
        %2361 = vmatpush1.bf16.msra.mxu0 %v944
        %2362 = vmatprep.subr.bf16.mxu0 0
        %2363 = vmatpush2.bf16.msra.mxu0 0
        %2364 = vmatprep.subr.bf16.mxu0 0
        %2365 = vmatpush2.bf16.msra.mxu0 0
        %2366 = vmatprep.subr.bf16.mxu0 0
        %2367 = vmatpush2.bf16.msra.mxu0 0
        %2368 = vmatprep.subr.bf16.mxu0 0
        %2369 = vmatpush2.bf16.msra.mxu0 0
        %2370 = vmatprep.subr.bf16.mxu0 0
        %2371 = vmatpush2.bf16.msra.mxu0 0
        %2372 = vmatprep.subr.bf16.mxu0 0
        %2373 = vmatpush2.bf16.msra.mxu0 0
        %2374 = vmatprep.subr.bf16.mxu0 0
        %2375 = vmatpush2.bf16.msra.mxu0 0
        %2376 = vmatprep.subr.bf16.mxu0 0
        %2377 = vmatpush2.bf16.msra.mxu0 0
        %2378 = vmatprep.mubr.bf16.mxu0 0
        %2379 = vmatmul.mubr.bf16.gmra.mxu0 %v320
        %v2380 = vpop.f32.mrf.mxu0
        %v2381 = vadd.f32 %v519, %v2380
        %v2382 = vpop.f32.mrf.mxu0
        %v2383 = vadd.f32 %v523, %v2382
        %v2384 = vpop.f32.mrf.mxu0
        %v2385 = vadd.f32 %v519, %v2384
        %v2386 = vpop.f32.mrf.mxu0
        %v2387 = vadd.f32 %v523, %v2386
        %2388 = vmatprep.mubr.bf16.mxu0 0
        %2389 = vmatmul.mubr.bf16.gmra.mxu0 %v321
        %v2390 = vpop.f32.mrf.mxu0
        %v2391 = vadd.f32 %v519, %v2390
        %v2392 = vpop.f32.mrf.mxu0
        %v2393 = vadd.f32 %v523, %v2392
        %v2394 = vpop.f32.mrf.mxu0
        %v2395 = vadd.f32 %v519, %v2394
        %v2396 = vpop.f32.mrf.mxu0
        %v2397 = vadd.f32 %v523, %v2396
        %2398 = vmatprep.mubr.bf16.mxu0 0
        %2399 = vmatmul.mubr.bf16.gmra.mxu0 %v322
        %v2400 = vpop.f32.mrf.mxu0
        %v2401 = vadd.f32 %v519, %v2400
        %v2402 = vpop.f32.mrf.mxu0
        %v2403 = vadd.f32 %v523, %v2402
        %v2404 = vpop.f32.mrf.mxu0
        %v2405 = vadd.f32 %v519, %v2404
        %v2406 = vpop.f32.mrf.mxu0
        %v2407 = vadd.f32 %v523, %v2406
        %2408 = vmatprep.mubr.bf16.mxu0 0
        %2409 = vmatmul.mubr.bf16.gmra.mxu0 %v323
        %v2410 = vpop.f32.mrf.mxu0
        %v2411 = vadd.f32 %v519, %v2410
        %v2412 = vpop.f32.mrf.mxu0
        %v2413 = vadd.f32 %v523, %v2412
        %v2414 = vpop.f32.mrf.mxu0
        %v2415 = vadd.f32 %v519, %v2414
        %v2416 = vpop.f32.mrf.mxu0
        %v2417 = vadd.f32 %v523, %v2416
        %2418 = vmatprep.mubr.bf16.mxu0 0
        %2419 = vmatmul.mubr.bf16.gmra.mxu0 %v324
        %v2420 = vpop.f32.mrf.mxu0
        %v2421 = vadd.f32 %v519, %v2420
        %v2422 = vpop.f32.mrf.mxu0
        %v2423 = vadd.f32 %v523, %v2422
        %v2424 = vpop.f32.mrf.mxu0
        %v2425 = vadd.f32 %v519, %v2424
        %v2426 = vpop.f32.mrf.mxu0
        %v2427 = vadd.f32 %v523, %v2426
        %2428 = vmatprep.mubr.bf16.mxu0 0
        %2429 = vmatmul.mubr.bf16.gmra.mxu0 %v325
        %v2430 = vpop.f32.mrf.mxu0
        %v2431 = vadd.f32 %v519, %v2430
        %v2432 = vpop.f32.mrf.mxu0
        %v2433 = vadd.f32 %v523, %v2432
        %v2434 = vpop.f32.mrf.mxu0
        %v2435 = vadd.f32 %v519, %v2434
        %v2436 = vpop.f32.mrf.mxu0
        %v2437 = vadd.f32 %v523, %v2436
        %2438 = vmatprep.mubr.bf16.mxu0 0
        %2439 = vmatmul.mubr.bf16.gmra.mxu0 %v326
        %v2440 = vpop.f32.mrf.mxu0
        %v2441 = vadd.f32 %v519, %v2440
        %v2442 = vpop.f32.mrf.mxu0
        %v2443 = vadd.f32 %v523, %v2442
        %v2444 = vpop.f32.mrf.mxu0
        %v2445 = vadd.f32 %v519, %v2444
        %v2446 = vpop.f32.mrf.mxu0
        %v2447 = vadd.f32 %v523, %v2446
        %2448 = vmatprep.mubr.bf16.mxu0 0
        %2449 = vmatmul.mubr.bf16.gmra.mxu0 %v327
        %v2450 = vpop.f32.mrf.mxu0
        %v2451 = vadd.f32 %v519, %v2450
        %v2452 = vpop.f32.mrf.mxu0
        %v2453 = vadd.f32 %v523, %v2452
        %v2454 = vpop.f32.mrf.mxu0
        %v2455 = vadd.f32 %v519, %v2454
        %v2456 = vpop.f32.mrf.mxu0
        %v2457 = vadd.f32 %v523, %v2456
        %2458 = vmatprep.mubr.bf16.mxu0 0
        %2459 = vmatmul.mubr.bf16.gmra.mxu0 %v328
        %v2460 = vpop.f32.mrf.mxu0
        %v2461 = vadd.f32 %v519, %v2460
        %v2462 = vpop.f32.mrf.mxu0
        %v2463 = vadd.f32 %v523, %v2462
        %v2464 = vpop.f32.mrf.mxu0
        %v2465 = vadd.f32 %v519, %v2464
        %v2466 = vpop.f32.mrf.mxu0
        %v2467 = vadd.f32 %v523, %v2466
        %2468 = vmatprep.mubr.bf16.mxu0 0
        %2469 = vmatmul.mubr.bf16.gmra.mxu0 %v329
        %v2470 = vpop.f32.mrf.mxu0
        %v2471 = vadd.f32 %v519, %v2470
        %v2472 = vpop.f32.mrf.mxu0
        %v2473 = vadd.f32 %v523, %v2472
        %v2474 = vpop.f32.mrf.mxu0
        %v2475 = vadd.f32 %v519, %v2474
        %v2476 = vpop.f32.mrf.mxu0
        %v2477 = vadd.f32 %v523, %v2476
        %2478 = vmatprep.mubr.bf16.mxu0 0
        %2479 = vmatmul.mubr.bf16.gmra.mxu0 %v330
        %v2480 = vpop.f32.mrf.mxu0
        %v2481 = vadd.f32 %v519, %v2480
        %v2482 = vpop.f32.mrf.mxu0
        %v2483 = vadd.f32 %v523, %v2482
        %v2484 = vpop.f32.mrf.mxu0
        %v2485 = vadd.f32 %v519, %v2484
        %v2486 = vpop.f32.mrf.mxu0
        %v2487 = vadd.f32 %v523, %v2486
        %2488 = vmatprep.mubr.bf16.mxu0 0
        %2489 = vmatmul.mubr.bf16.gmra.mxu0 %v331
        %v2490 = vpop.f32.mrf.mxu0
        %v2491 = vadd.f32 %v519, %v2490
        %v2492 = vpop.f32.mrf.mxu0
        %v2493 = vadd.f32 %v523, %v2492
        %v2494 = vpop.f32.mrf.mxu0
        %v2495 = vadd.f32 %v519, %v2494
        %v2496 = vpop.f32.mrf.mxu0
        %v2497 = vadd.f32 %v523, %v2496
        %2498 = vmatprep.mubr.bf16.mxu0 0
        %2499 = vmatmul.mubr.bf16.gmra.mxu0 %v332
        %v2500 = vpop.f32.mrf.mxu0
        %v2501 = vadd.f32 %v519, %v2500
        %v2502 = vpop.f32.mrf.mxu0
        %v2503 = vadd.f32 %v523, %v2502
        %v2504 = vpop.f32.mrf.mxu0
        %v2505 = vadd.f32 %v519, %v2504
        %v2506 = vpop.f32.mrf.mxu0
        %v2507 = vadd.f32 %v523, %v2506
        %2508 = vmatprep.mubr.bf16.mxu0 0
        %2509 = vmatmul.mubr.bf16.gmra.mxu0 %v333
        %v2510 = vpop.f32.mrf.mxu0
        %v2511 = vadd.f32 %v519, %v2510
        %v2512 = vpop.f32.mrf.mxu0
        %v2513 = vadd.f32 %v523, %v2512
        %v2514 = vpop.f32.mrf.mxu0
        %v2515 = vadd.f32 %v519, %v2514
        %v2516 = vpop.f32.mrf.mxu0
        %v2517 = vadd.f32 %v523, %v2516
        %2518 = vmatprep.mubr.bf16.mxu0 0
        %2519 = vmatmul.mubr.bf16.gmra.mxu0 %v334
        %v2520 = vpop.f32.mrf.mxu0
        %v2521 = vadd.f32 %v519, %v2520
        %v2522 = vpop.f32.mrf.mxu0
        %v2523 = vadd.f32 %v523, %v2522
        %v2524 = vpop.f32.mrf.mxu0
        %v2525 = vadd.f32 %v519, %v2524
        %v2526 = vpop.f32.mrf.mxu0
        %v2527 = vadd.f32 %v523, %v2526
        %2528 = vmatprep.mubr.bf16.mxu0 0
        %2529 = vmatmul.mubr.bf16.gmra.mxu0 %v335
        %v2530 = vpop.f32.mrf.mxu0
        %v2531 = vadd.f32 %v519, %v2530
        %v2532 = vpop.f32.mrf.mxu0
        %v2533 = vadd.f32 %v523, %v2532
        %v2534 = vpop.f32.mrf.mxu0
        %v2535 = vadd.f32 %v519, %v2534
        %v2536 = vpop.f32.mrf.mxu0
        %v2537 = vadd.f32 %v523, %v2536
        %2538 = vdwg.mxu0
        %2539 = vmatprep.subr.bf16.mxu0 %v1059
        %2540 = vmatpush1.bf16.msra.mxu0 %v1058
        %2541 = vmatprep.subr.bf16.mxu0 %v1043
        %2542 = vmatpush1.bf16.msra.mxu0 %v1042
        %2543 = vmatprep.subr.bf16.mxu0 %v1027
        %2544 = vmatpush1.bf16.msra.mxu0 %v1026
        %2545 = vmatprep.subr.bf16.mxu0 %v1011
        %2546 = vmatpush1.bf16.msra.mxu0 %v1010
        %2547 = vmatprep.subr.bf16.mxu0 %v995
        %2548 = vmatpush1.bf16.msra.mxu0 %v994
        %2549 = vmatprep.subr.bf16.mxu0 %v979
        %2550 = vmatpush1.bf16.msra.mxu0 %v978
        %2551 = vmatprep.subr.bf16.mxu0 %v963
        %2552 = vmatpush1.bf16.msra.mxu0 %v962
        %2553 = vmatprep.subr.bf16.mxu0 %v947
        %2554 = vmatpush1.bf16.msra.mxu0 %v946
        %2555 = vmatprep.subr.bf16.mxu0 0
        %2556 = vmatpush2.bf16.msra.mxu0 0
        %2557 = vmatprep.subr.bf16.mxu0 0
        %2558 = vmatpush2.bf16.msra.mxu0 0
        %2559 = vmatprep.subr.bf16.mxu0 0
        %2560 = vmatpush2.bf16.msra.mxu0 0
        %2561 = vmatprep.subr.bf16.mxu0 0
        %2562 = vmatpush2.bf16.msra.mxu0 0
        %2563 = vmatprep.subr.bf16.mxu0 0
        %2564 = vmatpush2.bf16.msra.mxu0 0
        %2565 = vmatprep.subr.bf16.mxu0 0
        %2566 = vmatpush2.bf16.msra.mxu0 0
        %2567 = vmatprep.subr.bf16.mxu0 0
        %2568 = vmatpush2.bf16.msra.mxu0 0
        %2569 = vmatprep.subr.bf16.mxu0 0
        %2570 = vmatpush2.bf16.msra.mxu0 0
        %2571 = vmatprep.mubr.bf16.mxu0 0
        %2572 = vmatmul.mubr.bf16.gmra.mxu0 %v320
        %v2573 = vpop.f32.mrf.mxu0
        %v2574 = vadd.f32 %v527, %v2573
        %v2575 = vpop.f32.mrf.mxu0
        %v2576 = vadd.f32 %v531, %v2575
        %v2577 = vpop.f32.mrf.mxu0
        %v2578 = vadd.f32 %v527, %v2577
        %v2579 = vpop.f32.mrf.mxu0
        %v2580 = vadd.f32 %v531, %v2579
        %2581 = vmatprep.mubr.bf16.mxu0 0
        %2582 = vmatmul.mubr.bf16.gmra.mxu0 %v321
        %v2583 = vpop.f32.mrf.mxu0
        %v2584 = vadd.f32 %v527, %v2583
        %v2585 = vpop.f32.mrf.mxu0
        %v2586 = vadd.f32 %v531, %v2585
        %v2587 = vpop.f32.mrf.mxu0
        %v2588 = vadd.f32 %v527, %v2587
        %v2589 = vpop.f32.mrf.mxu0
        %v2590 = vadd.f32 %v531, %v2589
        %2591 = vmatprep.mubr.bf16.mxu0 0
        %2592 = vmatmul.mubr.bf16.gmra.mxu0 %v322
        %v2593 = vpop.f32.mrf.mxu0
        %v2594 = vadd.f32 %v527, %v2593
        %v2595 = vpop.f32.mrf.mxu0
        %v2596 = vadd.f32 %v531, %v2595
        %v2597 = vpop.f32.mrf.mxu0
        %v2598 = vadd.f32 %v527, %v2597
        %v2599 = vpop.f32.mrf.mxu0
        %v2600 = vadd.f32 %v531, %v2599
        %2601 = vmatprep.mubr.bf16.mxu0 0
        %2602 = vmatmul.mubr.bf16.gmra.mxu0 %v323
        %v2603 = vpop.f32.mrf.mxu0
        %v2604 = vadd.f32 %v527, %v2603
        %v2605 = vpop.f32.mrf.mxu0
        %v2606 = vadd.f32 %v531, %v2605
        %v2607 = vpop.f32.mrf.mxu0
        %v2608 = vadd.f32 %v527, %v2607
        %v2609 = vpop.f32.mrf.mxu0
        %v2610 = vadd.f32 %v531, %v2609
        %2611 = vmatprep.mubr.bf16.mxu0 0
        %2612 = vmatmul.mubr.bf16.gmra.mxu0 %v324
        %v2613 = vpop.f32.mrf.mxu0
        %v2614 = vadd.f32 %v527, %v2613
        %v2615 = vpop.f32.mrf.mxu0
        %v2616 = vadd.f32 %v531, %v2615
        %v2617 = vpop.f32.mrf.mxu0
        %v2618 = vadd.f32 %v527, %v2617
        %v2619 = vpop.f32.mrf.mxu0
        %v2620 = vadd.f32 %v531, %v2619
        %2621 = vmatprep.mubr.bf16.mxu0 0
        %2622 = vmatmul.mubr.bf16.gmra.mxu0 %v325
        %v2623 = vpop.f32.mrf.mxu0
        %v2624 = vadd.f32 %v527, %v2623
        %v2625 = vpop.f32.mrf.mxu0
        %v2626 = vadd.f32 %v531, %v2625
        %v2627 = vpop.f32.mrf.mxu0
        %v2628 = vadd.f32 %v527, %v2627
        %v2629 = vpop.f32.mrf.mxu0
        %v2630 = vadd.f32 %v531, %v2629
        %2631 = vmatprep.mubr.bf16.mxu0 0
        %2632 = vmatmul.mubr.bf16.gmra.mxu0 %v326
        %v2633 = vpop.f32.mrf.mxu0
        %v2634 = vadd.f32 %v527, %v2633
        %v2635 = vpop.f32.mrf.mxu0
        %v2636 = vadd.f32 %v531, %v2635
        %v2637 = vpop.f32.mrf.mxu0
        %v2638 = vadd.f32 %v527, %v2637
        %v2639 = vpop.f32.mrf.mxu0
        %v2640 = vadd.f32 %v531, %v2639
        %2641 = vmatprep.mubr.bf16.mxu0 0
        %2642 = vmatmul.mubr.bf16.gmra.mxu0 %v327
        %v2643 = vpop.f32.mrf.mxu0
        %v2644 = vadd.f32 %v527, %v2643
        %v2645 = vpop.f32.mrf.mxu0
        %v2646 = vadd.f32 %v531, %v2645
        %v2647 = vpop.f32.mrf.mxu0
        %v2648 = vadd.f32 %v527, %v2647
        %v2649 = vpop.f32.mrf.mxu0
        %v2650 = vadd.f32 %v531, %v2649
        %2651 = vmatprep.mubr.bf16.mxu0 0
        %2652 = vmatmul.mubr.bf16.gmra.mxu0 %v328
        %v2653 = vpop.f32.mrf.mxu0
        %v2654 = vadd.f32 %v527, %v2653
        %v2655 = vpop.f32.mrf.mxu0
        %v2656 = vadd.f32 %v531, %v2655
        %v2657 = vpop.f32.mrf.mxu0
        %v2658 = vadd.f32 %v527, %v2657
        %v2659 = vpop.f32.mrf.mxu0
        %v2660 = vadd.f32 %v531, %v2659
        %2661 = vmatprep.mubr.bf16.mxu0 0
        %2662 = vmatmul.mubr.bf16.gmra.mxu0 %v329
        %v2663 = vpop.f32.mrf.mxu0
        %v2664 = vadd.f32 %v527, %v2663
        %v2665 = vpop.f32.mrf.mxu0
        %v2666 = vadd.f32 %v531, %v2665
        %v2667 = vpop.f32.mrf.mxu0
        %v2668 = vadd.f32 %v527, %v2667
        %v2669 = vpop.f32.mrf.mxu0
        %v2670 = vadd.f32 %v531, %v2669
        %2671 = vmatprep.mubr.bf16.mxu0 0
        %2672 = vmatmul.mubr.bf16.gmra.mxu0 %v330
        %v2673 = vpop.f32.mrf.mxu0
        %v2674 = vadd.f32 %v527, %v2673
        %v2675 = vpop.f32.mrf.mxu0
        %v2676 = vadd.f32 %v531, %v2675
        %v2677 = vpop.f32.mrf.mxu0
        %v2678 = vadd.f32 %v527, %v2677
        %v2679 = vpop.f32.mrf.mxu0
        %v2680 = vadd.f32 %v531, %v2679
        %2681 = vmatprep.mubr.bf16.mxu0 0
        %2682 = vmatmul.mubr.bf16.gmra.mxu0 %v331
        %v2683 = vpop.f32.mrf.mxu0
        %v2684 = vadd.f32 %v527, %v2683
        %v2685 = vpop.f32.mrf.mxu0
        %v2686 = vadd.f32 %v531, %v2685
        %v2687 = vpop.f32.mrf.mxu0
        %v2688 = vadd.f32 %v527, %v2687
        %v2689 = vpop.f32.mrf.mxu0
        %v2690 = vadd.f32 %v531, %v2689
        %2691 = vmatprep.mubr.bf16.mxu0 0
        %2692 = vmatmul.mubr.bf16.gmra.mxu0 %v332
        %v2693 = vpop.f32.mrf.mxu0
        %v2694 = vadd.f32 %v527, %v2693
        %v2695 = vpop.f32.mrf.mxu0
        %v2696 = vadd.f32 %v531, %v2695
        %v2697 = vpop.f32.mrf.mxu0
        %v2698 = vadd.f32 %v527, %v2697
        %v2699 = vpop.f32.mrf.mxu0
        %v2700 = vadd.f32 %v531, %v2699
        %2701 = vmatprep.mubr.bf16.mxu0 0
        %2702 = vmatmul.mubr.bf16.gmra.mxu0 %v333
        %v2703 = vpop.f32.mrf.mxu0
        %v2704 = vadd.f32 %v527, %v2703
        %v2705 = vpop.f32.mrf.mxu0
        %v2706 = vadd.f32 %v531, %v2705
        %v2707 = vpop.f32.mrf.mxu0
        %v2708 = vadd.f32 %v527, %v2707
        %v2709 = vpop.f32.mrf.mxu0
        %v2710 = vadd.f32 %v531, %v2709
        %2711 = vmatprep.mubr.bf16.mxu0 0
        %2712 = vmatmul.mubr.bf16.gmra.mxu0 %v334
        %v2713 = vpop.f32.mrf.mxu0
        %v2714 = vadd.f32 %v527, %v2713
        %v2715 = vpop.f32.mrf.mxu0
        %v2716 = vadd.f32 %v531, %v2715
        %v2717 = vpop.f32.mrf.mxu0
        %v2718 = vadd.f32 %v527, %v2717
        %v2719 = vpop.f32.mrf.mxu0
        %v2720 = vadd.f32 %v531, %v2719
        %2721 = vmatprep.mubr.bf16.mxu0 0
        %2722 = vmatmul.mubr.bf16.gmra.mxu0 %v335
        %v2723 = vpop.f32.mrf.mxu0
        %v2724 = vadd.f32 %v527, %v2723
        %v2725 = vpop.f32.mrf.mxu0
        %v2726 = vadd.f32 %v531, %v2725
        %v2727 = vpop.f32.mrf.mxu0
        %v2728 = vadd.f32 %v527, %v2727
        %v2729 = vpop.f32.mrf.mxu0
        %v2730 = vadd.f32 %v531, %v2729
        %2731 = vdwg.mxu0
        %v2732 = vmax.f32 %v1223, 0.0
        %v2733 = vmax.f32 %v1225, 0.0
        %v2734 = vmax.f32 %v1416, 0.0
        %v2735 = vmax.f32 %v1418, 0.0
        %v2736 = vmax.f32 %v1609, 0.0
        %v2737 = vmax.f32 %v1611, 0.0
        %v2738 = vmax.f32 %v1802, 0.0
        %v2739 = vmax.f32 %v1804, 0.0
        %v2740 = vmax.f32 %v1995, 0.0
        %v2741 = vmax.f32 %v1997, 0.0
        %v2742 = vmax.f32 %v2188, 0.0
        %v2743 = vmax.f32 %v2190, 0.0
        %v2744 = vmax.f32 %v2381, 0.0
        %v2745 = vmax.f32 %v2383, 0.0
        %v2746 = vmax.f32 %v2574, 0.0
        %v2747 = vmax.f32 %v2576, 0.0
        %v2748 = vmax.f32 %v1227, 0.0
        %v2749 = vmax.f32 %v1229, 0.0
        %v2750 = vmax.f32 %v1420, 0.0
        %v2751 = vmax.f32 %v1422, 0.0
        %v2752 = vmax.f32 %v1613, 0.0
        %v2753 = vmax.f32 %v1615, 0.0
        %v2754 = vmax.f32 %v1806, 0.0
        %v2755 = vmax.f32 %v1808, 0.0
        %v2756 = vmax.f32 %v1999, 0.0
        %v2757 = vmax.f32 %v2001, 0.0
        %v2758 = vmax.f32 %v2192, 0.0
        %v2759 = vmax.f32 %v2194, 0.0
        %v2760 = vmax.f32 %v2385, 0.0
        %v2761 = vmax.f32 %v2387, 0.0
        %v2762 = vmax.f32 %v2578, 0.0
        %v2763 = vmax.f32 %v2580, 0.0
        %v2764 = vmax.f32 %v1233, 0.0
        %v2765 = vmax.f32 %v1235, 0.0
        %v2766 = vmax.f32 %v1426, 0.0
        %v2767 = vmax.f32 %v1428, 0.0
        %v2768 = vmax.f32 %v1619, 0.0
        %v2769 = vmax.f32 %v1621, 0.0
        %v2770 = vmax.f32 %v1812, 0.0
        %v2771 = vmax.f32 %v1814, 0.0
        %v2772 = vmax.f32 %v2005, 0.0
        %v2773 = vmax.f32 %v2007, 0.0
        %v2774 = vmax.f32 %v2198, 0.0
        %v2775 = vmax.f32 %v2200, 0.0
        %v2776 = vmax.f32 %v2391, 0.0
        %v2777 = vmax.f32 %v2393, 0.0
        %v2778 = vmax.f32 %v2584, 0.0
        %v2779 = vmax.f32 %v2586, 0.0
        %v2780 = vmax.f32 %v1237, 0.0
        %v2781 = vmax.f32 %v1239, 0.0
        %v2782 = vmax.f32 %v1430, 0.0
        %v2783 = vmax.f32 %v1432, 0.0
        %v2784 = vmax.f32 %v1623, 0.0
        %v2785 = vmax.f32 %v1625, 0.0
        %v2786 = vmax.f32 %v1816, 0.0
        %v2787 = vmax.f32 %v1818, 0.0
        %v2788 = vmax.f32 %v2009, 0.0
        %v2789 = vmax.f32 %v2011, 0.0
        %v2790 = vmax.f32 %v2202, 0.0
        %v2791 = vmax.f32 %v2204, 0.0
        %v2792 = vmax.f32 %v2395, 0.0
        %v2793 = vmax.f32 %v2397, 0.0
        %v2794 = vmax.f32 %v2588, 0.0
        %v2795 = vmax.f32 %v2590, 0.0
        %v2796 = vmax.f32 %v1243, 0.0
        %v2797 = vmax.f32 %v1245, 0.0
        %v2798 = vmax.f32 %v1436, 0.0
        %v2799 = vmax.f32 %v1438, 0.0
        %v2800 = vmax.f32 %v1629, 0.0
        %v2801 = vmax.f32 %v1631, 0.0
        %v2802 = vmax.f32 %v1822, 0.0
        %v2803 = vmax.f32 %v1824, 0.0
        %v2804 = vmax.f32 %v2015, 0.0
        %v2805 = vmax.f32 %v2017, 0.0
        %v2806 = vmax.f32 %v2208, 0.0
        %v2807 = vmax.f32 %v2210, 0.0
        %v2808 = vmax.f32 %v2401, 0.0
        %v2809 = vmax.f32 %v2403, 0.0
        %v2810 = vmax.f32 %v2594, 0.0
        %v2811 = vmax.f32 %v2596, 0.0
        %v2812 = vmax.f32 %v1247, 0.0
        %v2813 = vmax.f32 %v1249, 0.0
        %v2814 = vmax.f32 %v1440, 0.0
        %v2815 = vmax.f32 %v1442, 0.0
        %v2816 = vmax.f32 %v1633, 0.0
        %v2817 = vmax.f32 %v1635, 0.0
        %v2818 = vmax.f32 %v1826, 0.0
        %v2819 = vmax.f32 %v1828, 0.0
        %v2820 = vmax.f32 %v2019, 0.0
        %v2821 = vmax.f32 %v2021, 0.0
        %v2822 = vmax.f32 %v2212, 0.0
        %v2823 = vmax.f32 %v2214, 0.0
        %v2824 = vmax.f32 %v2405, 0.0
        %v2825 = vmax.f32 %v2407, 0.0
        %v2826 = vmax.f32 %v2598, 0.0
        %v2827 = vmax.f32 %v2600, 0.0
        %v2828 = vmax.f32 %v1253, 0.0
        %v2829 = vmax.f32 %v1255, 0.0
        %v2830 = vmax.f32 %v1446, 0.0
        %v2831 = vmax.f32 %v1448, 0.0
        %v2832 = vmax.f32 %v1639, 0.0
        %v2833 = vmax.f32 %v1641, 0.0
        %v2834 = vmax.f32 %v1832, 0.0
        %v2835 = vmax.f32 %v1834, 0.0
        %v2836 = vmax.f32 %v2025, 0.0
        %v2837 = vmax.f32 %v2027, 0.0
        %v2838 = vmax.f32 %v2218, 0.0
        %v2839 = vmax.f32 %v2220, 0.0
        %v2840 = vmax.f32 %v2411, 0.0
        %v2841 = vmax.f32 %v2413, 0.0
        %v2842 = vmax.f32 %v2604, 0.0
        %v2843 = vmax.f32 %v2606, 0.0
        %v2844 = vmax.f32 %v1257, 0.0
        %v2845 = vmax.f32 %v1259, 0.0
        %v2846 = vmax.f32 %v1450, 0.0
        %v2847 = vmax.f32 %v1452, 0.0
        %v2848 = vmax.f32 %v1643, 0.0
        %v2849 = vmax.f32 %v1645, 0.0
        %v2850 = vmax.f32 %v1836, 0.0
        %v2851 = vmax.f32 %v1838, 0.0
        %v2852 = vmax.f32 %v2029, 0.0
        %v2853 = vmax.f32 %v2031, 0.0
        %v2854 = vmax.f32 %v2222, 0.0
        %v2855 = vmax.f32 %v2224, 0.0
        %v2856 = vmax.f32 %v2415, 0.0
        %v2857 = vmax.f32 %v2417, 0.0
        %v2858 = vmax.f32 %v2608, 0.0
        %v2859 = vmax.f32 %v2610, 0.0
        %v2860 = vmax.f32 %v1263, 0.0
        %v2861 = vmax.f32 %v1265, 0.0
        %v2862 = vmax.f32 %v1456, 0.0
        %v2863 = vmax.f32 %v1458, 0.0
        %v2864 = vmax.f32 %v1649, 0.0
        %v2865 = vmax.f32 %v1651, 0.0
        %v2866 = vmax.f32 %v1842, 0.0
        %v2867 = vmax.f32 %v1844, 0.0
        %v2868 = vmax.f32 %v2035, 0.0
        %v2869 = vmax.f32 %v2037, 0.0
        %v2870 = vmax.f32 %v2228, 0.0
        %v2871 = vmax.f32 %v2230, 0.0
        %v2872 = vmax.f32 %v2421, 0.0
        %v2873 = vmax.f32 %v2423, 0.0
        %v2874 = vmax.f32 %v2614, 0.0
        %v2875 = vmax.f32 %v2616, 0.0
        %v2876 = vmax.f32 %v1267, 0.0
        %v2877 = vmax.f32 %v1269, 0.0
        %v2878 = vmax.f32 %v1460, 0.0
        %v2879 = vmax.f32 %v1462, 0.0
        %v2880 = vmax.f32 %v1653, 0.0
        %v2881 = vmax.f32 %v1655, 0.0
        %v2882 = vmax.f32 %v1846, 0.0
        %v2883 = vmax.f32 %v1848, 0.0
        %v2884 = vmax.f32 %v2039, 0.0
        %v2885 = vmax.f32 %v2041, 0.0
        %v2886 = vmax.f32 %v2232, 0.0
        %v2887 = vmax.f32 %v2234, 0.0
        %v2888 = vmax.f32 %v2425, 0.0
        %v2889 = vmax.f32 %v2427, 0.0
        %v2890 = vmax.f32 %v2618, 0.0
        %v2891 = vmax.f32 %v2620, 0.0
        %v2892 = vmax.f32 %v1273, 0.0
        %v2893 = vmax.f32 %v1275, 0.0
        %v2894 = vmax.f32 %v1466, 0.0
        %v2895 = vmax.f32 %v1468, 0.0
        %v2896 = vmax.f32 %v1659, 0.0
        %v2897 = vmax.f32 %v1661, 0.0
        %v2898 = vmax.f32 %v1852, 0.0
        %v2899 = vmax.f32 %v1854, 0.0
        %v2900 = vmax.f32 %v2045, 0.0
        %v2901 = vmax.f32 %v2047, 0.0
        %v2902 = vmax.f32 %v2238, 0.0
        %v2903 = vmax.f32 %v2240, 0.0
        %v2904 = vmax.f32 %v2431, 0.0
        %v2905 = vmax.f32 %v2433, 0.0
        %v2906 = vmax.f32 %v2624, 0.0
        %v2907 = vmax.f32 %v2626, 0.0
        %v2908 = vmax.f32 %v1277, 0.0
        %v2909 = vmax.f32 %v1279, 0.0
        %v2910 = vmax.f32 %v1470, 0.0
        %v2911 = vmax.f32 %v1472, 0.0
        %v2912 = vmax.f32 %v1663, 0.0
        %v2913 = vmax.f32 %v1665, 0.0
        %v2914 = vmax.f32 %v1856, 0.0
        %v2915 = vmax.f32 %v1858, 0.0
        %v2916 = vmax.f32 %v2049, 0.0
        %v2917 = vmax.f32 %v2051, 0.0
        %v2918 = vmax.f32 %v2242, 0.0
        %v2919 = vmax.f32 %v2244, 0.0
        %v2920 = vmax.f32 %v2435, 0.0
        %v2921 = vmax.f32 %v2437, 0.0
        %v2922 = vmax.f32 %v2628, 0.0
        %v2923 = vmax.f32 %v2630, 0.0
        %v2924 = vmax.f32 %v1283, 0.0
        %v2925 = vmax.f32 %v1285, 0.0
        %v2926 = vmax.f32 %v1476, 0.0
        %v2927 = vmax.f32 %v1478, 0.0
        %v2928 = vmax.f32 %v1669, 0.0
        %v2929 = vmax.f32 %v1671, 0.0
        %v2930 = vmax.f32 %v1862, 0.0
        %v2931 = vmax.f32 %v1864, 0.0
        %v2932 = vmax.f32 %v2055, 0.0
        %v2933 = vmax.f32 %v2057, 0.0
        %v2934 = vmax.f32 %v2248, 0.0
        %v2935 = vmax.f32 %v2250, 0.0
        %v2936 = vmax.f32 %v2441, 0.0
        %v2937 = vmax.f32 %v2443, 0.0
        %v2938 = vmax.f32 %v2634, 0.0
        %v2939 = vmax.f32 %v2636, 0.0
        %v2940 = vmax.f32 %v1287, 0.0
        %v2941 = vmax.f32 %v1289, 0.0
        %v2942 = vmax.f32 %v1480, 0.0
        %v2943 = vmax.f32 %v1482, 0.0
        %v2944 = vmax.f32 %v1673, 0.0
        %v2945 = vmax.f32 %v1675, 0.0
        %v2946 = vmax.f32 %v1866, 0.0
        %v2947 = vmax.f32 %v1868, 0.0
        %v2948 = vmax.f32 %v2059, 0.0
        %v2949 = vmax.f32 %v2061, 0.0
        %v2950 = vmax.f32 %v2252, 0.0
        %v2951 = vmax.f32 %v2254, 0.0
        %v2952 = vmax.f32 %v2445, 0.0
        %v2953 = vmax.f32 %v2447, 0.0
        %v2954 = vmax.f32 %v2638, 0.0
        %v2955 = vmax.f32 %v2640, 0.0
        %v2956 = vmax.f32 %v1293, 0.0
        %v2957 = vmax.f32 %v1295, 0.0
        %v2958 = vmax.f32 %v1486, 0.0
        %v2959 = vmax.f32 %v1488, 0.0
        %v2960 = vmax.f32 %v1679, 0.0
        %v2961 = vmax.f32 %v1681, 0.0
        %v2962 = vmax.f32 %v1872, 0.0
        %v2963 = vmax.f32 %v1874, 0.0
        %v2964 = vmax.f32 %v2065, 0.0
        %v2965 = vmax.f32 %v2067, 0.0
        %v2966 = vmax.f32 %v2258, 0.0
        %v2967 = vmax.f32 %v2260, 0.0
        %v2968 = vmax.f32 %v2451, 0.0
        %v2969 = vmax.f32 %v2453, 0.0
        %v2970 = vmax.f32 %v2644, 0.0
        %v2971 = vmax.f32 %v2646, 0.0
        %v2972 = vmax.f32 %v1297, 0.0
        %v2973 = vmax.f32 %v1299, 0.0
        %v2974 = vmax.f32 %v1490, 0.0
        %v2975 = vmax.f32 %v1492, 0.0
        %v2976 = vmax.f32 %v1683, 0.0
        %v2977 = vmax.f32 %v1685, 0.0
        %v2978 = vmax.f32 %v1876, 0.0
        %v2979 = vmax.f32 %v1878, 0.0
        %v2980 = vmax.f32 %v2069, 0.0
        %v2981 = vmax.f32 %v2071, 0.0
        %v2982 = vmax.f32 %v2262, 0.0
        %v2983 = vmax.f32 %v2264, 0.0
        %v2984 = vmax.f32 %v2455, 0.0
        %v2985 = vmax.f32 %v2457, 0.0
        %v2986 = vmax.f32 %v2648, 0.0
        %v2987 = vmax.f32 %v2650, 0.0
        %v2988 = vmax.f32 %v1303, 0.0
        %v2989 = vmax.f32 %v1305, 0.0
        %v2990 = vmax.f32 %v1496, 0.0
        %v2991 = vmax.f32 %v1498, 0.0
        %v2992 = vmax.f32 %v1689, 0.0
        %v2993 = vmax.f32 %v1691, 0.0
        %v2994 = vmax.f32 %v1882, 0.0
        %v2995 = vmax.f32 %v1884, 0.0
        %v2996 = vmax.f32 %v2075, 0.0
        %v2997 = vmax.f32 %v2077, 0.0
        %v2998 = vmax.f32 %v2268, 0.0
        %v2999 = vmax.f32 %v2270, 0.0
        %v3000 = vmax.f32 %v2461, 0.0
        %v3001 = vmax.f32 %v2463, 0.0
        %v3002 = vmax.f32 %v2654, 0.0
        %v3003 = vmax.f32 %v2656, 0.0
        %v3004 = vmax.f32 %v1307, 0.0
        %v3005 = vmax.f32 %v1309, 0.0
        %v3006 = vmax.f32 %v1500, 0.0
        %v3007 = vmax.f32 %v1502, 0.0
        %v3008 = vmax.f32 %v1693, 0.0
        %v3009 = vmax.f32 %v1695, 0.0
        %v3010 = vmax.f32 %v1886, 0.0
        %v3011 = vmax.f32 %v1888, 0.0
        %v3012 = vmax.f32 %v2079, 0.0
        %v3013 = vmax.f32 %v2081, 0.0
        %v3014 = vmax.f32 %v2272, 0.0
        %v3015 = vmax.f32 %v2274, 0.0
        %v3016 = vmax.f32 %v2465, 0.0
        %v3017 = vmax.f32 %v2467, 0.0
        %v3018 = vmax.f32 %v2658, 0.0
        %v3019 = vmax.f32 %v2660, 0.0
        %v3020 = vmax.f32 %v1313, 0.0
        %v3021 = vmax.f32 %v1315, 0.0
        %v3022 = vmax.f32 %v1506, 0.0
        %v3023 = vmax.f32 %v1508, 0.0
        %v3024 = vmax.f32 %v1699, 0.0
        %v3025 = vmax.f32 %v1701, 0.0
        %v3026 = vmax.f32 %v1892, 0.0
        %v3027 = vmax.f32 %v1894, 0.0
        %v3028 = vmax.f32 %v2085, 0.0
        %v3029 = vmax.f32 %v2087, 0.0
        %v3030 = vmax.f32 %v2278, 0.0
        %v3031 = vmax.f32 %v2280, 0.0
        %v3032 = vmax.f32 %v2471, 0.0
        %v3033 = vmax.f32 %v2473, 0.0
        %v3034 = vmax.f32 %v2664, 0.0
        %v3035 = vmax.f32 %v2666, 0.0
        %v3036 = vmax.f32 %v1317, 0.0
        %v3037 = vmax.f32 %v1319, 0.0
        %v3038 = vmax.f32 %v1510, 0.0
        %v3039 = vmax.f32 %v1512, 0.0
        %v3040 = vmax.f32 %v1703, 0.0
        %v3041 = vmax.f32 %v1705, 0.0
        %v3042 = vmax.f32 %v1896, 0.0
        %v3043 = vmax.f32 %v1898, 0.0
        %v3044 = vmax.f32 %v2089, 0.0
        %v3045 = vmax.f32 %v2091, 0.0
        %v3046 = vmax.f32 %v2282, 0.0
        %v3047 = vmax.f32 %v2284, 0.0
        %v3048 = vmax.f32 %v2475, 0.0
        %v3049 = vmax.f32 %v2477, 0.0
        %v3050 = vmax.f32 %v2668, 0.0
        %v3051 = vmax.f32 %v2670, 0.0
        %v3052 = vmax.f32 %v1323, 0.0
        %v3053 = vmax.f32 %v1325, 0.0
        %v3054 = vmax.f32 %v1516, 0.0
        %v3055 = vmax.f32 %v1518, 0.0
        %v3056 = vmax.f32 %v1709, 0.0
        %v3057 = vmax.f32 %v1711, 0.0
        %v3058 = vmax.f32 %v1902, 0.0
        %v3059 = vmax.f32 %v1904, 0.0
        %v3060 = vmax.f32 %v2095, 0.0
        %v3061 = vmax.f32 %v2097, 0.0
        %v3062 = vmax.f32 %v2288, 0.0
        %v3063 = vmax.f32 %v2290, 0.0
        %v3064 = vmax.f32 %v2481, 0.0
        %v3065 = vmax.f32 %v2483, 0.0
        %v3066 = vmax.f32 %v2674, 0.0
        %v3067 = vmax.f32 %v2676, 0.0
        %v3068 = vmax.f32 %v1327, 0.0
        %v3069 = vmax.f32 %v1329, 0.0
        %v3070 = vmax.f32 %v1520, 0.0
        %v3071 = vmax.f32 %v1522, 0.0
        %v3072 = vmax.f32 %v1713, 0.0
        %v3073 = vmax.f32 %v1715, 0.0
        %v3074 = vmax.f32 %v1906, 0.0
        %v3075 = vmax.f32 %v1908, 0.0
        %v3076 = vmax.f32 %v2099, 0.0
        %v3077 = vmax.f32 %v2101, 0.0
        %v3078 = vmax.f32 %v2292, 0.0
        %v3079 = vmax.f32 %v2294, 0.0
        %v3080 = vmax.f32 %v2485, 0.0
        %v3081 = vmax.f32 %v2487, 0.0
        %v3082 = vmax.f32 %v2678, 0.0
        %v3083 = vmax.f32 %v2680, 0.0
        %v3084 = vmax.f32 %v1333, 0.0
        %v3085 = vmax.f32 %v1335, 0.0
        %v3086 = vmax.f32 %v1526, 0.0
        %v3087 = vmax.f32 %v1528, 0.0
        %v3088 = vmax.f32 %v1719, 0.0
        %v3089 = vmax.f32 %v1721, 0.0
        %v3090 = vmax.f32 %v1912, 0.0
        %v3091 = vmax.f32 %v1914, 0.0
        %v3092 = vmax.f32 %v2105, 0.0
        %v3093 = vmax.f32 %v2107, 0.0
        %v3094 = vmax.f32 %v2298, 0.0
        %v3095 = vmax.f32 %v2300, 0.0
        %v3096 = vmax.f32 %v2491, 0.0
        %v3097 = vmax.f32 %v2493, 0.0
        %v3098 = vmax.f32 %v2684, 0.0
        %v3099 = vmax.f32 %v2686, 0.0
        %v3100 = vmax.f32 %v1337, 0.0
        %v3101 = vmax.f32 %v1339, 0.0
        %v3102 = vmax.f32 %v1530, 0.0
        %v3103 = vmax.f32 %v1532, 0.0
        %v3104 = vmax.f32 %v1723, 0.0
        %v3105 = vmax.f32 %v1725, 0.0
        %v3106 = vmax.f32 %v1916, 0.0
        %v3107 = vmax.f32 %v1918, 0.0
        %v3108 = vmax.f32 %v2109, 0.0
        %v3109 = vmax.f32 %v2111, 0.0
        %v3110 = vmax.f32 %v2302, 0.0
        %v3111 = vmax.f32 %v2304, 0.0
        %v3112 = vmax.f32 %v2495, 0.0
        %v3113 = vmax.f32 %v2497, 0.0
        %v3114 = vmax.f32 %v2688, 0.0
        %v3115 = vmax.f32 %v2690, 0.0
        %v3116 = vmax.f32 %v1343, 0.0
        %v3117 = vmax.f32 %v1345, 0.0
        %v3118 = vmax.f32 %v1536, 0.0
        %v3119 = vmax.f32 %v1538, 0.0
        %v3120 = vmax.f32 %v1729, 0.0
        %v3121 = vmax.f32 %v1731, 0.0
        %v3122 = vmax.f32 %v1922, 0.0
        %v3123 = vmax.f32 %v1924, 0.0
        %v3124 = vmax.f32 %v2115, 0.0
        %v3125 = vmax.f32 %v2117, 0.0
        %v3126 = vmax.f32 %v2308, 0.0
        %v3127 = vmax.f32 %v2310, 0.0
        %v3128 = vmax.f32 %v2501, 0.0
        %v3129 = vmax.f32 %v2503, 0.0
        %v3130 = vmax.f32 %v2694, 0.0
        %v3131 = vmax.f32 %v2696, 0.0
        %v3132 = vmax.f32 %v1347, 0.0
        %v3133 = vmax.f32 %v1349, 0.0
        %v3134 = vmax.f32 %v1540, 0.0
        %v3135 = vmax.f32 %v1542, 0.0
        %v3136 = vmax.f32 %v1733, 0.0
        %v3137 = vmax.f32 %v1735, 0.0
        %v3138 = vmax.f32 %v1926, 0.0
        %v3139 = vmax.f32 %v1928, 0.0
        %v3140 = vmax.f32 %v2119, 0.0
        %v3141 = vmax.f32 %v2121, 0.0
        %v3142 = vmax.f32 %v2312, 0.0
        %v3143 = vmax.f32 %v2314, 0.0
        %v3144 = vmax.f32 %v2505, 0.0
        %v3145 = vmax.f32 %v2507, 0.0
        %v3146 = vmax.f32 %v2698, 0.0
        %v3147 = vmax.f32 %v2700, 0.0
        %v3148 = vmax.f32 %v1353, 0.0
        %v3149 = vmax.f32 %v1355, 0.0
        %v3150 = vmax.f32 %v1546, 0.0
        %v3151 = vmax.f32 %v1548, 0.0
        %v3152 = vmax.f32 %v1739, 0.0
        %v3153 = vmax.f32 %v1741, 0.0
        %v3154 = vmax.f32 %v1932, 0.0
        %v3155 = vmax.f32 %v1934, 0.0
        %v3156 = vmax.f32 %v2125, 0.0
        %v3157 = vmax.f32 %v2127, 0.0
        %v3158 = vmax.f32 %v2318, 0.0
        %v3159 = vmax.f32 %v2320, 0.0
        %v3160 = vmax.f32 %v2511, 0.0
        %v3161 = vmax.f32 %v2513, 0.0
        %v3162 = vmax.f32 %v2704, 0.0
        %v3163 = vmax.f32 %v2706, 0.0
        %v3164 = vmax.f32 %v1357, 0.0
        %v3165 = vmax.f32 %v1359, 0.0
        %v3166 = vmax.f32 %v1550, 0.0
        %v3167 = vmax.f32 %v1552, 0.0
        %v3168 = vmax.f32 %v1743, 0.0
        %v3169 = vmax.f32 %v1745, 0.0
        %v3170 = vmax.f32 %v1936, 0.0
        %v3171 = vmax.f32 %v1938, 0.0
        %v3172 = vmax.f32 %v2129, 0.0
        %v3173 = vmax.f32 %v2131, 0.0
        %v3174 = vmax.f32 %v2322, 0.0
        %v3175 = vmax.f32 %v2324, 0.0
        %v3176 = vmax.f32 %v2515, 0.0
        %v3177 = vmax.f32 %v2517, 0.0
        %v3178 = vmax.f32 %v2708, 0.0
        %v3179 = vmax.f32 %v2710, 0.0
        %v3180 = vmax.f32 %v1363, 0.0
        %v3181 = vmax.f32 %v1365, 0.0
        %v3182 = vmax.f32 %v1556, 0.0
        %v3183 = vmax.f32 %v1558, 0.0
        %v3184 = vmax.f32 %v1749, 0.0
        %v3185 = vmax.f32 %v1751, 0.0
        %v3186 = vmax.f32 %v1942, 0.0
        %v3187 = vmax.f32 %v1944, 0.0
        %v3188 = vmax.f32 %v2135, 0.0
        %v3189 = vmax.f32 %v2137, 0.0
        %v3190 = vmax.f32 %v2328, 0.0
        %v3191 = vmax.f32 %v2330, 0.0
        %v3192 = vmax.f32 %v2521, 0.0
        %v3193 = vmax.f32 %v2523, 0.0
        %v3194 = vmax.f32 %v2714, 0.0
        %v3195 = vmax.f32 %v2716, 0.0
        %v3196 = vmax.f32 %v1367, 0.0
        %v3197 = vmax.f32 %v1369, 0.0
        %v3198 = vmax.f32 %v1560, 0.0
        %v3199 = vmax.f32 %v1562, 0.0
        %v3200 = vmax.f32 %v1753, 0.0
        %v3201 = vmax.f32 %v1755, 0.0
        %v3202 = vmax.f32 %v1946, 0.0
        %v3203 = vmax.f32 %v1948, 0.0
        %v3204 = vmax.f32 %v2139, 0.0
        %v3205 = vmax.f32 %v2141, 0.0
        %v3206 = vmax.f32 %v2332, 0.0
        %v3207 = vmax.f32 %v2334, 0.0
        %v3208 = vmax.f32 %v2525, 0.0
        %v3209 = vmax.f32 %v2527, 0.0
        %v3210 = vmax.f32 %v2718, 0.0
        %v3211 = vmax.f32 %v2720, 0.0
        %v3212 = vmax.f32 %v1373, 0.0
        %v3213 = vmax.f32 %v1375, 0.0
        %v3214 = vmax.f32 %v1566, 0.0
        %v3215 = vmax.f32 %v1568, 0.0
        %v3216 = vmax.f32 %v1759, 0.0
        %v3217 = vmax.f32 %v1761, 0.0
        %v3218 = vmax.f32 %v1952, 0.0
        %v3219 = vmax.f32 %v1954, 0.0
        %v3220 = vmax.f32 %v2145, 0.0
        %v3221 = vmax.f32 %v2147, 0.0
        %v3222 = vmax.f32 %v2338, 0.0
        %v3223 = vmax.f32 %v2340, 0.0
        %v3224 = vmax.f32 %v2531, 0.0
        %v3225 = vmax.f32 %v2533, 0.0
        %v3226 = vmax.f32 %v2724, 0.0
        %v3227 = vmax.f32 %v2726, 0.0
        %v3228 = vmax.f32 %v1377, 0.0
        %v3229 = vmax.f32 %v1379, 0.0
        %v3230 = vmax.f32 %v1570, 0.0
        %v3231 = vmax.f32 %v1572, 0.0
        %v3232 = vmax.f32 %v1763, 0.0
        %v3233 = vmax.f32 %v1765, 0.0
        %v3234 = vmax.f32 %v1956, 0.0
        %v3235 = vmax.f32 %v1958, 0.0
        %v3236 = vmax.f32 %v2149, 0.0
        %v3237 = vmax.f32 %v2151, 0.0
        %v3238 = vmax.f32 %v2342, 0.0
        %v3239 = vmax.f32 %v2344, 0.0
        %v3240 = vmax.f32 %v2535, 0.0
        %v3241 = vmax.f32 %v2537, 0.0
        %v3242 = vmax.f32 %v2728, 0.0
        %v3243 = vmax.f32 %v2730, 0.0
        %v3244 = vadd.f32 %v2732, %v2748
        %v3245 = vrot.slane %v3244, 4
        %v3246 = vadd.f32 %v3244, %v3245
        %v3247 = vrot.slane %v3246, 2
        %v3248 = vadd.f32 %v3246, %v3247
        %v3249 = vrot.slane %v3248, 1
        %v3250 = vadd.f32 %v3248, %v3249
        %v3251 = vadd.f32 %v2733, %v2749
        %v3252 = vrot.slane %v3251, 4
        %v3253 = vadd.f32 %v3251, %v3252
        %v3254 = vrot.slane %v3253, 2
        %v3255 = vadd.f32 %v3253, %v3254
        %v3256 = vrot.slane %v3255, 1
        %v3257 = vadd.f32 %v3255, %v3256
        %v3258 = vadd.f32 %v2734, %v2750
        %v3259 = vrot.slane %v3258, 4
        %v3260 = vadd.f32 %v3258, %v3259
        %v3261 = vrot.slane %v3260, 2
        %v3262 = vadd.f32 %v3260, %v3261
        %v3263 = vrot.slane %v3262, 1
        %v3264 = vadd.f32 %v3262, %v3263
        %v3265 = vadd.f32 %v2735, %v2751
        %v3266 = vrot.slane %v3265, 4
        %v3267 = vadd.f32 %v3265, %v3266
        %v3268 = vrot.slane %v3267, 2
        %v3269 = vadd.f32 %v3267, %v3268
        %v3270 = vrot.slane %v3269, 1
        %v3271 = vadd.f32 %v3269, %v3270
        %v3272 = vadd.f32 %v2736, %v2752
        %v3273 = vrot.slane %v3272, 4
        %v3274 = vadd.f32 %v3272, %v3273
        %v3275 = vrot.slane %v3274, 2
        %v3276 = vadd.f32 %v3274, %v3275
        %v3277 = vrot.slane %v3276, 1
        %v3278 = vadd.f32 %v3276, %v3277
        %v3279 = vadd.f32 %v2737, %v2753
        %v3280 = vrot.slane %v3279, 4
        %v3281 = vadd.f32 %v3279, %v3280
        %v3282 = vrot.slane %v3281, 2
        %v3283 = vadd.f32 %v3281, %v3282
        %v3284 = vrot.slane %v3283, 1
        %v3285 = vadd.f32 %v3283, %v3284
        %v3286 = vadd.f32 %v2738, %v2754
        %v3287 = vrot.slane %v3286, 4
        %v3288 = vadd.f32 %v3286, %v3287
        %v3289 = vrot.slane %v3288, 2
        %v3290 = vadd.f32 %v3288, %v3289
        %v3291 = vrot.slane %v3290, 1
        %v3292 = vadd.f32 %v3290, %v3291
        %v3293 = vadd.f32 %v2739, %v2755
        %v3294 = vrot.slane %v3293, 4
        %v3295 = vadd.f32 %v3293, %v3294
        %v3296 = vrot.slane %v3295, 2
        %v3297 = vadd.f32 %v3295, %v3296
        %v3298 = vrot.slane %v3297, 1
        %v3299 = vadd.f32 %v3297, %v3298
        %v3300 = vadd.f32 %v2740, %v2756
        %v3301 = vrot.slane %v3300, 4
        %v3302 = vadd.f32 %v3300, %v3301
        %v3303 = vrot.slane %v3302, 2
        %v3304 = vadd.f32 %v3302, %v3303
        %v3305 = vrot.slane %v3304, 1
        %v3306 = vadd.f32 %v3304, %v3305
        %v3307 = vadd.f32 %v2741, %v2757
        %v3308 = vrot.slane %v3307, 4
        %v3309 = vadd.f32 %v3307, %v3308
        %v3310 = vrot.slane %v3309, 2
        %v3311 = vadd.f32 %v3309, %v3310
        %v3312 = vrot.slane %v3311, 1
        %v3313 = vadd.f32 %v3311, %v3312
        %v3314 = vadd.f32 %v2742, %v2758
        %v3315 = vrot.slane %v3314, 4
        %v3316 = vadd.f32 %v3314, %v3315
        %v3317 = vrot.slane %v3316, 2
        %v3318 = vadd.f32 %v3316, %v3317
        %v3319 = vrot.slane %v3318, 1
        %v3320 = vadd.f32 %v3318, %v3319
        %v3321 = vadd.f32 %v2743, %v2759
        %v3322 = vrot.slane %v3321, 4
        %v3323 = vadd.f32 %v3321, %v3322
        %v3324 = vrot.slane %v3323, 2
        %v3325 = vadd.f32 %v3323, %v3324
        %v3326 = vrot.slane %v3325, 1
        %v3327 = vadd.f32 %v3325, %v3326
        %v3328 = vadd.f32 %v2744, %v2760
        %v3329 = vrot.slane %v3328, 4
        %v3330 = vadd.f32 %v3328, %v3329
        %v3331 = vrot.slane %v3330, 2
        %v3332 = vadd.f32 %v3330, %v3331
        %v3333 = vrot.slane %v3332, 1
        %v3334 = vadd.f32 %v3332, %v3333
        %v3335 = vadd.f32 %v2745, %v2761
        %v3336 = vrot.slane %v3335, 4
        %v3337 = vadd.f32 %v3335, %v3336
        %v3338 = vrot.slane %v3337, 2
        %v3339 = vadd.f32 %v3337, %v3338
        %v3340 = vrot.slane %v3339, 1
        %v3341 = vadd.f32 %v3339, %v3340
        %v3342 = vadd.f32 %v2746, %v2762
        %v3343 = vrot.slane %v3342, 4
        %v3344 = vadd.f32 %v3342, %v3343
        %v3345 = vrot.slane %v3344, 2
        %v3346 = vadd.f32 %v3344, %v3345
        %v3347 = vrot.slane %v3346, 1
        %v3348 = vadd.f32 %v3346, %v3347
        %v3349 = vadd.f32 %v2747, %v2763
        %v3350 = vrot.slane %v3349, 4
        %v3351 = vadd.f32 %v3349, %v3350
        %v3352 = vrot.slane %v3351, 2
        %v3353 = vadd.f32 %v3351, %v3352
        %v3354 = vrot.slane %v3353, 1
        %v3355 = vadd.f32 %v3353, %v3354
        %v3356 = vadd.f32 %v2764, %v2780
        %v3357 = vrot.slane %v3356, 4
        %v3358 = vadd.f32 %v3356, %v3357
        %v3359 = vrot.slane %v3358, 2
        %v3360 = vadd.f32 %v3358, %v3359
        %v3361 = vrot.slane %v3360, 1
        %v3362 = vadd.f32 %v3360, %v3361
        %v3363 = vadd.f32 %v2765, %v2781
        %v3364 = vrot.slane %v3363, 4
        %v3365 = vadd.f32 %v3363, %v3364
        %v3366 = vrot.slane %v3365, 2
        %v3367 = vadd.f32 %v3365, %v3366
        %v3368 = vrot.slane %v3367, 1
        %v3369 = vadd.f32 %v3367, %v3368
        %v3370 = vadd.f32 %v2766, %v2782
        %v3371 = vrot.slane %v3370, 4
        %v3372 = vadd.f32 %v3370, %v3371
        %v3373 = vrot.slane %v3372, 2
        %v3374 = vadd.f32 %v3372, %v3373
        %v3375 = vrot.slane %v3374, 1
        %v3376 = vadd.f32 %v3374, %v3375
        %v3377 = vadd.f32 %v2767, %v2783
        %v3378 = vrot.slane %v3377, 4
        %v3379 = vadd.f32 %v3377, %v3378
        %v3380 = vrot.slane %v3379, 2
        %v3381 = vadd.f32 %v3379, %v3380
        %v3382 = vrot.slane %v3381, 1
        %v3383 = vadd.f32 %v3381, %v3382
        %v3384 = vadd.f32 %v2768, %v2784
        %v3385 = vrot.slane %v3384, 4
        %v3386 = vadd.f32 %v3384, %v3385
        %v3387 = vrot.slane %v3386, 2
        %v3388 = vadd.f32 %v3386, %v3387
        %v3389 = vrot.slane %v3388, 1
        %v3390 = vadd.f32 %v3388, %v3389
        %v3391 = vadd.f32 %v2769, %v2785
        %v3392 = vrot.slane %v3391, 4
        %v3393 = vadd.f32 %v3391, %v3392
        %v3394 = vrot.slane %v3393, 2
        %v3395 = vadd.f32 %v3393, %v3394
        %v3396 = vrot.slane %v3395, 1
        %v3397 = vadd.f32 %v3395, %v3396
        %v3398 = vadd.f32 %v2770, %v2786
        %v3399 = vrot.slane %v3398, 4
        %v3400 = vadd.f32 %v3398, %v3399
        %v3401 = vrot.slane %v3400, 2
        %v3402 = vadd.f32 %v3400, %v3401
        %v3403 = vrot.slane %v3402, 1
        %v3404 = vadd.f32 %v3402, %v3403
        %v3405 = vadd.f32 %v2771, %v2787
        %v3406 = vrot.slane %v3405, 4
        %v3407 = vadd.f32 %v3405, %v3406
        %v3408 = vrot.slane %v3407, 2
        %v3409 = vadd.f32 %v3407, %v3408
        %v3410 = vrot.slane %v3409, 1
        %v3411 = vadd.f32 %v3409, %v3410
        %v3412 = vadd.f32 %v2772, %v2788
        %v3413 = vrot.slane %v3412, 4
        %v3414 = vadd.f32 %v3412, %v3413
        %v3415 = vrot.slane %v3414, 2
        %v3416 = vadd.f32 %v3414, %v3415
        %v3417 = vrot.slane %v3416, 1
        %v3418 = vadd.f32 %v3416, %v3417
        %v3419 = vadd.f32 %v2773, %v2789
        %v3420 = vrot.slane %v3419, 4
        %v3421 = vadd.f32 %v3419, %v3420
        %v3422 = vrot.slane %v3421, 2
        %v3423 = vadd.f32 %v3421, %v3422
        %v3424 = vrot.slane %v3423, 1
        %v3425 = vadd.f32 %v3423, %v3424
        %v3426 = vadd.f32 %v2774, %v2790
        %v3427 = vrot.slane %v3426, 4
        %v3428 = vadd.f32 %v3426, %v3427
        %v3429 = vrot.slane %v3428, 2
        %v3430 = vadd.f32 %v3428, %v3429
        %v3431 = vrot.slane %v3430, 1
        %v3432 = vadd.f32 %v3430, %v3431
        %v3433 = vadd.f32 %v2775, %v2791
        %v3434 = vrot.slane %v3433, 4
        %v3435 = vadd.f32 %v3433, %v3434
        %v3436 = vrot.slane %v3435, 2
        %v3437 = vadd.f32 %v3435, %v3436
        %v3438 = vrot.slane %v3437, 1
        %v3439 = vadd.f32 %v3437, %v3438
        %v3440 = vadd.f32 %v2776, %v2792
        %v3441 = vrot.slane %v3440, 4
        %v3442 = vadd.f32 %v3440, %v3441
        %v3443 = vrot.slane %v3442, 2
        %v3444 = vadd.f32 %v3442, %v3443
        %v3445 = vrot.slane %v3444, 1
        %v3446 = vadd.f32 %v3444, %v3445
        %v3447 = vadd.f32 %v2777, %v2793
        %v3448 = vrot.slane %v3447, 4
        %v3449 = vadd.f32 %v3447, %v3448
        %v3450 = vrot.slane %v3449, 2
        %v3451 = vadd.f32 %v3449, %v3450
        %v3452 = vrot.slane %v3451, 1
        %v3453 = vadd.f32 %v3451, %v3452
        %v3454 = vadd.f32 %v2778, %v2794
        %v3455 = vrot.slane %v3454, 4
        %v3456 = vadd.f32 %v3454, %v3455
        %v3457 = vrot.slane %v3456, 2
        %v3458 = vadd.f32 %v3456, %v3457
        %v3459 = vrot.slane %v3458, 1
        %v3460 = vadd.f32 %v3458, %v3459
        %v3461 = vadd.f32 %v2779, %v2795
        %v3462 = vrot.slane %v3461, 4
        %v3463 = vadd.f32 %v3461, %v3462
        %v3464 = vrot.slane %v3463, 2
        %v3465 = vadd.f32 %v3463, %v3464
        %v3466 = vrot.slane %v3465, 1
        %v3467 = vadd.f32 %v3465, %v3466
        %v3468 = vadd.f32 %v2796, %v2812
        %v3469 = vrot.slane %v3468, 4
        %v3470 = vadd.f32 %v3468, %v3469
        %v3471 = vrot.slane %v3470, 2
        %v3472 = vadd.f32 %v3470, %v3471
        %v3473 = vrot.slane %v3472, 1
        %v3474 = vadd.f32 %v3472, %v3473
        %v3475 = vadd.f32 %v2797, %v2813
        %v3476 = vrot.slane %v3475, 4
        %v3477 = vadd.f32 %v3475, %v3476
        %v3478 = vrot.slane %v3477, 2
        %v3479 = vadd.f32 %v3477, %v3478
        %v3480 = vrot.slane %v3479, 1
        %v3481 = vadd.f32 %v3479, %v3480
        %v3482 = vadd.f32 %v2798, %v2814
        %v3483 = vrot.slane %v3482, 4
        %v3484 = vadd.f32 %v3482, %v3483
        %v3485 = vrot.slane %v3484, 2
        %v3486 = vadd.f32 %v3484, %v3485
        %v3487 = vrot.slane %v3486, 1
        %v3488 = vadd.f32 %v3486, %v3487
        %v3489 = vadd.f32 %v2799, %v2815
        %v3490 = vrot.slane %v3489, 4
        %v3491 = vadd.f32 %v3489, %v3490
        %v3492 = vrot.slane %v3491, 2
        %v3493 = vadd.f32 %v3491, %v3492
        %v3494 = vrot.slane %v3493, 1
        %v3495 = vadd.f32 %v3493, %v3494
        %v3496 = vadd.f32 %v2800, %v2816
        %v3497 = vrot.slane %v3496, 4
        %v3498 = vadd.f32 %v3496, %v3497
        %v3499 = vrot.slane %v3498, 2
        %v3500 = vadd.f32 %v3498, %v3499
        %v3501 = vrot.slane %v3500, 1
        %v3502 = vadd.f32 %v3500, %v3501
        %v3503 = vadd.f32 %v2801, %v2817
        %v3504 = vrot.slane %v3503, 4
        %v3505 = vadd.f32 %v3503, %v3504
        %v3506 = vrot.slane %v3505, 2
        %v3507 = vadd.f32 %v3505, %v3506
        %v3508 = vrot.slane %v3507, 1
        %v3509 = vadd.f32 %v3507, %v3508
        %v3510 = vadd.f32 %v2802, %v2818
        %v3511 = vrot.slane %v3510, 4
        %v3512 = vadd.f32 %v3510, %v3511
        %v3513 = vrot.slane %v3512, 2
        %v3514 = vadd.f32 %v3512, %v3513
        %v3515 = vrot.slane %v3514, 1
        %v3516 = vadd.f32 %v3514, %v3515
        %v3517 = vadd.f32 %v2803, %v2819
        %v3518 = vrot.slane %v3517, 4
        %v3519 = vadd.f32 %v3517, %v3518
        %v3520 = vrot.slane %v3519, 2
        %v3521 = vadd.f32 %v3519, %v3520
        %v3522 = vrot.slane %v3521, 1
        %v3523 = vadd.f32 %v3521, %v3522
        %v3524 = vadd.f32 %v2804, %v2820
        %v3525 = vrot.slane %v3524, 4
        %v3526 = vadd.f32 %v3524, %v3525
        %v3527 = vrot.slane %v3526, 2
        %v3528 = vadd.f32 %v3526, %v3527
        %v3529 = vrot.slane %v3528, 1
        %v3530 = vadd.f32 %v3528, %v3529
        %v3531 = vadd.f32 %v2805, %v2821
        %v3532 = vrot.slane %v3531, 4
        %v3533 = vadd.f32 %v3531, %v3532
        %v3534 = vrot.slane %v3533, 2
        %v3535 = vadd.f32 %v3533, %v3534
        %v3536 = vrot.slane %v3535, 1
        %v3537 = vadd.f32 %v3535, %v3536
        %v3538 = vadd.f32 %v2806, %v2822
        %v3539 = vrot.slane %v3538, 4
        %v3540 = vadd.f32 %v3538, %v3539
        %v3541 = vrot.slane %v3540, 2
        %v3542 = vadd.f32 %v3540, %v3541
        %v3543 = vrot.slane %v3542, 1
        %v3544 = vadd.f32 %v3542, %v3543
        %v3545 = vadd.f32 %v2807, %v2823
        %v3546 = vrot.slane %v3545, 4
        %v3547 = vadd.f32 %v3545, %v3546
        %v3548 = vrot.slane %v3547, 2
        %v3549 = vadd.f32 %v3547, %v3548
        %v3550 = vrot.slane %v3549, 1
        %v3551 = vadd.f32 %v3549, %v3550
        %v3552 = vadd.f32 %v2808, %v2824
        %v3553 = vrot.slane %v3552, 4
        %v3554 = vadd.f32 %v3552, %v3553
        %v3555 = vrot.slane %v3554, 2
        %v3556 = vadd.f32 %v3554, %v3555
        %v3557 = vrot.slane %v3556, 1
        %v3558 = vadd.f32 %v3556, %v3557
        %v3559 = vadd.f32 %v2809, %v2825
        %v3560 = vrot.slane %v3559, 4
        %v3561 = vadd.f32 %v3559, %v3560
        %v3562 = vrot.slane %v3561, 2
        %v3563 = vadd.f32 %v3561, %v3562
        %v3564 = vrot.slane %v3563, 1
        %v3565 = vadd.f32 %v3563, %v3564
        %v3566 = vadd.f32 %v2810, %v2826
        %v3567 = vrot.slane %v3566, 4
        %v3568 = vadd.f32 %v3566, %v3567
        %v3569 = vrot.slane %v3568, 2
        %v3570 = vadd.f32 %v3568, %v3569
        %v3571 = vrot.slane %v3570, 1
        %v3572 = vadd.f32 %v3570, %v3571
        %v3573 = vadd.f32 %v2811, %v2827
        %v3574 = vrot.slane %v3573, 4
        %v3575 = vadd.f32 %v3573, %v3574
        %v3576 = vrot.slane %v3575, 2
        %v3577 = vadd.f32 %v3575, %v3576
        %v3578 = vrot.slane %v3577, 1
        %v3579 = vadd.f32 %v3577, %v3578
        %v3580 = vadd.f32 %v2828, %v2844
        %v3581 = vrot.slane %v3580, 4
        %v3582 = vadd.f32 %v3580, %v3581
        %v3583 = vrot.slane %v3582, 2
        %v3584 = vadd.f32 %v3582, %v3583
        %v3585 = vrot.slane %v3584, 1
        %v3586 = vadd.f32 %v3584, %v3585
        %v3587 = vadd.f32 %v2829, %v2845
        %v3588 = vrot.slane %v3587, 4
        %v3589 = vadd.f32 %v3587, %v3588
        %v3590 = vrot.slane %v3589, 2
        %v3591 = vadd.f32 %v3589, %v3590
        %v3592 = vrot.slane %v3591, 1
        %v3593 = vadd.f32 %v3591, %v3592
        %v3594 = vadd.f32 %v2830, %v2846
        %v3595 = vrot.slane %v3594, 4
        %v3596 = vadd.f32 %v3594, %v3595
        %v3597 = vrot.slane %v3596, 2
        %v3598 = vadd.f32 %v3596, %v3597
        %v3599 = vrot.slane %v3598, 1
        %v3600 = vadd.f32 %v3598, %v3599
        %v3601 = vadd.f32 %v2831, %v2847
        %v3602 = vrot.slane %v3601, 4
        %v3603 = vadd.f32 %v3601, %v3602
        %v3604 = vrot.slane %v3603, 2
        %v3605 = vadd.f32 %v3603, %v3604
        %v3606 = vrot.slane %v3605, 1
        %v3607 = vadd.f32 %v3605, %v3606
        %v3608 = vadd.f32 %v2832, %v2848
        %v3609 = vrot.slane %v3608, 4
        %v3610 = vadd.f32 %v3608, %v3609
        %v3611 = vrot.slane %v3610, 2
        %v3612 = vadd.f32 %v3610, %v3611
        %v3613 = vrot.slane %v3612, 1
        %v3614 = vadd.f32 %v3612, %v3613
        %v3615 = vadd.f32 %v2833, %v2849
        %v3616 = vrot.slane %v3615, 4
        %v3617 = vadd.f32 %v3615, %v3616
        %v3618 = vrot.slane %v3617, 2
        %v3619 = vadd.f32 %v3617, %v3618
        %v3620 = vrot.slane %v3619, 1
        %v3621 = vadd.f32 %v3619, %v3620
        %v3622 = vadd.f32 %v2834, %v2850
        %v3623 = vrot.slane %v3622, 4
        %v3624 = vadd.f32 %v3622, %v3623
        %v3625 = vrot.slane %v3624, 2
        %v3626 = vadd.f32 %v3624, %v3625
        %v3627 = vrot.slane %v3626, 1
        %v3628 = vadd.f32 %v3626, %v3627
        %v3629 = vadd.f32 %v2835, %v2851
        %v3630 = vrot.slane %v3629, 4
        %v3631 = vadd.f32 %v3629, %v3630
        %v3632 = vrot.slane %v3631, 2
        %v3633 = vadd.f32 %v3631, %v3632
        %v3634 = vrot.slane %v3633, 1
        %v3635 = vadd.f32 %v3633, %v3634
        %v3636 = vadd.f32 %v2836, %v2852
        %v3637 = vrot.slane %v3636, 4
        %v3638 = vadd.f32 %v3636, %v3637
        %v3639 = vrot.slane %v3638, 2
        %v3640 = vadd.f32 %v3638, %v3639
        %v3641 = vrot.slane %v3640, 1
        %v3642 = vadd.f32 %v3640, %v3641
        %v3643 = vadd.f32 %v2837, %v2853
        %v3644 = vrot.slane %v3643, 4
        %v3645 = vadd.f32 %v3643, %v3644
        %v3646 = vrot.slane %v3645, 2
        %v3647 = vadd.f32 %v3645, %v3646
        %v3648 = vrot.slane %v3647, 1
        %v3649 = vadd.f32 %v3647, %v3648
        %v3650 = vadd.f32 %v2838, %v2854
        %v3651 = vrot.slane %v3650, 4
        %v3652 = vadd.f32 %v3650, %v3651
        %v3653 = vrot.slane %v3652, 2
        %v3654 = vadd.f32 %v3652, %v3653
        %v3655 = vrot.slane %v3654, 1
        %v3656 = vadd.f32 %v3654, %v3655
        %v3657 = vadd.f32 %v2839, %v2855
        %v3658 = vrot.slane %v3657, 4
        %v3659 = vadd.f32 %v3657, %v3658
        %v3660 = vrot.slane %v3659, 2
        %v3661 = vadd.f32 %v3659, %v3660
        %v3662 = vrot.slane %v3661, 1
        %v3663 = vadd.f32 %v3661, %v3662
        %v3664 = vadd.f32 %v2840, %v2856
        %v3665 = vrot.slane %v3664, 4
        %v3666 = vadd.f32 %v3664, %v3665
        %v3667 = vrot.slane %v3666, 2
        %v3668 = vadd.f32 %v3666, %v3667
        %v3669 = vrot.slane %v3668, 1
        %v3670 = vadd.f32 %v3668, %v3669
        %v3671 = vadd.f32 %v2841, %v2857
        %v3672 = vrot.slane %v3671, 4
        %v3673 = vadd.f32 %v3671, %v3672
        %v3674 = vrot.slane %v3673, 2
        %v3675 = vadd.f32 %v3673, %v3674
        %v3676 = vrot.slane %v3675, 1
        %v3677 = vadd.f32 %v3675, %v3676
        %v3678 = vadd.f32 %v2842, %v2858
        %v3679 = vrot.slane %v3678, 4
        %v3680 = vadd.f32 %v3678, %v3679
        %v3681 = vrot.slane %v3680, 2
        %v3682 = vadd.f32 %v3680, %v3681
        %v3683 = vrot.slane %v3682, 1
        %v3684 = vadd.f32 %v3682, %v3683
        %v3685 = vadd.f32 %v2843, %v2859
        %v3686 = vrot.slane %v3685, 4
        %v3687 = vadd.f32 %v3685, %v3686
        %v3688 = vrot.slane %v3687, 2
        %v3689 = vadd.f32 %v3687, %v3688
        %v3690 = vrot.slane %v3689, 1
        %v3691 = vadd.f32 %v3689, %v3690
        %v3692 = vadd.f32 %v2860, %v2876
        %v3693 = vrot.slane %v3692, 4
        %v3694 = vadd.f32 %v3692, %v3693
        %v3695 = vrot.slane %v3694, 2
        %v3696 = vadd.f32 %v3694, %v3695
        %v3697 = vrot.slane %v3696, 1
        %v3698 = vadd.f32 %v3696, %v3697
        %v3699 = vadd.f32 %v2861, %v2877
        %v3700 = vrot.slane %v3699, 4
        %v3701 = vadd.f32 %v3699, %v3700
        %v3702 = vrot.slane %v3701, 2
        %v3703 = vadd.f32 %v3701, %v3702
        %v3704 = vrot.slane %v3703, 1
        %v3705 = vadd.f32 %v3703, %v3704
        %v3706 = vadd.f32 %v2862, %v2878
        %v3707 = vrot.slane %v3706, 4
        %v3708 = vadd.f32 %v3706, %v3707
        %v3709 = vrot.slane %v3708, 2
        %v3710 = vadd.f32 %v3708, %v3709
        %v3711 = vrot.slane %v3710, 1
        %v3712 = vadd.f32 %v3710, %v3711
        %v3713 = vadd.f32 %v2863, %v2879
        %v3714 = vrot.slane %v3713, 4
        %v3715 = vadd.f32 %v3713, %v3714
        %v3716 = vrot.slane %v3715, 2
        %v3717 = vadd.f32 %v3715, %v3716
        %v3718 = vrot.slane %v3717, 1
        %v3719 = vadd.f32 %v3717, %v3718
        %v3720 = vadd.f32 %v2864, %v2880
        %v3721 = vrot.slane %v3720, 4
        %v3722 = vadd.f32 %v3720, %v3721
        %v3723 = vrot.slane %v3722, 2
        %v3724 = vadd.f32 %v3722, %v3723
        %v3725 = vrot.slane %v3724, 1
        %v3726 = vadd.f32 %v3724, %v3725
        %v3727 = vadd.f32 %v2865, %v2881
        %v3728 = vrot.slane %v3727, 4
        %v3729 = vadd.f32 %v3727, %v3728
        %v3730 = vrot.slane %v3729, 2
        %v3731 = vadd.f32 %v3729, %v3730
        %v3732 = vrot.slane %v3731, 1
        %v3733 = vadd.f32 %v3731, %v3732
        %v3734 = vadd.f32 %v2866, %v2882
        %v3735 = vrot.slane %v3734, 4
        %v3736 = vadd.f32 %v3734, %v3735
        %v3737 = vrot.slane %v3736, 2
        %v3738 = vadd.f32 %v3736, %v3737
        %v3739 = vrot.slane %v3738, 1
        %v3740 = vadd.f32 %v3738, %v3739
        %v3741 = vadd.f32 %v2867, %v2883
        %v3742 = vrot.slane %v3741, 4
        %v3743 = vadd.f32 %v3741, %v3742
        %v3744 = vrot.slane %v3743, 2
        %v3745 = vadd.f32 %v3743, %v3744
        %v3746 = vrot.slane %v3745, 1
        %v3747 = vadd.f32 %v3745, %v3746
        %v3748 = vadd.f32 %v2868, %v2884
        %v3749 = vrot.slane %v3748, 4
        %v3750 = vadd.f32 %v3748, %v3749
        %v3751 = vrot.slane %v3750, 2
        %v3752 = vadd.f32 %v3750, %v3751
        %v3753 = vrot.slane %v3752, 1
        %v3754 = vadd.f32 %v3752, %v3753
        %v3755 = vadd.f32 %v2869, %v2885
        %v3756 = vrot.slane %v3755, 4
        %v3757 = vadd.f32 %v3755, %v3756
        %v3758 = vrot.slane %v3757, 2
        %v3759 = vadd.f32 %v3757, %v3758
        %v3760 = vrot.slane %v3759, 1
        %v3761 = vadd.f32 %v3759, %v3760
        %v3762 = vadd.f32 %v2870, %v2886
        %v3763 = vrot.slane %v3762, 4
        %v3764 = vadd.f32 %v3762, %v3763
        %v3765 = vrot.slane %v3764, 2
        %v3766 = vadd.f32 %v3764, %v3765
        %v3767 = vrot.slane %v3766, 1
        %v3768 = vadd.f32 %v3766, %v3767
        %v3769 = vadd.f32 %v2871, %v2887
        %v3770 = vrot.slane %v3769, 4
        %v3771 = vadd.f32 %v3769, %v3770
        %v3772 = vrot.slane %v3771, 2
        %v3773 = vadd.f32 %v3771, %v3772
        %v3774 = vrot.slane %v3773, 1
        %v3775 = vadd.f32 %v3773, %v3774
        %v3776 = vadd.f32 %v2872, %v2888
        %v3777 = vrot.slane %v3776, 4
        %v3778 = vadd.f32 %v3776, %v3777
        %v3779 = vrot.slane %v3778, 2
        %v3780 = vadd.f32 %v3778, %v3779
        %v3781 = vrot.slane %v3780, 1
        %v3782 = vadd.f32 %v3780, %v3781
        %v3783 = vadd.f32 %v2873, %v2889
        %v3784 = vrot.slane %v3783, 4
        %v3785 = vadd.f32 %v3783, %v3784
        %v3786 = vrot.slane %v3785, 2
        %v3787 = vadd.f32 %v3785, %v3786
        %v3788 = vrot.slane %v3787, 1
        %v3789 = vadd.f32 %v3787, %v3788
        %v3790 = vadd.f32 %v2874, %v2890
        %v3791 = vrot.slane %v3790, 4
        %v3792 = vadd.f32 %v3790, %v3791
        %v3793 = vrot.slane %v3792, 2
        %v3794 = vadd.f32 %v3792, %v3793
        %v3795 = vrot.slane %v3794, 1
        %v3796 = vadd.f32 %v3794, %v3795
        %v3797 = vadd.f32 %v2875, %v2891
        %v3798 = vrot.slane %v3797, 4
        %v3799 = vadd.f32 %v3797, %v3798
        %v3800 = vrot.slane %v3799, 2
        %v3801 = vadd.f32 %v3799, %v3800
        %v3802 = vrot.slane %v3801, 1
        %v3803 = vadd.f32 %v3801, %v3802
        %v3804 = vadd.f32 %v2892, %v2908
        %v3805 = vrot.slane %v3804, 4
        %v3806 = vadd.f32 %v3804, %v3805
        %v3807 = vrot.slane %v3806, 2
        %v3808 = vadd.f32 %v3806, %v3807
        %v3809 = vrot.slane %v3808, 1
        %v3810 = vadd.f32 %v3808, %v3809
        %v3811 = vadd.f32 %v2893, %v2909
        %v3812 = vrot.slane %v3811, 4
        %v3813 = vadd.f32 %v3811, %v3812
        %v3814 = vrot.slane %v3813, 2
        %v3815 = vadd.f32 %v3813, %v3814
        %v3816 = vrot.slane %v3815, 1
        %v3817 = vadd.f32 %v3815, %v3816
        %v3818 = vadd.f32 %v2894, %v2910
        %v3819 = vrot.slane %v3818, 4
        %v3820 = vadd.f32 %v3818, %v3819
        %v3821 = vrot.slane %v3820, 2
        %v3822 = vadd.f32 %v3820, %v3821
        %v3823 = vrot.slane %v3822, 1
        %v3824 = vadd.f32 %v3822, %v3823
        %v3825 = vadd.f32 %v2895, %v2911
        %v3826 = vrot.slane %v3825, 4
        %v3827 = vadd.f32 %v3825, %v3826
        %v3828 = vrot.slane %v3827, 2
        %v3829 = vadd.f32 %v3827, %v3828
        %v3830 = vrot.slane %v3829, 1
        %v3831 = vadd.f32 %v3829, %v3830
        %v3832 = vadd.f32 %v2896, %v2912
        %v3833 = vrot.slane %v3832, 4
        %v3834 = vadd.f32 %v3832, %v3833
        %v3835 = vrot.slane %v3834, 2
        %v3836 = vadd.f32 %v3834, %v3835
        %v3837 = vrot.slane %v3836, 1
        %v3838 = vadd.f32 %v3836, %v3837
        %v3839 = vadd.f32 %v2897, %v2913
        %v3840 = vrot.slane %v3839, 4
        %v3841 = vadd.f32 %v3839, %v3840
        %v3842 = vrot.slane %v3841, 2
        %v3843 = vadd.f32 %v3841, %v3842
        %v3844 = vrot.slane %v3843, 1
        %v3845 = vadd.f32 %v3843, %v3844
        %v3846 = vadd.f32 %v2898, %v2914
        %v3847 = vrot.slane %v3846, 4
        %v3848 = vadd.f32 %v3846, %v3847
        %v3849 = vrot.slane %v3848, 2
        %v3850 = vadd.f32 %v3848, %v3849
        %v3851 = vrot.slane %v3850, 1
        %v3852 = vadd.f32 %v3850, %v3851
        %v3853 = vadd.f32 %v2899, %v2915
        %v3854 = vrot.slane %v3853, 4
        %v3855 = vadd.f32 %v3853, %v3854
        %v3856 = vrot.slane %v3855, 2
        %v3857 = vadd.f32 %v3855, %v3856
        %v3858 = vrot.slane %v3857, 1
        %v3859 = vadd.f32 %v3857, %v3858
        %v3860 = vadd.f32 %v2900, %v2916
        %v3861 = vrot.slane %v3860, 4
        %v3862 = vadd.f32 %v3860, %v3861
        %v3863 = vrot.slane %v3862, 2
        %v3864 = vadd.f32 %v3862, %v3863
        %v3865 = vrot.slane %v3864, 1
        %v3866 = vadd.f32 %v3864, %v3865
        %v3867 = vadd.f32 %v2901, %v2917
        %v3868 = vrot.slane %v3867, 4
        %v3869 = vadd.f32 %v3867, %v3868
        %v3870 = vrot.slane %v3869, 2
        %v3871 = vadd.f32 %v3869, %v3870
        %v3872 = vrot.slane %v3871, 1
        %v3873 = vadd.f32 %v3871, %v3872
        %v3874 = vadd.f32 %v2902, %v2918
        %v3875 = vrot.slane %v3874, 4
        %v3876 = vadd.f32 %v3874, %v3875
        %v3877 = vrot.slane %v3876, 2
        %v3878 = vadd.f32 %v3876, %v3877
        %v3879 = vrot.slane %v3878, 1
        %v3880 = vadd.f32 %v3878, %v3879
        %v3881 = vadd.f32 %v2903, %v2919
        %v3882 = vrot.slane %v3881, 4
        %v3883 = vadd.f32 %v3881, %v3882
        %v3884 = vrot.slane %v3883, 2
        %v3885 = vadd.f32 %v3883, %v3884
        %v3886 = vrot.slane %v3885, 1
        %v3887 = vadd.f32 %v3885, %v3886
        %v3888 = vadd.f32 %v2904, %v2920
        %v3889 = vrot.slane %v3888, 4
        %v3890 = vadd.f32 %v3888, %v3889
        %v3891 = vrot.slane %v3890, 2
        %v3892 = vadd.f32 %v3890, %v3891
        %v3893 = vrot.slane %v3892, 1
        %v3894 = vadd.f32 %v3892, %v3893
        %v3895 = vadd.f32 %v2905, %v2921
        %v3896 = vrot.slane %v3895, 4
        %v3897 = vadd.f32 %v3895, %v3896
        %v3898 = vrot.slane %v3897, 2
        %v3899 = vadd.f32 %v3897, %v3898
        %v3900 = vrot.slane %v3899, 1
        %v3901 = vadd.f32 %v3899, %v3900
        %v3902 = vadd.f32 %v2906, %v2922
        %v3903 = vrot.slane %v3902, 4
        %v3904 = vadd.f32 %v3902, %v3903
        %v3905 = vrot.slane %v3904, 2
        %v3906 = vadd.f32 %v3904, %v3905
        %v3907 = vrot.slane %v3906, 1
        %v3908 = vadd.f32 %v3906, %v3907
        %v3909 = vadd.f32 %v2907, %v2923
        %v3910 = vrot.slane %v3909, 4
        %v3911 = vadd.f32 %v3909, %v3910
        %v3912 = vrot.slane %v3911, 2
        %v3913 = vadd.f32 %v3911, %v3912
        %v3914 = vrot.slane %v3913, 1
        %v3915 = vadd.f32 %v3913, %v3914
        %v3916 = vadd.f32 %v2924, %v2940
        %v3917 = vrot.slane %v3916, 4
        %v3918 = vadd.f32 %v3916, %v3917
        %v3919 = vrot.slane %v3918, 2
        %v3920 = vadd.f32 %v3918, %v3919
        %v3921 = vrot.slane %v3920, 1
        %v3922 = vadd.f32 %v3920, %v3921
        %v3923 = vadd.f32 %v2925, %v2941
        %v3924 = vrot.slane %v3923, 4
        %v3925 = vadd.f32 %v3923, %v3924
        %v3926 = vrot.slane %v3925, 2
        %v3927 = vadd.f32 %v3925, %v3926
        %v3928 = vrot.slane %v3927, 1
        %v3929 = vadd.f32 %v3927, %v3928
        %v3930 = vadd.f32 %v2926, %v2942
        %v3931 = vrot.slane %v3930, 4
        %v3932 = vadd.f32 %v3930, %v3931
        %v3933 = vrot.slane %v3932, 2
        %v3934 = vadd.f32 %v3932, %v3933
        %v3935 = vrot.slane %v3934, 1
        %v3936 = vadd.f32 %v3934, %v3935
        %v3937 = vadd.f32 %v2927, %v2943
        %v3938 = vrot.slane %v3937, 4
        %v3939 = vadd.f32 %v3937, %v3938
        %v3940 = vrot.slane %v3939, 2
        %v3941 = vadd.f32 %v3939, %v3940
        %v3942 = vrot.slane %v3941, 1
        %v3943 = vadd.f32 %v3941, %v3942
        %v3944 = vadd.f32 %v2928, %v2944
        %v3945 = vrot.slane %v3944, 4
        %v3946 = vadd.f32 %v3944, %v3945
        %v3947 = vrot.slane %v3946, 2
        %v3948 = vadd.f32 %v3946, %v3947
        %v3949 = vrot.slane %v3948, 1
        %v3950 = vadd.f32 %v3948, %v3949
        %v3951 = vadd.f32 %v2929, %v2945
        %v3952 = vrot.slane %v3951, 4
        %v3953 = vadd.f32 %v3951, %v3952
        %v3954 = vrot.slane %v3953, 2
        %v3955 = vadd.f32 %v3953, %v3954
        %v3956 = vrot.slane %v3955, 1
        %v3957 = vadd.f32 %v3955, %v3956
        %v3958 = vadd.f32 %v2930, %v2946
        %v3959 = vrot.slane %v3958, 4
        %v3960 = vadd.f32 %v3958, %v3959
        %v3961 = vrot.slane %v3960, 2
        %v3962 = vadd.f32 %v3960, %v3961
        %v3963 = vrot.slane %v3962, 1
        %v3964 = vadd.f32 %v3962, %v3963
        %v3965 = vadd.f32 %v2931, %v2947
        %v3966 = vrot.slane %v3965, 4
        %v3967 = vadd.f32 %v3965, %v3966
        %v3968 = vrot.slane %v3967, 2
        %v3969 = vadd.f32 %v3967, %v3968
        %v3970 = vrot.slane %v3969, 1
        %v3971 = vadd.f32 %v3969, %v3970
        %v3972 = vadd.f32 %v2932, %v2948
        %v3973 = vrot.slane %v3972, 4
        %v3974 = vadd.f32 %v3972, %v3973
        %v3975 = vrot.slane %v3974, 2
        %v3976 = vadd.f32 %v3974, %v3975
        %v3977 = vrot.slane %v3976, 1
        %v3978 = vadd.f32 %v3976, %v3977
        %v3979 = vadd.f32 %v2933, %v2949
        %v3980 = vrot.slane %v3979, 4
        %v3981 = vadd.f32 %v3979, %v3980
        %v3982 = vrot.slane %v3981, 2
        %v3983 = vadd.f32 %v3981, %v3982
        %v3984 = vrot.slane %v3983, 1
        %v3985 = vadd.f32 %v3983, %v3984
        %v3986 = vadd.f32 %v2934, %v2950
        %v3987 = vrot.slane %v3986, 4
        %v3988 = vadd.f32 %v3986, %v3987
        %v3989 = vrot.slane %v3988, 2
        %v3990 = vadd.f32 %v3988, %v3989
        %v3991 = vrot.slane %v3990, 1
        %v3992 = vadd.f32 %v3990, %v3991
        %v3993 = vadd.f32 %v2935, %v2951
        %v3994 = vrot.slane %v3993, 4
        %v3995 = vadd.f32 %v3993, %v3994
        %v3996 = vrot.slane %v3995, 2
        %v3997 = vadd.f32 %v3995, %v3996
        %v3998 = vrot.slane %v3997, 1
        %v3999 = vadd.f32 %v3997, %v3998
        %v4000 = vadd.f32 %v2936, %v2952
        %v4001 = vrot.slane %v4000, 4
        %v4002 = vadd.f32 %v4000, %v4001
        %v4003 = vrot.slane %v4002, 2
        %v4004 = vadd.f32 %v4002, %v4003
        %v4005 = vrot.slane %v4004, 1
        %v4006 = vadd.f32 %v4004, %v4005
        %v4007 = vadd.f32 %v2937, %v2953
        %v4008 = vrot.slane %v4007, 4
        %v4009 = vadd.f32 %v4007, %v4008
        %v4010 = vrot.slane %v4009, 2
        %v4011 = vadd.f32 %v4009, %v4010
        %v4012 = vrot.slane %v4011, 1
        %v4013 = vadd.f32 %v4011, %v4012
        %v4014 = vadd.f32 %v2938, %v2954
        %v4015 = vrot.slane %v4014, 4
        %v4016 = vadd.f32 %v4014, %v4015
        %v4017 = vrot.slane %v4016, 2
        %v4018 = vadd.f32 %v4016, %v4017
        %v4019 = vrot.slane %v4018, 1
        %v4020 = vadd.f32 %v4018, %v4019
        %v4021 = vadd.f32 %v2939, %v2955
        %v4022 = vrot.slane %v4021, 4
        %v4023 = vadd.f32 %v4021, %v4022
        %v4024 = vrot.slane %v4023, 2
        %v4025 = vadd.f32 %v4023, %v4024
        %v4026 = vrot.slane %v4025, 1
        %v4027 = vadd.f32 %v4025, %v4026
        %v4028 = vadd.f32 %v2956, %v2972
        %v4029 = vrot.slane %v4028, 4
        %v4030 = vadd.f32 %v4028, %v4029
        %v4031 = vrot.slane %v4030, 2
        %v4032 = vadd.f32 %v4030, %v4031
        %v4033 = vrot.slane %v4032, 1
        %v4034 = vadd.f32 %v4032, %v4033
        %v4035 = vadd.f32 %v2957, %v2973
        %v4036 = vrot.slane %v4035, 4
        %v4037 = vadd.f32 %v4035, %v4036
        %v4038 = vrot.slane %v4037, 2
        %v4039 = vadd.f32 %v4037, %v4038
        %v4040 = vrot.slane %v4039, 1
        %v4041 = vadd.f32 %v4039, %v4040
        %v4042 = vadd.f32 %v2958, %v2974
        %v4043 = vrot.slane %v4042, 4
        %v4044 = vadd.f32 %v4042, %v4043
        %v4045 = vrot.slane %v4044, 2
        %v4046 = vadd.f32 %v4044, %v4045
        %v4047 = vrot.slane %v4046, 1
        %v4048 = vadd.f32 %v4046, %v4047
        %v4049 = vadd.f32 %v2959, %v2975
        %v4050 = vrot.slane %v4049, 4
        %v4051 = vadd.f32 %v4049, %v4050
        %v4052 = vrot.slane %v4051, 2
        %v4053 = vadd.f32 %v4051, %v4052
        %v4054 = vrot.slane %v4053, 1
        %v4055 = vadd.f32 %v4053, %v4054
        %v4056 = vadd.f32 %v2960, %v2976
        %v4057 = vrot.slane %v4056, 4
        %v4058 = vadd.f32 %v4056, %v4057
        %v4059 = vrot.slane %v4058, 2
        %v4060 = vadd.f32 %v4058, %v4059
        %v4061 = vrot.slane %v4060, 1
        %v4062 = vadd.f32 %v4060, %v4061
        %v4063 = vadd.f32 %v2961, %v2977
        %v4064 = vrot.slane %v4063, 4
        %v4065 = vadd.f32 %v4063, %v4064
        %v4066 = vrot.slane %v4065, 2
        %v4067 = vadd.f32 %v4065, %v4066
        %v4068 = vrot.slane %v4067, 1
        %v4069 = vadd.f32 %v4067, %v4068
        %v4070 = vadd.f32 %v2962, %v2978
        %v4071 = vrot.slane %v4070, 4
        %v4072 = vadd.f32 %v4070, %v4071
        %v4073 = vrot.slane %v4072, 2
        %v4074 = vadd.f32 %v4072, %v4073
        %v4075 = vrot.slane %v4074, 1
        %v4076 = vadd.f32 %v4074, %v4075
        %v4077 = vadd.f32 %v2963, %v2979
        %v4078 = vrot.slane %v4077, 4
        %v4079 = vadd.f32 %v4077, %v4078
        %v4080 = vrot.slane %v4079, 2
        %v4081 = vadd.f32 %v4079, %v4080
        %v4082 = vrot.slane %v4081, 1
        %v4083 = vadd.f32 %v4081, %v4082
        %v4084 = vadd.f32 %v2964, %v2980
        %v4085 = vrot.slane %v4084, 4
        %v4086 = vadd.f32 %v4084, %v4085
        %v4087 = vrot.slane %v4086, 2
        %v4088 = vadd.f32 %v4086, %v4087
        %v4089 = vrot.slane %v4088, 1
        %v4090 = vadd.f32 %v4088, %v4089
        %v4091 = vadd.f32 %v2965, %v2981
        %v4092 = vrot.slane %v4091, 4
        %v4093 = vadd.f32 %v4091, %v4092
        %v4094 = vrot.slane %v4093, 2
        %v4095 = vadd.f32 %v4093, %v4094
        %v4096 = vrot.slane %v4095, 1
        %v4097 = vadd.f32 %v4095, %v4096
        %v4098 = vadd.f32 %v2966, %v2982
        %v4099 = vrot.slane %v4098, 4
        %v4100 = vadd.f32 %v4098, %v4099
        %v4101 = vrot.slane %v4100, 2
        %v4102 = vadd.f32 %v4100, %v4101
        %v4103 = vrot.slane %v4102, 1
        %v4104 = vadd.f32 %v4102, %v4103
        %v4105 = vadd.f32 %v2967, %v2983
        %v4106 = vrot.slane %v4105, 4
        %v4107 = vadd.f32 %v4105, %v4106
        %v4108 = vrot.slane %v4107, 2
        %v4109 = vadd.f32 %v4107, %v4108
        %v4110 = vrot.slane %v4109, 1
        %v4111 = vadd.f32 %v4109, %v4110
        %v4112 = vadd.f32 %v2968, %v2984
        %v4113 = vrot.slane %v4112, 4
        %v4114 = vadd.f32 %v4112, %v4113
        %v4115 = vrot.slane %v4114, 2
        %v4116 = vadd.f32 %v4114, %v4115
        %v4117 = vrot.slane %v4116, 1
        %v4118 = vadd.f32 %v4116, %v4117
        %v4119 = vadd.f32 %v2969, %v2985
        %v4120 = vrot.slane %v4119, 4
        %v4121 = vadd.f32 %v4119, %v4120
        %v4122 = vrot.slane %v4121, 2
        %v4123 = vadd.f32 %v4121, %v4122
        %v4124 = vrot.slane %v4123, 1
        %v4125 = vadd.f32 %v4123, %v4124
        %v4126 = vadd.f32 %v2970, %v2986
        %v4127 = vrot.slane %v4126, 4
        %v4128 = vadd.f32 %v4126, %v4127
        %v4129 = vrot.slane %v4128, 2
        %v4130 = vadd.f32 %v4128, %v4129
        %v4131 = vrot.slane %v4130, 1
        %v4132 = vadd.f32 %v4130, %v4131
        %v4133 = vadd.f32 %v2971, %v2987
        %v4134 = vrot.slane %v4133, 4
        %v4135 = vadd.f32 %v4133, %v4134
        %v4136 = vrot.slane %v4135, 2
        %v4137 = vadd.f32 %v4135, %v4136
        %v4138 = vrot.slane %v4137, 1
        %v4139 = vadd.f32 %v4137, %v4138
        %v4140 = vadd.f32 %v2988, %v3004
        %v4141 = vrot.slane %v4140, 4
        %v4142 = vadd.f32 %v4140, %v4141
        %v4143 = vrot.slane %v4142, 2
        %v4144 = vadd.f32 %v4142, %v4143
        %v4145 = vrot.slane %v4144, 1
        %v4146 = vadd.f32 %v4144, %v4145
        %v4147 = vadd.f32 %v2989, %v3005
        %v4148 = vrot.slane %v4147, 4
        %v4149 = vadd.f32 %v4147, %v4148
        %v4150 = vrot.slane %v4149, 2
        %v4151 = vadd.f32 %v4149, %v4150
        %v4152 = vrot.slane %v4151, 1
        %v4153 = vadd.f32 %v4151, %v4152
        %v4154 = vadd.f32 %v2990, %v3006
        %v4155 = vrot.slane %v4154, 4
        %v4156 = vadd.f32 %v4154, %v4155
        %v4157 = vrot.slane %v4156, 2
        %v4158 = vadd.f32 %v4156, %v4157
        %v4159 = vrot.slane %v4158, 1
        %v4160 = vadd.f32 %v4158, %v4159
        %v4161 = vadd.f32 %v2991, %v3007
        %v4162 = vrot.slane %v4161, 4
        %v4163 = vadd.f32 %v4161, %v4162
        %v4164 = vrot.slane %v4163, 2
        %v4165 = vadd.f32 %v4163, %v4164
        %v4166 = vrot.slane %v4165, 1
        %v4167 = vadd.f32 %v4165, %v4166
        %v4168 = vadd.f32 %v2992, %v3008
        %v4169 = vrot.slane %v4168, 4
        %v4170 = vadd.f32 %v4168, %v4169
        %v4171 = vrot.slane %v4170, 2
        %v4172 = vadd.f32 %v4170, %v4171
        %v4173 = vrot.slane %v4172, 1
        %v4174 = vadd.f32 %v4172, %v4173
        %v4175 = vadd.f32 %v2993, %v3009
        %v4176 = vrot.slane %v4175, 4
        %v4177 = vadd.f32 %v4175, %v4176
        %v4178 = vrot.slane %v4177, 2
        %v4179 = vadd.f32 %v4177, %v4178
        %v4180 = vrot.slane %v4179, 1
        %v4181 = vadd.f32 %v4179, %v4180
        %v4182 = vadd.f32 %v2994, %v3010
        %v4183 = vrot.slane %v4182, 4
        %v4184 = vadd.f32 %v4182, %v4183
        %v4185 = vrot.slane %v4184, 2
        %v4186 = vadd.f32 %v4184, %v4185
        %v4187 = vrot.slane %v4186, 1
        %v4188 = vadd.f32 %v4186, %v4187
        %v4189 = vadd.f32 %v2995, %v3011
        %v4190 = vrot.slane %v4189, 4
        %v4191 = vadd.f32 %v4189, %v4190
        %v4192 = vrot.slane %v4191, 2
        %v4193 = vadd.f32 %v4191, %v4192
        %v4194 = vrot.slane %v4193, 1
        %v4195 = vadd.f32 %v4193, %v4194
        %v4196 = vadd.f32 %v2996, %v3012
        %v4197 = vrot.slane %v4196, 4
        %v4198 = vadd.f32 %v4196, %v4197
        %v4199 = vrot.slane %v4198, 2
        %v4200 = vadd.f32 %v4198, %v4199
        %v4201 = vrot.slane %v4200, 1
        %v4202 = vadd.f32 %v4200, %v4201
        %v4203 = vadd.f32 %v2997, %v3013
        %v4204 = vrot.slane %v4203, 4
        %v4205 = vadd.f32 %v4203, %v4204
        %v4206 = vrot.slane %v4205, 2
        %v4207 = vadd.f32 %v4205, %v4206
        %v4208 = vrot.slane %v4207, 1
        %v4209 = vadd.f32 %v4207, %v4208
        %v4210 = vadd.f32 %v2998, %v3014
        %v4211 = vrot.slane %v4210, 4
        %v4212 = vadd.f32 %v4210, %v4211
        %v4213 = vrot.slane %v4212, 2
        %v4214 = vadd.f32 %v4212, %v4213
        %v4215 = vrot.slane %v4214, 1
        %v4216 = vadd.f32 %v4214, %v4215
        %v4217 = vadd.f32 %v2999, %v3015
        %v4218 = vrot.slane %v4217, 4
        %v4219 = vadd.f32 %v4217, %v4218
        %v4220 = vrot.slane %v4219, 2
        %v4221 = vadd.f32 %v4219, %v4220
        %v4222 = vrot.slane %v4221, 1
        %v4223 = vadd.f32 %v4221, %v4222
        %v4224 = vadd.f32 %v3000, %v3016
        %v4225 = vrot.slane %v4224, 4
        %v4226 = vadd.f32 %v4224, %v4225
        %v4227 = vrot.slane %v4226, 2
        %v4228 = vadd.f32 %v4226, %v4227
        %v4229 = vrot.slane %v4228, 1
        %v4230 = vadd.f32 %v4228, %v4229
        %v4231 = vadd.f32 %v3001, %v3017
        %v4232 = vrot.slane %v4231, 4
        %v4233 = vadd.f32 %v4231, %v4232
        %v4234 = vrot.slane %v4233, 2
        %v4235 = vadd.f32 %v4233, %v4234
        %v4236 = vrot.slane %v4235, 1
        %v4237 = vadd.f32 %v4235, %v4236
        %v4238 = vadd.f32 %v3002, %v3018
        %v4239 = vrot.slane %v4238, 4
        %v4240 = vadd.f32 %v4238, %v4239
        %v4241 = vrot.slane %v4240, 2
        %v4242 = vadd.f32 %v4240, %v4241
        %v4243 = vrot.slane %v4242, 1
        %v4244 = vadd.f32 %v4242, %v4243
        %v4245 = vadd.f32 %v3003, %v3019
        %v4246 = vrot.slane %v4245, 4
        %v4247 = vadd.f32 %v4245, %v4246
        %v4248 = vrot.slane %v4247, 2
        %v4249 = vadd.f32 %v4247, %v4248
        %v4250 = vrot.slane %v4249, 1
        %v4251 = vadd.f32 %v4249, %v4250
        %v4252 = vadd.f32 %v3020, %v3036
        %v4253 = vrot.slane %v4252, 4
        %v4254 = vadd.f32 %v4252, %v4253
        %v4255 = vrot.slane %v4254, 2
        %v4256 = vadd.f32 %v4254, %v4255
        %v4257 = vrot.slane %v4256, 1
        %v4258 = vadd.f32 %v4256, %v4257
        %v4259 = vadd.f32 %v3021, %v3037
        %v4260 = vrot.slane %v4259, 4
        %v4261 = vadd.f32 %v4259, %v4260
        %v4262 = vrot.slane %v4261, 2
        %v4263 = vadd.f32 %v4261, %v4262
        %v4264 = vrot.slane %v4263, 1
        %v4265 = vadd.f32 %v4263, %v4264
        %v4266 = vadd.f32 %v3022, %v3038
        %v4267 = vrot.slane %v4266, 4
        %v4268 = vadd.f32 %v4266, %v4267
        %v4269 = vrot.slane %v4268, 2
        %v4270 = vadd.f32 %v4268, %v4269
        %v4271 = vrot.slane %v4270, 1
        %v4272 = vadd.f32 %v4270, %v4271
        %v4273 = vadd.f32 %v3023, %v3039
        %v4274 = vrot.slane %v4273, 4
        %v4275 = vadd.f32 %v4273, %v4274
        %v4276 = vrot.slane %v4275, 2
        %v4277 = vadd.f32 %v4275, %v4276
        %v4278 = vrot.slane %v4277, 1
        %v4279 = vadd.f32 %v4277, %v4278
        %v4280 = vadd.f32 %v3024, %v3040
        %v4281 = vrot.slane %v4280, 4
        %v4282 = vadd.f32 %v4280, %v4281
        %v4283 = vrot.slane %v4282, 2
        %v4284 = vadd.f32 %v4282, %v4283
        %v4285 = vrot.slane %v4284, 1
        %v4286 = vadd.f32 %v4284, %v4285
        %v4287 = vadd.f32 %v3025, %v3041
        %v4288 = vrot.slane %v4287, 4
        %v4289 = vadd.f32 %v4287, %v4288
        %v4290 = vrot.slane %v4289, 2
        %v4291 = vadd.f32 %v4289, %v4290
        %v4292 = vrot.slane %v4291, 1
        %v4293 = vadd.f32 %v4291, %v4292
        %v4294 = vadd.f32 %v3026, %v3042
        %v4295 = vrot.slane %v4294, 4
        %v4296 = vadd.f32 %v4294, %v4295
        %v4297 = vrot.slane %v4296, 2
        %v4298 = vadd.f32 %v4296, %v4297
        %v4299 = vrot.slane %v4298, 1
        %v4300 = vadd.f32 %v4298, %v4299
        %v4301 = vadd.f32 %v3027, %v3043
        %v4302 = vrot.slane %v4301, 4
        %v4303 = vadd.f32 %v4301, %v4302
        %v4304 = vrot.slane %v4303, 2
        %v4305 = vadd.f32 %v4303, %v4304
        %v4306 = vrot.slane %v4305, 1
        %v4307 = vadd.f32 %v4305, %v4306
        %v4308 = vadd.f32 %v3028, %v3044
        %v4309 = vrot.slane %v4308, 4
        %v4310 = vadd.f32 %v4308, %v4309
        %v4311 = vrot.slane %v4310, 2
        %v4312 = vadd.f32 %v4310, %v4311
        %v4313 = vrot.slane %v4312, 1
        %v4314 = vadd.f32 %v4312, %v4313
        %v4315 = vadd.f32 %v3029, %v3045
        %v4316 = vrot.slane %v4315, 4
        %v4317 = vadd.f32 %v4315, %v4316
        %v4318 = vrot.slane %v4317, 2
        %v4319 = vadd.f32 %v4317, %v4318
        %v4320 = vrot.slane %v4319, 1
        %v4321 = vadd.f32 %v4319, %v4320
        %v4322 = vadd.f32 %v3030, %v3046
        %v4323 = vrot.slane %v4322, 4
        %v4324 = vadd.f32 %v4322, %v4323
        %v4325 = vrot.slane %v4324, 2
        %v4326 = vadd.f32 %v4324, %v4325
        %v4327 = vrot.slane %v4326, 1
        %v4328 = vadd.f32 %v4326, %v4327
        %v4329 = vadd.f32 %v3031, %v3047
        %v4330 = vrot.slane %v4329, 4
        %v4331 = vadd.f32 %v4329, %v4330
        %v4332 = vrot.slane %v4331, 2
        %v4333 = vadd.f32 %v4331, %v4332
        %v4334 = vrot.slane %v4333, 1
        %v4335 = vadd.f32 %v4333, %v4334
        %v4336 = vadd.f32 %v3032, %v3048
        %v4337 = vrot.slane %v4336, 4
        %v4338 = vadd.f32 %v4336, %v4337
        %v4339 = vrot.slane %v4338, 2
        %v4340 = vadd.f32 %v4338, %v4339
        %v4341 = vrot.slane %v4340, 1
        %v4342 = vadd.f32 %v4340, %v4341
        %v4343 = vadd.f32 %v3033, %v3049
        %v4344 = vrot.slane %v4343, 4
        %v4345 = vadd.f32 %v4343, %v4344
        %v4346 = vrot.slane %v4345, 2
        %v4347 = vadd.f32 %v4345, %v4346
        %v4348 = vrot.slane %v4347, 1
        %v4349 = vadd.f32 %v4347, %v4348
        %v4350 = vadd.f32 %v3034, %v3050
        %v4351 = vrot.slane %v4350, 4
        %v4352 = vadd.f32 %v4350, %v4351
        %v4353 = vrot.slane %v4352, 2
        %v4354 = vadd.f32 %v4352, %v4353
        %v4355 = vrot.slane %v4354, 1
        %v4356 = vadd.f32 %v4354, %v4355
        %v4357 = vadd.f32 %v3035, %v3051
        %v4358 = vrot.slane %v4357, 4
        %v4359 = vadd.f32 %v4357, %v4358
        %v4360 = vrot.slane %v4359, 2
        %v4361 = vadd.f32 %v4359, %v4360
        %v4362 = vrot.slane %v4361, 1
        %v4363 = vadd.f32 %v4361, %v4362
        %v4364 = vadd.f32 %v3052, %v3068
        %v4365 = vrot.slane %v4364, 4
        %v4366 = vadd.f32 %v4364, %v4365
        %v4367 = vrot.slane %v4366, 2
        %v4368 = vadd.f32 %v4366, %v4367
        %v4369 = vrot.slane %v4368, 1
        %v4370 = vadd.f32 %v4368, %v4369
        %v4371 = vadd.f32 %v3053, %v3069
        %v4372 = vrot.slane %v4371, 4
        %v4373 = vadd.f32 %v4371, %v4372
        %v4374 = vrot.slane %v4373, 2
        %v4375 = vadd.f32 %v4373, %v4374
        %v4376 = vrot.slane %v4375, 1
        %v4377 = vadd.f32 %v4375, %v4376
        %v4378 = vadd.f32 %v3054, %v3070
        %v4379 = vrot.slane %v4378, 4
        %v4380 = vadd.f32 %v4378, %v4379
        %v4381 = vrot.slane %v4380, 2
        %v4382 = vadd.f32 %v4380, %v4381
        %v4383 = vrot.slane %v4382, 1
        %v4384 = vadd.f32 %v4382, %v4383
        %v4385 = vadd.f32 %v3055, %v3071
        %v4386 = vrot.slane %v4385, 4
        %v4387 = vadd.f32 %v4385, %v4386
        %v4388 = vrot.slane %v4387, 2
        %v4389 = vadd.f32 %v4387, %v4388
        %v4390 = vrot.slane %v4389, 1
        %v4391 = vadd.f32 %v4389, %v4390
        %v4392 = vadd.f32 %v3056, %v3072
        %v4393 = vrot.slane %v4392, 4
        %v4394 = vadd.f32 %v4392, %v4393
        %v4395 = vrot.slane %v4394, 2
        %v4396 = vadd.f32 %v4394, %v4395
        %v4397 = vrot.slane %v4396, 1
        %v4398 = vadd.f32 %v4396, %v4397
        %v4399 = vadd.f32 %v3057, %v3073
        %v4400 = vrot.slane %v4399, 4
        %v4401 = vadd.f32 %v4399, %v4400
        %v4402 = vrot.slane %v4401, 2
        %v4403 = vadd.f32 %v4401, %v4402
        %v4404 = vrot.slane %v4403, 1
        %v4405 = vadd.f32 %v4403, %v4404
        %v4406 = vadd.f32 %v3058, %v3074
        %v4407 = vrot.slane %v4406, 4
        %v4408 = vadd.f32 %v4406, %v4407
        %v4409 = vrot.slane %v4408, 2
        %v4410 = vadd.f32 %v4408, %v4409
        %v4411 = vrot.slane %v4410, 1
        %v4412 = vadd.f32 %v4410, %v4411
        %v4413 = vadd.f32 %v3059, %v3075
        %v4414 = vrot.slane %v4413, 4
        %v4415 = vadd.f32 %v4413, %v4414
        %v4416 = vrot.slane %v4415, 2
        %v4417 = vadd.f32 %v4415, %v4416
        %v4418 = vrot.slane %v4417, 1
        %v4419 = vadd.f32 %v4417, %v4418
        %v4420 = vadd.f32 %v3060, %v3076
        %v4421 = vrot.slane %v4420, 4
        %v4422 = vadd.f32 %v4420, %v4421
        %v4423 = vrot.slane %v4422, 2
        %v4424 = vadd.f32 %v4422, %v4423
        %v4425 = vrot.slane %v4424, 1
        %v4426 = vadd.f32 %v4424, %v4425
        %v4427 = vadd.f32 %v3061, %v3077
        %v4428 = vrot.slane %v4427, 4
        %v4429 = vadd.f32 %v4427, %v4428
        %v4430 = vrot.slane %v4429, 2
        %v4431 = vadd.f32 %v4429, %v4430
        %v4432 = vrot.slane %v4431, 1
        %v4433 = vadd.f32 %v4431, %v4432
        %v4434 = vadd.f32 %v3062, %v3078
        %v4435 = vrot.slane %v4434, 4
        %v4436 = vadd.f32 %v4434, %v4435
        %v4437 = vrot.slane %v4436, 2
        %v4438 = vadd.f32 %v4436, %v4437
        %v4439 = vrot.slane %v4438, 1
        %v4440 = vadd.f32 %v4438, %v4439
        %v4441 = vadd.f32 %v3063, %v3079
        %v4442 = vrot.slane %v4441, 4
        %v4443 = vadd.f32 %v4441, %v4442
        %v4444 = vrot.slane %v4443, 2
        %v4445 = vadd.f32 %v4443, %v4444
        %v4446 = vrot.slane %v4445, 1
        %v4447 = vadd.f32 %v4445, %v4446
        %v4448 = vadd.f32 %v3064, %v3080
        %v4449 = vrot.slane %v4448, 4
        %v4450 = vadd.f32 %v4448, %v4449
        %v4451 = vrot.slane %v4450, 2
        %v4452 = vadd.f32 %v4450, %v4451
        %v4453 = vrot.slane %v4452, 1
        %v4454 = vadd.f32 %v4452, %v4453
        %v4455 = vadd.f32 %v3065, %v3081
        %v4456 = vrot.slane %v4455, 4
        %v4457 = vadd.f32 %v4455, %v4456
        %v4458 = vrot.slane %v4457, 2
        %v4459 = vadd.f32 %v4457, %v4458
        %v4460 = vrot.slane %v4459, 1
        %v4461 = vadd.f32 %v4459, %v4460
        %v4462 = vadd.f32 %v3066, %v3082
        %v4463 = vrot.slane %v4462, 4
        %v4464 = vadd.f32 %v4462, %v4463
        %v4465 = vrot.slane %v4464, 2
        %v4466 = vadd.f32 %v4464, %v4465
        %v4467 = vrot.slane %v4466, 1
        %v4468 = vadd.f32 %v4466, %v4467
        %v4469 = vadd.f32 %v3067, %v3083
        %v4470 = vrot.slane %v4469, 4
        %v4471 = vadd.f32 %v4469, %v4470
        %v4472 = vrot.slane %v4471, 2
        %v4473 = vadd.f32 %v4471, %v4472
        %v4474 = vrot.slane %v4473, 1
        %v4475 = vadd.f32 %v4473, %v4474
        %v4476 = vadd.f32 %v3084, %v3100
        %v4477 = vrot.slane %v4476, 4
        %v4478 = vadd.f32 %v4476, %v4477
        %v4479 = vrot.slane %v4478, 2
        %v4480 = vadd.f32 %v4478, %v4479
        %v4481 = vrot.slane %v4480, 1
        %v4482 = vadd.f32 %v4480, %v4481
        %v4483 = vadd.f32 %v3085, %v3101
        %v4484 = vrot.slane %v4483, 4
        %v4485 = vadd.f32 %v4483, %v4484
        %v4486 = vrot.slane %v4485, 2
        %v4487 = vadd.f32 %v4485, %v4486
        %v4488 = vrot.slane %v4487, 1
        %v4489 = vadd.f32 %v4487, %v4488
        %v4490 = vadd.f32 %v3086, %v3102
        %v4491 = vrot.slane %v4490, 4
        %v4492 = vadd.f32 %v4490, %v4491
        %v4493 = vrot.slane %v4492, 2
        %v4494 = vadd.f32 %v4492, %v4493
        %v4495 = vrot.slane %v4494, 1
        %v4496 = vadd.f32 %v4494, %v4495
        %v4497 = vadd.f32 %v3087, %v3103
        %v4498 = vrot.slane %v4497, 4
        %v4499 = vadd.f32 %v4497, %v4498
        %v4500 = vrot.slane %v4499, 2
        %v4501 = vadd.f32 %v4499, %v4500
        %v4502 = vrot.slane %v4501, 1
        %v4503 = vadd.f32 %v4501, %v4502
        %v4504 = vadd.f32 %v3088, %v3104
        %v4505 = vrot.slane %v4504, 4
        %v4506 = vadd.f32 %v4504, %v4505
        %v4507 = vrot.slane %v4506, 2
        %v4508 = vadd.f32 %v4506, %v4507
        %v4509 = vrot.slane %v4508, 1
        %v4510 = vadd.f32 %v4508, %v4509
        %v4511 = vadd.f32 %v3089, %v3105
        %v4512 = vrot.slane %v4511, 4
        %v4513 = vadd.f32 %v4511, %v4512
        %v4514 = vrot.slane %v4513, 2
        %v4515 = vadd.f32 %v4513, %v4514
        %v4516 = vrot.slane %v4515, 1
        %v4517 = vadd.f32 %v4515, %v4516
        %v4518 = vadd.f32 %v3090, %v3106
        %v4519 = vrot.slane %v4518, 4
        %v4520 = vadd.f32 %v4518, %v4519
        %v4521 = vrot.slane %v4520, 2
        %v4522 = vadd.f32 %v4520, %v4521
        %v4523 = vrot.slane %v4522, 1
        %v4524 = vadd.f32 %v4522, %v4523
        %v4525 = vadd.f32 %v3091, %v3107
        %v4526 = vrot.slane %v4525, 4
        %v4527 = vadd.f32 %v4525, %v4526
        %v4528 = vrot.slane %v4527, 2
        %v4529 = vadd.f32 %v4527, %v4528
        %v4530 = vrot.slane %v4529, 1
        %v4531 = vadd.f32 %v4529, %v4530
        %v4532 = vadd.f32 %v3092, %v3108
        %v4533 = vrot.slane %v4532, 4
        %v4534 = vadd.f32 %v4532, %v4533
        %v4535 = vrot.slane %v4534, 2
        %v4536 = vadd.f32 %v4534, %v4535
        %v4537 = vrot.slane %v4536, 1
        %v4538 = vadd.f32 %v4536, %v4537
        %v4539 = vadd.f32 %v3093, %v3109
        %v4540 = vrot.slane %v4539, 4
        %v4541 = vadd.f32 %v4539, %v4540
        %v4542 = vrot.slane %v4541, 2
        %v4543 = vadd.f32 %v4541, %v4542
        %v4544 = vrot.slane %v4543, 1
        %v4545 = vadd.f32 %v4543, %v4544
        %v4546 = vadd.f32 %v3094, %v3110
        %v4547 = vrot.slane %v4546, 4
        %v4548 = vadd.f32 %v4546, %v4547
        %v4549 = vrot.slane %v4548, 2
        %v4550 = vadd.f32 %v4548, %v4549
        %v4551 = vrot.slane %v4550, 1
        %v4552 = vadd.f32 %v4550, %v4551
        %v4553 = vadd.f32 %v3095, %v3111
        %v4554 = vrot.slane %v4553, 4
        %v4555 = vadd.f32 %v4553, %v4554
        %v4556 = vrot.slane %v4555, 2
        %v4557 = vadd.f32 %v4555, %v4556
        %v4558 = vrot.slane %v4557, 1
        %v4559 = vadd.f32 %v4557, %v4558
        %v4560 = vadd.f32 %v3096, %v3112
        %v4561 = vrot.slane %v4560, 4
        %v4562 = vadd.f32 %v4560, %v4561
        %v4563 = vrot.slane %v4562, 2
        %v4564 = vadd.f32 %v4562, %v4563
        %v4565 = vrot.slane %v4564, 1
        %v4566 = vadd.f32 %v4564, %v4565
        %v4567 = vadd.f32 %v3097, %v3113
        %v4568 = vrot.slane %v4567, 4
        %v4569 = vadd.f32 %v4567, %v4568
        %v4570 = vrot.slane %v4569, 2
        %v4571 = vadd.f32 %v4569, %v4570
        %v4572 = vrot.slane %v4571, 1
        %v4573 = vadd.f32 %v4571, %v4572
        %v4574 = vadd.f32 %v3098, %v3114
        %v4575 = vrot.slane %v4574, 4
        %v4576 = vadd.f32 %v4574, %v4575
        %v4577 = vrot.slane %v4576, 2
        %v4578 = vadd.f32 %v4576, %v4577
        %v4579 = vrot.slane %v4578, 1
        %v4580 = vadd.f32 %v4578, %v4579
        %v4581 = vadd.f32 %v3099, %v3115
        %v4582 = vrot.slane %v4581, 4
        %v4583 = vadd.f32 %v4581, %v4582
        %v4584 = vrot.slane %v4583, 2
        %v4585 = vadd.f32 %v4583, %v4584
        %v4586 = vrot.slane %v4585, 1
        %v4587 = vadd.f32 %v4585, %v4586
        %v4588 = vadd.f32 %v3116, %v3132
        %v4589 = vrot.slane %v4588, 4
        %v4590 = vadd.f32 %v4588, %v4589
        %v4591 = vrot.slane %v4590, 2
        %v4592 = vadd.f32 %v4590, %v4591
        %v4593 = vrot.slane %v4592, 1
        %v4594 = vadd.f32 %v4592, %v4593
        %v4595 = vadd.f32 %v3117, %v3133
        %v4596 = vrot.slane %v4595, 4
        %v4597 = vadd.f32 %v4595, %v4596
        %v4598 = vrot.slane %v4597, 2
        %v4599 = vadd.f32 %v4597, %v4598
        %v4600 = vrot.slane %v4599, 1
        %v4601 = vadd.f32 %v4599, %v4600
        %v4602 = vadd.f32 %v3118, %v3134
        %v4603 = vrot.slane %v4602, 4
        %v4604 = vadd.f32 %v4602, %v4603
        %v4605 = vrot.slane %v4604, 2
        %v4606 = vadd.f32 %v4604, %v4605
        %v4607 = vrot.slane %v4606, 1
        %v4608 = vadd.f32 %v4606, %v4607
        %v4609 = vadd.f32 %v3119, %v3135
        %v4610 = vrot.slane %v4609, 4
        %v4611 = vadd.f32 %v4609, %v4610
        %v4612 = vrot.slane %v4611, 2
        %v4613 = vadd.f32 %v4611, %v4612
        %v4614 = vrot.slane %v4613, 1
        %v4615 = vadd.f32 %v4613, %v4614
        %v4616 = vadd.f32 %v3120, %v3136
        %v4617 = vrot.slane %v4616, 4
        %v4618 = vadd.f32 %v4616, %v4617
        %v4619 = vrot.slane %v4618, 2
        %v4620 = vadd.f32 %v4618, %v4619
        %v4621 = vrot.slane %v4620, 1
        %v4622 = vadd.f32 %v4620, %v4621
        %v4623 = vadd.f32 %v3121, %v3137
        %v4624 = vrot.slane %v4623, 4
        %v4625 = vadd.f32 %v4623, %v4624
        %v4626 = vrot.slane %v4625, 2
        %v4627 = vadd.f32 %v4625, %v4626
        %v4628 = vrot.slane %v4627, 1
        %v4629 = vadd.f32 %v4627, %v4628
        %v4630 = vadd.f32 %v3122, %v3138
        %v4631 = vrot.slane %v4630, 4
        %v4632 = vadd.f32 %v4630, %v4631
        %v4633 = vrot.slane %v4632, 2
        %v4634 = vadd.f32 %v4632, %v4633
        %v4635 = vrot.slane %v4634, 1
        %v4636 = vadd.f32 %v4634, %v4635
        %v4637 = vadd.f32 %v3123, %v3139
        %v4638 = vrot.slane %v4637, 4
        %v4639 = vadd.f32 %v4637, %v4638
        %v4640 = vrot.slane %v4639, 2
        %v4641 = vadd.f32 %v4639, %v4640
        %v4642 = vrot.slane %v4641, 1
        %v4643 = vadd.f32 %v4641, %v4642
        %v4644 = vadd.f32 %v3124, %v3140
        %v4645 = vrot.slane %v4644, 4
        %v4646 = vadd.f32 %v4644, %v4645
        %v4647 = vrot.slane %v4646, 2
        %v4648 = vadd.f32 %v4646, %v4647
        %v4649 = vrot.slane %v4648, 1
        %v4650 = vadd.f32 %v4648, %v4649
        %v4651 = vadd.f32 %v3125, %v3141
        %v4652 = vrot.slane %v4651, 4
        %v4653 = vadd.f32 %v4651, %v4652
        %v4654 = vrot.slane %v4653, 2
        %v4655 = vadd.f32 %v4653, %v4654
        %v4656 = vrot.slane %v4655, 1
        %v4657 = vadd.f32 %v4655, %v4656
        %v4658 = vadd.f32 %v3126, %v3142
        %v4659 = vrot.slane %v4658, 4
        %v4660 = vadd.f32 %v4658, %v4659
        %v4661 = vrot.slane %v4660, 2
        %v4662 = vadd.f32 %v4660, %v4661
        %v4663 = vrot.slane %v4662, 1
        %v4664 = vadd.f32 %v4662, %v4663
        %v4665 = vadd.f32 %v3127, %v3143
        %v4666 = vrot.slane %v4665, 4
        %v4667 = vadd.f32 %v4665, %v4666
        %v4668 = vrot.slane %v4667, 2
        %v4669 = vadd.f32 %v4667, %v4668
        %v4670 = vrot.slane %v4669, 1
        %v4671 = vadd.f32 %v4669, %v4670
        %v4672 = vadd.f32 %v3128, %v3144
        %v4673 = vrot.slane %v4672, 4
        %v4674 = vadd.f32 %v4672, %v4673
        %v4675 = vrot.slane %v4674, 2
        %v4676 = vadd.f32 %v4674, %v4675
        %v4677 = vrot.slane %v4676, 1
        %v4678 = vadd.f32 %v4676, %v4677
        %v4679 = vadd.f32 %v3129, %v3145
        %v4680 = vrot.slane %v4679, 4
        %v4681 = vadd.f32 %v4679, %v4680
        %v4682 = vrot.slane %v4681, 2
        %v4683 = vadd.f32 %v4681, %v4682
        %v4684 = vrot.slane %v4683, 1
        %v4685 = vadd.f32 %v4683, %v4684
        %v4686 = vadd.f32 %v3130, %v3146
        %v4687 = vrot.slane %v4686, 4
        %v4688 = vadd.f32 %v4686, %v4687
        %v4689 = vrot.slane %v4688, 2
        %v4690 = vadd.f32 %v4688, %v4689
        %v4691 = vrot.slane %v4690, 1
        %v4692 = vadd.f32 %v4690, %v4691
        %v4693 = vadd.f32 %v3131, %v3147
        %v4694 = vrot.slane %v4693, 4
        %v4695 = vadd.f32 %v4693, %v4694
        %v4696 = vrot.slane %v4695, 2
        %v4697 = vadd.f32 %v4695, %v4696
        %v4698 = vrot.slane %v4697, 1
        %v4699 = vadd.f32 %v4697, %v4698
        %v4700 = vadd.f32 %v3148, %v3164
        %v4701 = vrot.slane %v4700, 4
        %v4702 = vadd.f32 %v4700, %v4701
        %v4703 = vrot.slane %v4702, 2
        %v4704 = vadd.f32 %v4702, %v4703
        %v4705 = vrot.slane %v4704, 1
        %v4706 = vadd.f32 %v4704, %v4705
        %v4707 = vadd.f32 %v3149, %v3165
        %v4708 = vrot.slane %v4707, 4
        %v4709 = vadd.f32 %v4707, %v4708
        %v4710 = vrot.slane %v4709, 2
        %v4711 = vadd.f32 %v4709, %v4710
        %v4712 = vrot.slane %v4711, 1
        %v4713 = vadd.f32 %v4711, %v4712
        %v4714 = vadd.f32 %v3150, %v3166
        %v4715 = vrot.slane %v4714, 4
        %v4716 = vadd.f32 %v4714, %v4715
        %v4717 = vrot.slane %v4716, 2
        %v4718 = vadd.f32 %v4716, %v4717
        %v4719 = vrot.slane %v4718, 1
        %v4720 = vadd.f32 %v4718, %v4719
        %v4721 = vadd.f32 %v3151, %v3167
        %v4722 = vrot.slane %v4721, 4
        %v4723 = vadd.f32 %v4721, %v4722
        %v4724 = vrot.slane %v4723, 2
        %v4725 = vadd.f32 %v4723, %v4724
        %v4726 = vrot.slane %v4725, 1
        %v4727 = vadd.f32 %v4725, %v4726
        %v4728 = vadd.f32 %v3152, %v3168
        %v4729 = vrot.slane %v4728, 4
        %v4730 = vadd.f32 %v4728, %v4729
        %v4731 = vrot.slane %v4730, 2
        %v4732 = vadd.f32 %v4730, %v4731
        %v4733 = vrot.slane %v4732, 1
        %v4734 = vadd.f32 %v4732, %v4733
        %v4735 = vadd.f32 %v3153, %v3169
        %v4736 = vrot.slane %v4735, 4
        %v4737 = vadd.f32 %v4735, %v4736
        %v4738 = vrot.slane %v4737, 2
        %v4739 = vadd.f32 %v4737, %v4738
        %v4740 = vrot.slane %v4739, 1
        %v4741 = vadd.f32 %v4739, %v4740
        %v4742 = vadd.f32 %v3154, %v3170
        %v4743 = vrot.slane %v4742, 4
        %v4744 = vadd.f32 %v4742, %v4743
        %v4745 = vrot.slane %v4744, 2
        %v4746 = vadd.f32 %v4744, %v4745
        %v4747 = vrot.slane %v4746, 1
        %v4748 = vadd.f32 %v4746, %v4747
        %v4749 = vadd.f32 %v3155, %v3171
        %v4750 = vrot.slane %v4749, 4
        %v4751 = vadd.f32 %v4749, %v4750
        %v4752 = vrot.slane %v4751, 2
        %v4753 = vadd.f32 %v4751, %v4752
        %v4754 = vrot.slane %v4753, 1
        %v4755 = vadd.f32 %v4753, %v4754
        %v4756 = vadd.f32 %v3156, %v3172
        %v4757 = vrot.slane %v4756, 4
        %v4758 = vadd.f32 %v4756, %v4757
        %v4759 = vrot.slane %v4758, 2
        %v4760 = vadd.f32 %v4758, %v4759
        %v4761 = vrot.slane %v4760, 1
        %v4762 = vadd.f32 %v4760, %v4761
        %v4763 = vadd.f32 %v3157, %v3173
        %v4764 = vrot.slane %v4763, 4
        %v4765 = vadd.f32 %v4763, %v4764
        %v4766 = vrot.slane %v4765, 2
        %v4767 = vadd.f32 %v4765, %v4766
        %v4768 = vrot.slane %v4767, 1
        %v4769 = vadd.f32 %v4767, %v4768
        %v4770 = vadd.f32 %v3158, %v3174
        %v4771 = vrot.slane %v4770, 4
        %v4772 = vadd.f32 %v4770, %v4771
        %v4773 = vrot.slane %v4772, 2
        %v4774 = vadd.f32 %v4772, %v4773
        %v4775 = vrot.slane %v4774, 1
        %v4776 = vadd.f32 %v4774, %v4775
        %v4777 = vadd.f32 %v3159, %v3175
        %v4778 = vrot.slane %v4777, 4
        %v4779 = vadd.f32 %v4777, %v4778
        %v4780 = vrot.slane %v4779, 2
        %v4781 = vadd.f32 %v4779, %v4780
        %v4782 = vrot.slane %v4781, 1
        %v4783 = vadd.f32 %v4781, %v4782
        %v4784 = vadd.f32 %v3160, %v3176
        %v4785 = vrot.slane %v4784, 4
        %v4786 = vadd.f32 %v4784, %v4785
        %v4787 = vrot.slane %v4786, 2
        %v4788 = vadd.f32 %v4786, %v4787
        %v4789 = vrot.slane %v4788, 1
        %v4790 = vadd.f32 %v4788, %v4789
        %v4791 = vadd.f32 %v3161, %v3177
        %v4792 = vrot.slane %v4791, 4
        %v4793 = vadd.f32 %v4791, %v4792
        %v4794 = vrot.slane %v4793, 2
        %v4795 = vadd.f32 %v4793, %v4794
        %v4796 = vrot.slane %v4795, 1
        %v4797 = vadd.f32 %v4795, %v4796
        %v4798 = vadd.f32 %v3162, %v3178
        %v4799 = vrot.slane %v4798, 4
        %v4800 = vadd.f32 %v4798, %v4799
        %v4801 = vrot.slane %v4800, 2
        %v4802 = vadd.f32 %v4800, %v4801
        %v4803 = vrot.slane %v4802, 1
        %v4804 = vadd.f32 %v4802, %v4803
        %v4805 = vadd.f32 %v3163, %v3179
        %v4806 = vrot.slane %v4805, 4
        %v4807 = vadd.f32 %v4805, %v4806
        %v4808 = vrot.slane %v4807, 2
        %v4809 = vadd.f32 %v4807, %v4808
        %v4810 = vrot.slane %v4809, 1
        %v4811 = vadd.f32 %v4809, %v4810
        %v4812 = vadd.f32 %v3180, %v3196
        %v4813 = vrot.slane %v4812, 4
        %v4814 = vadd.f32 %v4812, %v4813
        %v4815 = vrot.slane %v4814, 2
        %v4816 = vadd.f32 %v4814, %v4815
        %v4817 = vrot.slane %v4816, 1
        %v4818 = vadd.f32 %v4816, %v4817
        %v4819 = vadd.f32 %v3181, %v3197
        %v4820 = vrot.slane %v4819, 4
        %v4821 = vadd.f32 %v4819, %v4820
        %v4822 = vrot.slane %v4821, 2
        %v4823 = vadd.f32 %v4821, %v4822
        %v4824 = vrot.slane %v4823, 1
        %v4825 = vadd.f32 %v4823, %v4824
        %v4826 = vadd.f32 %v3182, %v3198
        %v4827 = vrot.slane %v4826, 4
        %v4828 = vadd.f32 %v4826, %v4827
        %v4829 = vrot.slane %v4828, 2
        %v4830 = vadd.f32 %v4828, %v4829
        %v4831 = vrot.slane %v4830, 1
        %v4832 = vadd.f32 %v4830, %v4831
        %v4833 = vadd.f32 %v3183, %v3199
        %v4834 = vrot.slane %v4833, 4
        %v4835 = vadd.f32 %v4833, %v4834
        %v4836 = vrot.slane %v4835, 2
        %v4837 = vadd.f32 %v4835, %v4836
        %v4838 = vrot.slane %v4837, 1
        %v4839 = vadd.f32 %v4837, %v4838
        %v4840 = vadd.f32 %v3184, %v3200
        %v4841 = vrot.slane %v4840, 4
        %v4842 = vadd.f32 %v4840, %v4841
        %v4843 = vrot.slane %v4842, 2
        %v4844 = vadd.f32 %v4842, %v4843
        %v4845 = vrot.slane %v4844, 1
        %v4846 = vadd.f32 %v4844, %v4845
        %v4847 = vadd.f32 %v3185, %v3201
        %v4848 = vrot.slane %v4847, 4
        %v4849 = vadd.f32 %v4847, %v4848
        %v4850 = vrot.slane %v4849, 2
        %v4851 = vadd.f32 %v4849, %v4850
        %v4852 = vrot.slane %v4851, 1
        %v4853 = vadd.f32 %v4851, %v4852
        %v4854 = vadd.f32 %v3186, %v3202
        %v4855 = vrot.slane %v4854, 4
        %v4856 = vadd.f32 %v4854, %v4855
        %v4857 = vrot.slane %v4856, 2
        %v4858 = vadd.f32 %v4856, %v4857
        %v4859 = vrot.slane %v4858, 1
        %v4860 = vadd.f32 %v4858, %v4859
        %v4861 = vadd.f32 %v3187, %v3203
        %v4862 = vrot.slane %v4861, 4
        %v4863 = vadd.f32 %v4861, %v4862
        %v4864 = vrot.slane %v4863, 2
        %v4865 = vadd.f32 %v4863, %v4864
        %v4866 = vrot.slane %v4865, 1
        %v4867 = vadd.f32 %v4865, %v4866
        %v4868 = vadd.f32 %v3188, %v3204
        %v4869 = vrot.slane %v4868, 4
        %v4870 = vadd.f32 %v4868, %v4869
        %v4871 = vrot.slane %v4870, 2
        %v4872 = vadd.f32 %v4870, %v4871
        %v4873 = vrot.slane %v4872, 1
        %v4874 = vadd.f32 %v4872, %v4873
        %v4875 = vadd.f32 %v3189, %v3205
        %v4876 = vrot.slane %v4875, 4
        %v4877 = vadd.f32 %v4875, %v4876
        %v4878 = vrot.slane %v4877, 2
        %v4879 = vadd.f32 %v4877, %v4878
        %v4880 = vrot.slane %v4879, 1
        %v4881 = vadd.f32 %v4879, %v4880
        %v4882 = vadd.f32 %v3190, %v3206
        %v4883 = vrot.slane %v4882, 4
        %v4884 = vadd.f32 %v4882, %v4883
        %v4885 = vrot.slane %v4884, 2
        %v4886 = vadd.f32 %v4884, %v4885
        %v4887 = vrot.slane %v4886, 1
        %v4888 = vadd.f32 %v4886, %v4887
        %v4889 = vadd.f32 %v3191, %v3207
        %v4890 = vrot.slane %v4889, 4
        %v4891 = vadd.f32 %v4889, %v4890
        %v4892 = vrot.slane %v4891, 2
        %v4893 = vadd.f32 %v4891, %v4892
        %v4894 = vrot.slane %v4893, 1
        %v4895 = vadd.f32 %v4893, %v4894
        %v4896 = vadd.f32 %v3192, %v3208
        %v4897 = vrot.slane %v4896, 4
        %v4898 = vadd.f32 %v4896, %v4897
        %v4899 = vrot.slane %v4898, 2
        %v4900 = vadd.f32 %v4898, %v4899
        %v4901 = vrot.slane %v4900, 1
        %v4902 = vadd.f32 %v4900, %v4901
        %v4903 = vadd.f32 %v3193, %v3209
        %v4904 = vrot.slane %v4903, 4
        %v4905 = vadd.f32 %v4903, %v4904
        %v4906 = vrot.slane %v4905, 2
        %v4907 = vadd.f32 %v4905, %v4906
        %v4908 = vrot.slane %v4907, 1
        %v4909 = vadd.f32 %v4907, %v4908
        %v4910 = vadd.f32 %v3194, %v3210
        %v4911 = vrot.slane %v4910, 4
        %v4912 = vadd.f32 %v4910, %v4911
        %v4913 = vrot.slane %v4912, 2
        %v4914 = vadd.f32 %v4912, %v4913
        %v4915 = vrot.slane %v4914, 1
        %v4916 = vadd.f32 %v4914, %v4915
        %v4917 = vadd.f32 %v3195, %v3211
        %v4918 = vrot.slane %v4917, 4
        %v4919 = vadd.f32 %v4917, %v4918
        %v4920 = vrot.slane %v4919, 2
        %v4921 = vadd.f32 %v4919, %v4920
        %v4922 = vrot.slane %v4921, 1
        %v4923 = vadd.f32 %v4921, %v4922
        %v4924 = vadd.f32 %v3212, %v3228
        %v4925 = vrot.slane %v4924, 4
        %v4926 = vadd.f32 %v4924, %v4925
        %v4927 = vrot.slane %v4926, 2
        %v4928 = vadd.f32 %v4926, %v4927
        %v4929 = vrot.slane %v4928, 1
        %v4930 = vadd.f32 %v4928, %v4929
        %v4931 = vadd.f32 %v3213, %v3229
        %v4932 = vrot.slane %v4931, 4
        %v4933 = vadd.f32 %v4931, %v4932
        %v4934 = vrot.slane %v4933, 2
        %v4935 = vadd.f32 %v4933, %v4934
        %v4936 = vrot.slane %v4935, 1
        %v4937 = vadd.f32 %v4935, %v4936
        %v4938 = vadd.f32 %v3214, %v3230
        %v4939 = vrot.slane %v4938, 4
        %v4940 = vadd.f32 %v4938, %v4939
        %v4941 = vrot.slane %v4940, 2
        %v4942 = vadd.f32 %v4940, %v4941
        %v4943 = vrot.slane %v4942, 1
        %v4944 = vadd.f32 %v4942, %v4943
        %v4945 = vadd.f32 %v3215, %v3231
        %v4946 = vrot.slane %v4945, 4
        %v4947 = vadd.f32 %v4945, %v4946
        %v4948 = vrot.slane %v4947, 2
        %v4949 = vadd.f32 %v4947, %v4948
        %v4950 = vrot.slane %v4949, 1
        %v4951 = vadd.f32 %v4949, %v4950
        %v4952 = vadd.f32 %v3216, %v3232
        %v4953 = vrot.slane %v4952, 4
        %v4954 = vadd.f32 %v4952, %v4953
        %v4955 = vrot.slane %v4954, 2
        %v4956 = vadd.f32 %v4954, %v4955
        %v4957 = vrot.slane %v4956, 1
        %v4958 = vadd.f32 %v4956, %v4957
        %v4959 = vadd.f32 %v3217, %v3233
        %v4960 = vrot.slane %v4959, 4
        %v4961 = vadd.f32 %v4959, %v4960
        %v4962 = vrot.slane %v4961, 2
        %v4963 = vadd.f32 %v4961, %v4962
        %v4964 = vrot.slane %v4963, 1
        %v4965 = vadd.f32 %v4963, %v4964
        %v4966 = vadd.f32 %v3218, %v3234
        %v4967 = vrot.slane %v4966, 4
        %v4968 = vadd.f32 %v4966, %v4967
        %v4969 = vrot.slane %v4968, 2
        %v4970 = vadd.f32 %v4968, %v4969
        %v4971 = vrot.slane %v4970, 1
        %v4972 = vadd.f32 %v4970, %v4971
        %v4973 = vadd.f32 %v3219, %v3235
        %v4974 = vrot.slane %v4973, 4
        %v4975 = vadd.f32 %v4973, %v4974
        %v4976 = vrot.slane %v4975, 2
        %v4977 = vadd.f32 %v4975, %v4976
        %v4978 = vrot.slane %v4977, 1
        %v4979 = vadd.f32 %v4977, %v4978
        %v4980 = vadd.f32 %v3220, %v3236
        %v4981 = vrot.slane %v4980, 4
        %v4982 = vadd.f32 %v4980, %v4981
        %v4983 = vrot.slane %v4982, 2
        %v4984 = vadd.f32 %v4982, %v4983
        %v4985 = vrot.slane %v4984, 1
        %v4986 = vadd.f32 %v4984, %v4985
        %v4987 = vadd.f32 %v3221, %v3237
        %v4988 = vrot.slane %v4987, 4
        %v4989 = vadd.f32 %v4987, %v4988
        %v4990 = vrot.slane %v4989, 2
        %v4991 = vadd.f32 %v4989, %v4990
        %v4992 = vrot.slane %v4991, 1
        %v4993 = vadd.f32 %v4991, %v4992
        %v4994 = vadd.f32 %v3222, %v3238
        %v4995 = vrot.slane %v4994, 4
        %v4996 = vadd.f32 %v4994, %v4995
        %v4997 = vrot.slane %v4996, 2
        %v4998 = vadd.f32 %v4996, %v4997
        %v4999 = vrot.slane %v4998, 1
        %v5000 = vadd.f32 %v4998, %v4999
        %v5001 = vadd.f32 %v3223, %v3239
        %v5002 = vrot.slane %v5001, 4
        %v5003 = vadd.f32 %v5001, %v5002
        %v5004 = vrot.slane %v5003, 2
        %v5005 = vadd.f32 %v5003, %v5004
        %v5006 = vrot.slane %v5005, 1
        %v5007 = vadd.f32 %v5005, %v5006
        %v5008 = vadd.f32 %v3224, %v3240
        %v5009 = vrot.slane %v5008, 4
        %v5010 = vadd.f32 %v5008, %v5009
        %v5011 = vrot.slane %v5010, 2
        %v5012 = vadd.f32 %v5010, %v5011
        %v5013 = vrot.slane %v5012, 1
        %v5014 = vadd.f32 %v5012, %v5013
        %v5015 = vadd.f32 %v3225, %v3241
        %v5016 = vrot.slane %v5015, 4
        %v5017 = vadd.f32 %v5015, %v5016
        %v5018 = vrot.slane %v5017, 2
        %v5019 = vadd.f32 %v5017, %v5018
        %v5020 = vrot.slane %v5019, 1
        %v5021 = vadd.f32 %v5019, %v5020
        %v5022 = vadd.f32 %v3226, %v3242
        %v5023 = vrot.slane %v5022, 4
        %v5024 = vadd.f32 %v5022, %v5023
        %v5025 = vrot.slane %v5024, 2
        %v5026 = vadd.f32 %v5024, %v5025
        %v5027 = vrot.slane %v5026, 1
        %v5028 = vadd.f32 %v5026, %v5027
        %v5029 = vadd.f32 %v3227, %v3243
        %v5030 = vrot.slane %v5029, 4
        %v5031 = vadd.f32 %v5029, %v5030
        %v5032 = vrot.slane %v5031, 2
        %v5033 = vadd.f32 %v5031, %v5032
        %v5034 = vrot.slane %v5033, 1
        %v5035 = vadd.f32 %v5033, %v5034
        %v5036 = vrcp.pop 16.0
        %v5037 = vmul.f32 %v3250, %v5036
        %v5038 = vmul.f32 %v3257, %v5036
        %v5039 = vmul.f32 %v3264, %v5036
        %v5040 = vmul.f32 %v3271, %v5036
        %v5041 = vmul.f32 %v3278, %v5036
        %v5042 = vmul.f32 %v3285, %v5036
        %v5043 = vmul.f32 %v3292, %v5036
        %v5044 = vmul.f32 %v3299, %v5036
        %v5045 = vmul.f32 %v3306, %v5036
        %v5046 = vmul.f32 %v3313, %v5036
        %v5047 = vmul.f32 %v3320, %v5036
        %v5048 = vmul.f32 %v3327, %v5036
        %v5049 = vmul.f32 %v3334, %v5036
        %v5050 = vmul.f32 %v3341, %v5036
        %v5051 = vmul.f32 %v3348, %v5036
        %v5052 = vmul.f32 %v3355, %v5036
        %v5053 = vmul.f32 %v3362, %v5036
        %v5054 = vmul.f32 %v3369, %v5036
        %v5055 = vmul.f32 %v3376, %v5036
        %v5056 = vmul.f32 %v3383, %v5036
        %v5057 = vmul.f32 %v3390, %v5036
        %v5058 = vmul.f32 %v3397, %v5036
        %v5059 = vmul.f32 %v3404, %v5036
        %v5060 = vmul.f32 %v3411, %v5036
        %v5061 = vmul.f32 %v3418, %v5036
        %v5062 = vmul.f32 %v3425, %v5036
        %v5063 = vmul.f32 %v3432, %v5036
        %v5064 = vmul.f32 %v3439, %v5036
        %v5065 = vmul.f32 %v3446, %v5036
        %v5066 = vmul.f32 %v3453, %v5036
        %v5067 = vmul.f32 %v3460, %v5036
        %v5068 = vmul.f32 %v3467, %v5036
        %v5069 = vmul.f32 %v3474, %v5036
        %v5070 = vmul.f32 %v3481, %v5036
        %v5071 = vmul.f32 %v3488, %v5036
        %v5072 = vmul.f32 %v3495, %v5036
        %v5073 = vmul.f32 %v3502, %v5036
        %v5074 = vmul.f32 %v3509, %v5036
        %v5075 = vmul.f32 %v3516, %v5036
        %v5076 = vmul.f32 %v3523, %v5036
        %v5077 = vmul.f32 %v3530, %v5036
        %v5078 = vmul.f32 %v3537, %v5036
        %v5079 = vmul.f32 %v3544, %v5036
        %v5080 = vmul.f32 %v3551, %v5036
        %v5081 = vmul.f32 %v3558, %v5036
        %v5082 = vmul.f32 %v3565, %v5036
        %v5083 = vmul.f32 %v3572, %v5036
        %v5084 = vmul.f32 %v3579, %v5036
        %v5085 = vmul.f32 %v3586, %v5036
        %v5086 = vmul.f32 %v3593, %v5036
        %v5087 = vmul.f32 %v3600, %v5036
        %v5088 = vmul.f32 %v3607, %v5036
        %v5089 = vmul.f32 %v3614, %v5036
        %v5090 = vmul.f32 %v3621, %v5036
        %v5091 = vmul.f32 %v3628, %v5036
        %v5092 = vmul.f32 %v3635, %v5036
        %v5093 = vmul.f32 %v3642, %v5036
        %v5094 = vmul.f32 %v3649, %v5036
        %v5095 = vmul.f32 %v3656, %v5036
        %v5096 = vmul.f32 %v3663, %v5036
        %v5097 = vmul.f32 %v3670, %v5036
        %v5098 = vmul.f32 %v3677, %v5036
        %v5099 = vmul.f32 %v3684, %v5036
        %v5100 = vmul.f32 %v3691, %v5036
        %v5101 = vmul.f32 %v3698, %v5036
        %v5102 = vmul.f32 %v3705, %v5036
        %v5103 = vmul.f32 %v3712, %v5036
        %v5104 = vmul.f32 %v3719, %v5036
        %v5105 = vmul.f32 %v3726, %v5036
        %v5106 = vmul.f32 %v3733, %v5036
        %v5107 = vmul.f32 %v3740, %v5036
        %v5108 = vmul.f32 %v3747, %v5036
        %v5109 = vmul.f32 %v3754, %v5036
        %v5110 = vmul.f32 %v3761, %v5036
        %v5111 = vmul.f32 %v3768, %v5036
        %v5112 = vmul.f32 %v3775, %v5036
        %v5113 = vmul.f32 %v3782, %v5036
        %v5114 = vmul.f32 %v3789, %v5036
        %v5115 = vmul.f32 %v3796, %v5036
        %v5116 = vmul.f32 %v3803, %v5036
        %v5117 = vmul.f32 %v3810, %v5036
        %v5118 = vmul.f32 %v3817, %v5036
        %v5119 = vmul.f32 %v3824, %v5036
        %v5120 = vmul.f32 %v3831, %v5036
        %v5121 = vmul.f32 %v3838, %v5036
        %v5122 = vmul.f32 %v3845, %v5036
        %v5123 = vmul.f32 %v3852, %v5036
        %v5124 = vmul.f32 %v3859, %v5036
        %v5125 = vmul.f32 %v3866, %v5036
        %v5126 = vmul.f32 %v3873, %v5036
        %v5127 = vmul.f32 %v3880, %v5036
        %v5128 = vmul.f32 %v3887, %v5036
        %v5129 = vmul.f32 %v3894, %v5036
        %v5130 = vmul.f32 %v3901, %v5036
        %v5131 = vmul.f32 %v3908, %v5036
        %v5132 = vmul.f32 %v3915, %v5036
        %v5133 = vmul.f32 %v3922, %v5036
        %v5134 = vmul.f32 %v3929, %v5036
        %v5135 = vmul.f32 %v3936, %v5036
        %v5136 = vmul.f32 %v3943, %v5036
        %v5137 = vmul.f32 %v3950, %v5036
        %v5138 = vmul.f32 %v3957, %v5036
        %v5139 = vmul.f32 %v3964, %v5036
        %v5140 = vmul.f32 %v3971, %v5036
        %v5141 = vmul.f32 %v3978, %v5036
        %v5142 = vmul.f32 %v3985, %v5036
        %v5143 = vmul.f32 %v3992, %v5036
        %v5144 = vmul.f32 %v3999, %v5036
        %v5145 = vmul.f32 %v4006, %v5036
        %v5146 = vmul.f32 %v4013, %v5036
        %v5147 = vmul.f32 %v4020, %v5036
        %v5148 = vmul.f32 %v4027, %v5036
        %v5149 = vmul.f32 %v4034, %v5036
        %v5150 = vmul.f32 %v4041, %v5036
        %v5151 = vmul.f32 %v4048, %v5036
        %v5152 = vmul.f32 %v4055, %v5036
        %v5153 = vmul.f32 %v4062, %v5036
        %v5154 = vmul.f32 %v4069, %v5036
        %v5155 = vmul.f32 %v4076, %v5036
        %v5156 = vmul.f32 %v4083, %v5036
        %v5157 = vmul.f32 %v4090, %v5036
        %v5158 = vmul.f32 %v4097, %v5036
        %v5159 = vmul.f32 %v4104, %v5036
        %v5160 = vmul.f32 %v4111, %v5036
        %v5161 = vmul.f32 %v4118, %v5036
        %v5162 = vmul.f32 %v4125, %v5036
        %v5163 = vmul.f32 %v4132, %v5036
        %v5164 = vmul.f32 %v4139, %v5036
        %v5165 = vmul.f32 %v4146, %v5036
        %v5166 = vmul.f32 %v4153, %v5036
        %v5167 = vmul.f32 %v4160, %v5036
        %v5168 = vmul.f32 %v4167, %v5036
        %v5169 = vmul.f32 %v4174, %v5036
        %v5170 = vmul.f32 %v4181, %v5036
        %v5171 = vmul.f32 %v4188, %v5036
        %v5172 = vmul.f32 %v4195, %v5036
        %v5173 = vmul.f32 %v4202, %v5036
        %v5174 = vmul.f32 %v4209, %v5036
        %v5175 = vmul.f32 %v4216, %v5036
        %v5176 = vmul.f32 %v4223, %v5036
        %v5177 = vmul.f32 %v4230, %v5036
        %v5178 = vmul.f32 %v4237, %v5036
        %v5179 = vmul.f32 %v4244, %v5036
        %v5180 = vmul.f32 %v4251, %v5036
        %v5181 = vmul.f32 %v4258, %v5036
        %v5182 = vmul.f32 %v4265, %v5036
        %v5183 = vmul.f32 %v4272, %v5036
        %v5184 = vmul.f32 %v4279, %v5036
        %v5185 = vmul.f32 %v4286, %v5036
        %v5186 = vmul.f32 %v4293, %v5036
        %v5187 = vmul.f32 %v4300, %v5036
        %v5188 = vmul.f32 %v4307, %v5036
        %v5189 = vmul.f32 %v4314, %v5036
        %v5190 = vmul.f32 %v4321, %v5036
        %v5191 = vmul.f32 %v4328, %v5036
        %v5192 = vmul.f32 %v4335, %v5036
        %v5193 = vmul.f32 %v4342, %v5036
        %v5194 = vmul.f32 %v4349, %v5036
        %v5195 = vmul.f32 %v4356, %v5036
        %v5196 = vmul.f32 %v4363, %v5036
        %v5197 = vmul.f32 %v4370, %v5036
        %v5198 = vmul.f32 %v4377, %v5036
        %v5199 = vmul.f32 %v4384, %v5036
        %v5200 = vmul.f32 %v4391, %v5036
        %v5201 = vmul.f32 %v4398, %v5036
        %v5202 = vmul.f32 %v4405, %v5036
        %v5203 = vmul.f32 %v4412, %v5036
        %v5204 = vmul.f32 %v4419, %v5036
        %v5205 = vmul.f32 %v4426, %v5036
        %v5206 = vmul.f32 %v4433, %v5036
        %v5207 = vmul.f32 %v4440, %v5036
        %v5208 = vmul.f32 %v4447, %v5036
        %v5209 = vmul.f32 %v4454, %v5036
        %v5210 = vmul.f32 %v4461, %v5036
        %v5211 = vmul.f32 %v4468, %v5036
        %v5212 = vmul.f32 %v4475, %v5036
        %v5213 = vmul.f32 %v4482, %v5036
        %v5214 = vmul.f32 %v4489, %v5036
        %v5215 = vmul.f32 %v4496, %v5036
        %v5216 = vmul.f32 %v4503, %v5036
        %v5217 = vmul.f32 %v4510, %v5036
        %v5218 = vmul.f32 %v4517, %v5036
        %v5219 = vmul.f32 %v4524, %v5036
        %v5220 = vmul.f32 %v4531, %v5036
        %v5221 = vmul.f32 %v4538, %v5036
        %v5222 = vmul.f32 %v4545, %v5036
        %v5223 = vmul.f32 %v4552, %v5036
        %v5224 = vmul.f32 %v4559, %v5036
        %v5225 = vmul.f32 %v4566, %v5036
        %v5226 = vmul.f32 %v4573, %v5036
        %v5227 = vmul.f32 %v4580, %v5036
        %v5228 = vmul.f32 %v4587, %v5036
        %v5229 = vmul.f32 %v4594, %v5036
        %v5230 = vmul.f32 %v4601, %v5036
        %v5231 = vmul.f32 %v4608, %v5036
        %v5232 = vmul.f32 %v4615, %v5036
        %v5233 = vmul.f32 %v4622, %v5036
        %v5234 = vmul.f32 %v4629, %v5036
        %v5235 = vmul.f32 %v4636, %v5036
        %v5236 = vmul.f32 %v4643, %v5036
        %v5237 = vmul.f32 %v4650, %v5036
        %v5238 = vmul.f32 %v4657, %v5036
        %v5239 = vmul.f32 %v4664, %v5036
        %v5240 = vmul.f32 %v4671, %v5036
        %v5241 = vmul.f32 %v4678, %v5036
        %v5242 = vmul.f32 %v4685, %v5036
        %v5243 = vmul.f32 %v4692, %v5036
        %v5244 = vmul.f32 %v4699, %v5036
        %v5245 = vmul.f32 %v4706, %v5036
        %v5246 = vmul.f32 %v4713, %v5036
        %v5247 = vmul.f32 %v4720, %v5036
        %v5248 = vmul.f32 %v4727, %v5036
        %v5249 = vmul.f32 %v4734, %v5036
        %v5250 = vmul.f32 %v4741, %v5036
        %v5251 = vmul.f32 %v4748, %v5036
        %v5252 = vmul.f32 %v4755, %v5036
        %v5253 = vmul.f32 %v4762, %v5036
        %v5254 = vmul.f32 %v4769, %v5036
        %v5255 = vmul.f32 %v4776, %v5036
        %v5256 = vmul.f32 %v4783, %v5036
        %v5257 = vmul.f32 %v4790, %v5036
        %v5258 = vmul.f32 %v4797, %v5036
        %v5259 = vmul.f32 %v4804, %v5036
        %v5260 = vmul.f32 %v4811, %v5036
        %v5261 = vmul.f32 %v4818, %v5036
        %v5262 = vmul.f32 %v4825, %v5036
        %v5263 = vmul.f32 %v4832, %v5036
        %v5264 = vmul.f32 %v4839, %v5036
        %v5265 = vmul.f32 %v4846, %v5036
        %v5266 = vmul.f32 %v4853, %v5036
        %v5267 = vmul.f32 %v4860, %v5036
        %v5268 = vmul.f32 %v4867, %v5036
        %v5269 = vmul.f32 %v4874, %v5036
        %v5270 = vmul.f32 %v4881, %v5036
        %v5271 = vmul.f32 %v4888, %v5036
        %v5272 = vmul.f32 %v4895, %v5036
        %v5273 = vmul.f32 %v4902, %v5036
        %v5274 = vmul.f32 %v4909, %v5036
        %v5275 = vmul.f32 %v4916, %v5036
        %v5276 = vmul.f32 %v4923, %v5036
        %v5277 = vmul.f32 %v4930, %v5036
        %v5278 = vmul.f32 %v4937, %v5036
        %v5279 = vmul.f32 %v4944, %v5036
        %v5280 = vmul.f32 %v4951, %v5036
        %v5281 = vmul.f32 %v4958, %v5036
        %v5282 = vmul.f32 %v4965, %v5036
        %v5283 = vmul.f32 %v4972, %v5036
        %v5284 = vmul.f32 %v4979, %v5036
        %v5285 = vmul.f32 %v4986, %v5036
        %v5286 = vmul.f32 %v4993, %v5036
        %v5287 = vmul.f32 %v5000, %v5036
        %v5288 = vmul.f32 %v5007, %v5036
        %v5289 = vmul.f32 %v5014, %v5036
        %v5290 = vmul.f32 %v5021, %v5036
        %v5291 = vmul.f32 %v5028, %v5036
        %v5292 = vmul.f32 %v5035, %v5036
        %v5293 = vadd.f32 %v5037, %v5038
        %v5294 = vadd.f32 %v5053, %v5054
        %v5295 = vadd.f32 %v5069, %v5070
        %v5296 = vadd.f32 %v5085, %v5086
        %v5297 = vadd.f32 %v5101, %v5102
        %v5298 = vadd.f32 %v5117, %v5118
        %v5299 = vadd.f32 %v5133, %v5134
        %v5300 = vadd.f32 %v5149, %v5150
        %v5301 = vadd.f32 %v5165, %v5166
        %v5302 = vadd.f32 %v5181, %v5182
        %v5303 = vadd.f32 %v5197, %v5198
        %v5304 = vadd.f32 %v5213, %v5214
        %v5305 = vadd.f32 %v5229, %v5230
        %v5306 = vadd.f32 %v5245, %v5246
        %v5307 = vadd.f32 %v5261, %v5262
        %v5308 = vadd.f32 %v5277, %v5278
        %v5309 = vadd.f32 %v5293, %v5039
        %v5310 = vadd.f32 %v5294, %v5055
        %v5311 = vadd.f32 %v5295, %v5071
        %v5312 = vadd.f32 %v5296, %v5087
        %v5313 = vadd.f32 %v5297, %v5103
        %v5314 = vadd.f32 %v5298, %v5119
        %v5315 = vadd.f32 %v5299, %v5135
        %v5316 = vadd.f32 %v5300, %v5151
        %v5317 = vadd.f32 %v5301, %v5167
        %v5318 = vadd.f32 %v5302, %v5183
        %v5319 = vadd.f32 %v5303, %v5199
        %v5320 = vadd.f32 %v5304, %v5215
        %v5321 = vadd.f32 %v5305, %v5231
        %v5322 = vadd.f32 %v5306, %v5247
        %v5323 = vadd.f32 %v5307, %v5263
        %v5324 = vadd.f32 %v5308, %v5279
        %v5325 = vadd.f32 %v5309, %v5040
        %v5326 = vadd.f32 %v5310, %v5056
        %v5327 = vadd.f32 %v5311, %v5072
        %v5328 = vadd.f32 %v5312, %v5088
        %v5329 = vadd.f32 %v5313, %v5104
        %v5330 = vadd.f32 %v5314, %v5120
        %v5331 = vadd.f32 %v5315, %v5136
        %v5332 = vadd.f32 %v5316, %v5152
        %v5333 = vadd.f32 %v5317, %v5168
        %v5334 = vadd.f32 %v5318, %v5184
        %v5335 = vadd.f32 %v5319, %v5200
        %v5336 = vadd.f32 %v5320, %v5216
        %v5337 = vadd.f32 %v5321, %v5232
        %v5338 = vadd.f32 %v5322, %v5248
        %v5339 = vadd.f32 %v5323, %v5264
        %v5340 = vadd.f32 %v5324, %v5280
        %v5341 = vadd.f32 %v5325, %v5041
        %v5342 = vadd.f32 %v5326, %v5057
        %v5343 = vadd.f32 %v5327, %v5073
        %v5344 = vadd.f32 %v5328, %v5089
        %v5345 = vadd.f32 %v5329, %v5105
        %v5346 = vadd.f32 %v5330, %v5121
        %v5347 = vadd.f32 %v5331, %v5137
        %v5348 = vadd.f32 %v5332, %v5153
        %v5349 = vadd.f32 %v5333, %v5169
        %v5350 = vadd.f32 %v5334, %v5185
        %v5351 = vadd.f32 %v5335, %v5201
        %v5352 = vadd.f32 %v5336, %v5217
        %v5353 = vadd.f32 %v5337, %v5233
        %v5354 = vadd.f32 %v5338, %v5249
        %v5355 = vadd.f32 %v5339, %v5265
        %v5356 = vadd.f32 %v5340, %v5281
        %v5357 = vadd.f32 %v5341, %v5042
        %v5358 = vadd.f32 %v5342, %v5058
        %v5359 = vadd.f32 %v5343, %v5074
        %v5360 = vadd.f32 %v5344, %v5090
        %v5361 = vadd.f32 %v5345, %v5106
        %v5362 = vadd.f32 %v5346, %v5122
        %v5363 = vadd.f32 %v5347, %v5138
        %v5364 = vadd.f32 %v5348, %v5154
        %v5365 = vadd.f32 %v5349, %v5170
        %v5366 = vadd.f32 %v5350, %v5186
        %v5367 = vadd.f32 %v5351, %v5202
        %v5368 = vadd.f32 %v5352, %v5218
        %v5369 = vadd.f32 %v5353, %v5234
        %v5370 = vadd.f32 %v5354, %v5250
        %v5371 = vadd.f32 %v5355, %v5266
        %v5372 = vadd.f32 %v5356, %v5282
        %v5373 = vadd.f32 %v5357, %v5043
        %v5374 = vadd.f32 %v5358, %v5059
        %v5375 = vadd.f32 %v5359, %v5075
        %v5376 = vadd.f32 %v5360, %v5091
        %v5377 = vadd.f32 %v5361, %v5107
        %v5378 = vadd.f32 %v5362, %v5123
        %v5379 = vadd.f32 %v5363, %v5139
        %v5380 = vadd.f32 %v5364, %v5155
        %v5381 = vadd.f32 %v5365, %v5171
        %v5382 = vadd.f32 %v5366, %v5187
        %v5383 = vadd.f32 %v5367, %v5203
        %v5384 = vadd.f32 %v5368, %v5219
        %v5385 = vadd.f32 %v5369, %v5235
        %v5386 = vadd.f32 %v5370, %v5251
        %v5387 = vadd.f32 %v5371, %v5267
        %v5388 = vadd.f32 %v5372, %v5283
        %v5389 = vadd.f32 %v5373, %v5044
        %v5390 = vadd.f32 %v5374, %v5060
        %v5391 = vadd.f32 %v5375, %v5076
        %v5392 = vadd.f32 %v5376, %v5092
        %v5393 = vadd.f32 %v5377, %v5108
        %v5394 = vadd.f32 %v5378, %v5124
        %v5395 = vadd.f32 %v5379, %v5140
        %v5396 = vadd.f32 %v5380, %v5156
        %v5397 = vadd.f32 %v5381, %v5172
        %v5398 = vadd.f32 %v5382, %v5188
        %v5399 = vadd.f32 %v5383, %v5204
        %v5400 = vadd.f32 %v5384, %v5220
        %v5401 = vadd.f32 %v5385, %v5236
        %v5402 = vadd.f32 %v5386, %v5252
        %v5403 = vadd.f32 %v5387, %v5268
        %v5404 = vadd.f32 %v5388, %v5284
        %v5405 = vadd.f32 %v5389, %v5045
        %v5406 = vadd.f32 %v5390, %v5061
        %v5407 = vadd.f32 %v5391, %v5077
        %v5408 = vadd.f32 %v5392, %v5093
        %v5409 = vadd.f32 %v5393, %v5109
        %v5410 = vadd.f32 %v5394, %v5125
        %v5411 = vadd.f32 %v5395, %v5141
        %v5412 = vadd.f32 %v5396, %v5157
        %v5413 = vadd.f32 %v5397, %v5173
        %v5414 = vadd.f32 %v5398, %v5189
        %v5415 = vadd.f32 %v5399, %v5205
        %v5416 = vadd.f32 %v5400, %v5221
        %v5417 = vadd.f32 %v5401, %v5237
        %v5418 = vadd.f32 %v5402, %v5253
        %v5419 = vadd.f32 %v5403, %v5269
        %v5420 = vadd.f32 %v5404, %v5285
        %v5421 = vadd.f32 %v5405, %v5046
        %v5422 = vadd.f32 %v5406, %v5062
        %v5423 = vadd.f32 %v5407, %v5078
        %v5424 = vadd.f32 %v5408, %v5094
        %v5425 = vadd.f32 %v5409, %v5110
        %v5426 = vadd.f32 %v5410, %v5126
        %v5427 = vadd.f32 %v5411, %v5142
        %v5428 = vadd.f32 %v5412, %v5158
        %v5429 = vadd.f32 %v5413, %v5174
        %v5430 = vadd.f32 %v5414, %v5190
        %v5431 = vadd.f32 %v5415, %v5206
        %v5432 = vadd.f32 %v5416, %v5222
        %v5433 = vadd.f32 %v5417, %v5238
        %v5434 = vadd.f32 %v5418, %v5254
        %v5435 = vadd.f32 %v5419, %v5270
        %v5436 = vadd.f32 %v5420, %v5286
        %v5437 = vadd.f32 %v5421, %v5047
        %v5438 = vadd.f32 %v5422, %v5063
        %v5439 = vadd.f32 %v5423, %v5079
        %v5440 = vadd.f32 %v5424, %v5095
        %v5441 = vadd.f32 %v5425, %v5111
        %v5442 = vadd.f32 %v5426, %v5127
        %v5443 = vadd.f32 %v5427, %v5143
        %v5444 = vadd.f32 %v5428, %v5159
        %v5445 = vadd.f32 %v5429, %v5175
        %v5446 = vadd.f32 %v5430, %v5191
        %v5447 = vadd.f32 %v5431, %v5207
        %v5448 = vadd.f32 %v5432, %v5223
        %v5449 = vadd.f32 %v5433, %v5239
        %v5450 = vadd.f32 %v5434, %v5255
        %v5451 = vadd.f32 %v5435, %v5271
        %v5452 = vadd.f32 %v5436, %v5287
        %v5453 = vadd.f32 %v5437, %v5048
        %v5454 = vadd.f32 %v5438, %v5064
        %v5455 = vadd.f32 %v5439, %v5080
        %v5456 = vadd.f32 %v5440, %v5096
        %v5457 = vadd.f32 %v5441, %v5112
        %v5458 = vadd.f32 %v5442, %v5128
        %v5459 = vadd.f32 %v5443, %v5144
        %v5460 = vadd.f32 %v5444, %v5160
        %v5461 = vadd.f32 %v5445, %v5176
        %v5462 = vadd.f32 %v5446, %v5192
        %v5463 = vadd.f32 %v5447, %v5208
        %v5464 = vadd.f32 %v5448, %v5224
        %v5465 = vadd.f32 %v5449, %v5240
        %v5466 = vadd.f32 %v5450, %v5256
        %v5467 = vadd.f32 %v5451, %v5272
        %v5468 = vadd.f32 %v5452, %v5288
        %v5469 = vadd.f32 %v5453, %v5049
        %v5470 = vadd.f32 %v5454, %v5065
        %v5471 = vadd.f32 %v5455, %v5081
        %v5472 = vadd.f32 %v5456, %v5097
        %v5473 = vadd.f32 %v5457, %v5113
        %v5474 = vadd.f32 %v5458, %v5129
        %v5475 = vadd.f32 %v5459, %v5145
        %v5476 = vadd.f32 %v5460, %v5161
        %v5477 = vadd.f32 %v5461, %v5177
        %v5478 = vadd.f32 %v5462, %v5193
        %v5479 = vadd.f32 %v5463, %v5209
        %v5480 = vadd.f32 %v5464, %v5225
        %v5481 = vadd.f32 %v5465, %v5241
        %v5482 = vadd.f32 %v5466, %v5257
        %v5483 = vadd.f32 %v5467, %v5273
        %v5484 = vadd.f32 %v5468, %v5289
        %v5485 = vadd.f32 %v5469, %v5050
        %v5486 = vadd.f32 %v5470, %v5066
        %v5487 = vadd.f32 %v5471, %v5082
        %v5488 = vadd.f32 %v5472, %v5098
        %v5489 = vadd.f32 %v5473, %v5114
        %v5490 = vadd.f32 %v5474, %v5130
        %v5491 = vadd.f32 %v5475, %v5146
        %v5492 = vadd.f32 %v5476, %v5162
        %v5493 = vadd.f32 %v5477, %v5178
        %v5494 = vadd.f32 %v5478, %v5194
        %v5495 = vadd.f32 %v5479, %v5210
        %v5496 = vadd.f32 %v5480, %v5226
        %v5497 = vadd.f32 %v5481, %v5242
        %v5498 = vadd.f32 %v5482, %v5258
        %v5499 = vadd.f32 %v5483, %v5274
        %v5500 = vadd.f32 %v5484, %v5290
        %v5501 = vadd.f32 %v5485, %v5051
        %v5502 = vadd.f32 %v5486, %v5067
        %v5503 = vadd.f32 %v5487, %v5083
        %v5504 = vadd.f32 %v5488, %v5099
        %v5505 = vadd.f32 %v5489, %v5115
        %v5506 = vadd.f32 %v5490, %v5131
        %v5507 = vadd.f32 %v5491, %v5147
        %v5508 = vadd.f32 %v5492, %v5163
        %v5509 = vadd.f32 %v5493, %v5179
        %v5510 = vadd.f32 %v5494, %v5195
        %v5511 = vadd.f32 %v5495, %v5211
        %v5512 = vadd.f32 %v5496, %v5227
        %v5513 = vadd.f32 %v5497, %v5243
        %v5514 = vadd.f32 %v5498, %v5259
        %v5515 = vadd.f32 %v5499, %v5275
        %v5516 = vadd.f32 %v5500, %v5291
        %v5517 = vadd.f32 %v5501, %v5052
        %v5518 = vadd.f32 %v5502, %v5068
        %v5519 = vadd.f32 %v5503, %v5084
        %v5520 = vadd.f32 %v5504, %v5100
        %v5521 = vadd.f32 %v5505, %v5116
        %v5522 = vadd.f32 %v5506, %v5132
        %v5523 = vadd.f32 %v5507, %v5148
        %v5524 = vadd.f32 %v5508, %v5164
        %v5525 = vadd.f32 %v5509, %v5180
        %v5526 = vadd.f32 %v5510, %v5196
        %v5527 = vadd.f32 %v5511, %v5212
        %v5528 = vadd.f32 %v5512, %v5228
        %v5529 = vadd.f32 %v5513, %v5244
        %v5530 = vadd.f32 %v5514, %v5260
        %v5531 = vadd.f32 %v5515, %v5276
        %v5532 = vadd.f32 %v5516, %v5292
        %v5533 = vmul.f32 %v5517, 0.0625
        %v5534 = vmul.f32 %v5518, 0.0625
        %v5535 = vmul.f32 %v5519, 0.0625
        %v5536 = vmul.f32 %v5520, 0.0625
        %v5537 = vmul.f32 %v5521, 0.0625
        %v5538 = vmul.f32 %v5522, 0.0625
        %v5539 = vmul.f32 %v5523, 0.0625
        %v5540 = vmul.f32 %v5524, 0.0625
        %v5541 = vmul.f32 %v5525, 0.0625
        %v5542 = vmul.f32 %v5526, 0.0625
        %v5543 = vmul.f32 %v5527, 0.0625
        %v5544 = vmul.f32 %v5528, 0.0625
        %v5545 = vmul.f32 %v5529, 0.0625
        %v5546 = vmul.f32 %v5530, 0.0625
        %v5547 = vmul.f32 %v5531, 0.0625
        %v5548 = vmul.f32 %v5532, 0.0625
        %v5549 = vld [vmem:[#allocation8] sm:$0xff]
        %v5550 = vld [vmem:[#allocation8 + $0x8] sm:$0xff]
        %v5551 = vld [vmem:[#allocation8 + $0x10] sm:$0xff]
        %v5552 = vld [vmem:[#allocation8 + $0x18] sm:$0xff]
        %v5553 = vld [vmem:[#allocation8 + $0x20] sm:$0xff]
        %v5554 = vld [vmem:[#allocation8 + $0x28] sm:$0xff]
        %v5555 = vld [vmem:[#allocation8 + $0x30] sm:$0xff]
        %v5556 = vld [vmem:[#allocation8 + $0x38] sm:$0xff]
        %v5557 = vld [vmem:[#allocation8 + $0x40] sm:$0xff]
        %v5558 = vld [vmem:[#allocation8 + $0x48] sm:$0xff]
        %v5559 = vld [vmem:[#allocation8 + $0x50] sm:$0xff]
        %v5560 = vld [vmem:[#allocation8 + $0x58] sm:$0xff]
        %v5561 = vld [vmem:[#allocation8 + $0x60] sm:$0xff]
        %v5562 = vld [vmem:[#allocation8 + $0x68] sm:$0xff]
        %v5563 = vld [vmem:[#allocation8 + $0x70] sm:$0xff]
        %v5564 = vld [vmem:[#allocation8 + $0x78] sm:$0xff]
        %v5565 = vld [vmem:[%s4] sm:$0x1]
        %v5567 = vlaneseq
        %v5568 = vshrl.u32 %v5567, 7
        %v5569 = vsub.s32 0, %v5568
        %v5570 = vrot.slane %v5565, %v5569
        %vm5588 = vcmask 1041409
        %v5589 = vsel %vm5588, %v5534, %v5533
        %vm5590 = vcmask 1042434
        %v5591 = vsel %vm5590, %v5535, %v5589
        %vm5592 = vcmask 1043459
        %v5593 = vsel %vm5592, %v5536, %v5591
        %vm5594 = vcmask 1044484
        %v5595 = vsel %vm5594, %v5537, %v5593
        %vm5596 = vcmask 1045509
        %v5597 = vsel %vm5596, %v5538, %v5595
        %vm5598 = vcmask 1046534
        %v5599 = vsel %vm5598, %v5539, %v5597
        %vm5600 = vcmask 1047559
        %v5601 = vsel %vm5600, %v5540, %v5599
        %v5602 = vsel %vm5588, %v5542, %v5541
        %v5603 = vsel %vm5590, %v5543, %v5602
        %v5604 = vsel %vm5592, %v5544, %v5603
        %v5605 = vsel %vm5594, %v5545, %v5604
        %v5606 = vsel %vm5596, %v5546, %v5605
        %v5607 = vsel %vm5598, %v5547, %v5606
        %v5608 = vsel %vm5600, %v5548, %v5607
        %5611 = vmatprep.subr.mxu0 0.0
        %5612 = vmatpush1.msra.mxu0 %v5564
        %5613 = vmatprep.subr.mxu0 0.0
        %5614 = vmatpush1.msra.mxu0 %v5563
        %5615 = vmatprep.subr.mxu0 0.0
        %5616 = vmatpush1.msra.mxu0 %v5562
        %5617 = vmatprep.subr.mxu0 0.0
        %5618 = vmatpush1.msra.mxu0 %v5561
        %5619 = vmatprep.subr.mxu0 0.0
        %5620 = vmatpush1.msra.mxu0 %v5560
        %5621 = vmatprep.subr.mxu0 0.0
        %5622 = vmatpush1.msra.mxu0 %v5559
        %5623 = vmatprep.subr.mxu0 0.0
        %5624 = vmatpush1.msra.mxu0 %v5558
        %5625 = vmatprep.subr.mxu0 0.0
        %5626 = vmatpush1.msra.mxu0 %v5557
        %5627 = vmatprep.subr.mxu0 0.0
        %5628 = vmatpush1.msra.mxu0 %v5556
        %5629 = vmatprep.subr.mxu0 0.0
        %5630 = vmatpush1.msra.mxu0 %v5555
        %5631 = vmatprep.subr.mxu0 0.0
        %5632 = vmatpush1.msra.mxu0 %v5554
        %5633 = vmatprep.subr.mxu0 0.0
        %5634 = vmatpush1.msra.mxu0 %v5553
        %5635 = vmatprep.subr.mxu0 0.0
        %5636 = vmatpush1.msra.mxu0 %v5552
        %5637 = vmatprep.subr.mxu0 0.0
        %5638 = vmatpush1.msra.mxu0 %v5551
        %5639 = vmatprep.subr.mxu0 0.0
        %5640 = vmatpush1.msra.mxu0 %v5550
        %5641 = vmatprep.subr.mxu0 0.0
        %5642 = vmatpush1.msra.mxu0 %v5549
        %5643 = vmatprep.subr.mxu0 0.0
        %5644 = vmatpush2.msra.mxu0 0.0
        %5645 = vmatprep.subr.mxu0 0.0
        %5646 = vmatpush2.msra.mxu0 0.0
        %5647 = vmatprep.subr.mxu0 0.0
        %5648 = vmatpush2.msra.mxu0 0.0
        %5649 = vmatprep.subr.mxu0 0.0
        %5650 = vmatpush2.msra.mxu0 0.0
        %5651 = vmatprep.subr.mxu0 0.0
        %5652 = vmatpush2.msra.mxu0 0.0
        %5653 = vmatprep.subr.mxu0 0.0
        %5654 = vmatpush2.msra.mxu0 0.0
        %5655 = vmatprep.subr.mxu0 0.0
        %5656 = vmatpush2.msra.mxu0 0.0
        %5657 = vmatprep.subr.mxu0 0.0
        %5658 = vmatpush2.msra.mxu0 0.0
        %5659 = vmatprep.subr.mxu0 0.0
        %5660 = vmatpush2.msra.mxu0 0.0
        %5661 = vmatprep.subr.mxu0 0.0
        %5662 = vmatpush2.msra.mxu0 0.0
        %5663 = vmatprep.subr.mxu0 0.0
        %5664 = vmatpush2.msra.mxu0 0.0
        %5665 = vmatprep.subr.mxu0 0.0
        %5666 = vmatpush2.msra.mxu0 0.0
        %5667 = vmatprep.subr.mxu0 0.0
        %5668 = vmatpush2.msra.mxu0 0.0
        %5669 = vmatprep.subr.mxu0 0.0
        %5670 = vmatpush2.msra.mxu0 0.0
        %5671 = vmatprep.subr.mxu0 0.0
        %5672 = vmatpush2.msra.mxu0 0.0
        %5673 = vmatprep.subr.mxu0 0.0
        %5674 = vmatpush2.msra.mxu0 0.0
        %5675 = vmatprep.mubr.f32.mxu0 0.0
        %5676 = vmatmul.mubr.f32.gmra.mxu0 %v5601
        %v5677 = vpop.f32.mrf.mxu0
        %v5678 = vadd.f32 %v5570, %v5677
        %v5679 = vpop.f32.mrf.mxu0
        %5680 = vmatprep.mubr.f32.mxu0 0.0
        %5681 = vmatmul.mubr.f32.gmra.mxu0 %v5608
        %v5682 = vpop.f32.mrf.mxu0
        %v5683 = vadd.f32 %v5570, %v5682
        %v5684 = vpop.f32.mrf.mxu0
        %5685 = vdwg.mxu0
        %v5686 = vand.u32 2147483647, %v5678
        %v5687 = vand.u32 2147483647, %v5683
        %v5688 = vsub.f32 0.0, %v5686
        %v5689 = vsub.f32 0.0, %v5687
        %v5690 = vmul.f32 %v5688, 1.442695
        %v5691 = vpow.pop %v5690
        %v5692 = vmul.f32 %v5689, 1.442695
        %v5693 = vpow.pop %v5692
        %vm5694 = vcmp.ge.f32.partialorder %v5678, 0.0
        %vm5695 = vcmp.ge.f32.partialorder %v5683, 0.0
        %v5696 = vadd.f32 %v5691, 1.0
        %v5697 = vadd.f32 %v5693, 1.0
        %v5698 = vrcp.pop %v5696
        %v5699 = vmul.f32 1.0, %v5698
        %v5700 = vrcp.pop %v5697
        %v5701 = vmul.f32 1.0, %v5700
        %v5702 = vmul.f32 %v5691, %v5698
        %v5703 = vmul.f32 %v5693, %v5700
        %v5704 = vsel %vm5694, %v5699, %v5702
        %v5705 = vsel %vm5695, %v5701, %v5703
        %vm5706 = vcmask 261248
        %v5707 = vsel %vm5706, %v5678, -inf
        %5708 = vmax.xlane.f32.xlu0 %v5707
        %v5709 = vpop.xlane.xlu0 %5708
        %v5710 = vsel %vm5706, %v5683, -inf
        %5711 = vmax.xlane.f32.xlu0 %v5710
        %v5712 = vpop.xlane.xlu0 %5711
        %v5713 = vsub.f32 %v5678, %v5709
        %v5714 = vsub.f32 %v5683, %v5712
        %v5715 = vmul.f32 %v5713, 1.442695
        %v5716 = vpow.pop %v5715
        %v5717 = vmul.f32 %v5714, 1.442695
        %v5718 = vpow.pop %v5717
        %5721 = vrot.lane.b32.xlu0 %v5716, 112
        %v5722 = vpop.permute.xlu0 %5721
        %5723 = vrot.lane.b32.xlu0 %v5718, 112
        %v5724 = vpop.permute.xlu0 %5723
        %vm5727 = vcmask 130048
        %v5728 = vsel %vm5727, %v5722, 0.0
        %5729 = vadd.xlane.f32.xlu0 %v5728
        %v5730 = vpop.xlane.xlu0 %5729
        %v5731 = vsel %vm5727, %v5724, 0.0
        %5732 = vadd.xlane.f32.xlu0 %v5731
        %v5733 = vpop.xlane.xlu0 %5732
        %v5734 = vrcp.pop %v5730
        %v5735 = vmul.f32 %v5716, %v5734
        %v5736 = vrcp.pop %v5733
        %v5737 = vmul.f32 %v5718, %v5736
        %v5738 = vsel %vm5727, %v5704, %v5735
        %v5739 = vsel %vm5727, %v5705, %v5737
        %vm5740 = vcmask 261120
        %v5741 = vsel %vm5740, %v5738, 0.0
        %v5742 = vsel %vm5740, %v5739, 0.0
        %5743 = vst [vmem:[%s284] sm:$0xff] %v5741
        %5744 = vst [vmem:[%s284 + $0x8] sm:$0xff] %v5742
        %s5745 = sand.u32 %s142, 1
        %s5746 = scalar_lea.sflag [#allocation4], %s5745
        %s5747 = sand.u32 %s142, 1
        %s5748 = smul.addr %s5747, 16
        %s5749 = scalar_lea.vmem [#allocation10], %s5748
        // Predicated region
        $region57: #{tpu_custom_call.1} parent=39 // pred_check
          %p5750 = pneg %p152
        $region58: #{tpu_custom_call.1} parent=39 // pred_check_branch
          %5752 = sbr.rel (%p5750) target = $region60
        $region59: #{tpu_custom_call.1} parent=39 // pred_region
          %s5753 = smul.u32 2, %s24
          %s5755 = ssub.s32 256, 256
          %5756 = vsyncadd %s5746, %s5755
          %s5757 = smul.addr %s5753, 128
          %s5758 = scalar_lea.hbm %s5, %s5757
          %s5759 = sshll.u32 %s5749, 4
          %s5760 = int_to_ptr.vmem [resolvable:$true] %s5759
          %5765 = dma.vmem_to_hbm [thread:$0]  %s5760, 256, %s5758, %s5746, 128, 128, 8
        $region60: #{tpu_custom_call.1} parent=39 // pred_fallthru
          _
      $region40: #{tpu_custom_call.1} parent=5 // pred_fallthru
        _
      %p5766 = scmp.le.s32.totalorder 2, %s19
      // Predicated region
      $region61: #{tpu_custom_call.1} parent=5 // pred_check
        %p5767 = pneg %p5766
      $region62: #{tpu_custom_call.1} parent=5 // pred_check_branch
        %5769 = sbr.rel (%p5767) target = $region64
      $region63: #{tpu_custom_call.1} parent=5 // pred_region
        %s5770 = ssub.s32 %s19, 2
        // Predicated region
        $region65: #{tpu_custom_call.1} parent=63 // pred_check
          %p5771 = pneg %p158
        $region66: #{tpu_custom_call.1} parent=63 // pred_check_branch
          %5773 = sbr.rel (%p5771) target = $region68
        $region67: #{tpu_custom_call.1} parent=63 // pred_region
          %s5774 = sand.u32 %s143, 1
          %s5775 = scalar_lea.sflag [#allocation4], %s5774
          %s5776 = sand.u32 %s143, 1
          %s5777 = smul.addr %s5776, 16
          %s5778 = scalar_lea.vmem [#allocation10], %s5777
          %5779 = dma.done %s5775, 256
        $region68: #{tpu_custom_call.1} parent=63 // pred_fallthru
          _
      $region64: #{tpu_custom_call.1} parent=5 // pred_fallthru
        _
    $region6: #{tpu_custom_call.1} parent=1 // loop_footer
      %s23 = sadd.s32 1, %s19
    $region7: #{tpu_custom_call.1} parent=1 // loop_footer_branch
      %18 = sbr.rel target = $region3
    $region8: #{tpu_custom_call.1} parent=1 // loop_exit
      _
    %5780 = vsyncpa [#allocation3], 1
    %s5781 = scalar_lea.sflag [#allocation3], 1
    %5782 = vsyncpa %s5781, 1
    %5783 = vsyncpa [#allocation6], 1
    %5784 = vsyncpa [#allocation9], 1
    %5785 = vsyncpa [#allocation4], 1
    %s5786 = scalar_lea.sflag [#allocation4], 1
    %5787 = vsyncpa %s5786, 1

</llo_original>
